<compile_context>
chip_gen: v6e
topology: v6e:2x2x1
jax: 0.10.0
libtpu: 0.0.40
codegen_flags: <defaults>
</compile_context>

<pallas_src>
import numpy as np
import jax
import jax.numpy as jnp
from jax import lax
from jax.experimental import pallas as pl
from jax.experimental.pallas import tpu as pltpu

BN_EPS = 0.8        # nn.BatchNorm1d(out_feat, 0.8) -> eps = 0.8
NEG_SLOPE = 0.2     # nn.LeakyReLU(0.2)
Z_DIM = 100
Z_PAD = 128         # lane-dense padded latent dim
OUT_DIM = 256       # int(np.prod(256)) == 256

LAYER_DIMS = [(100, 128), (128, 256), (256, 512), (512, 1024), (1024, 256)]

# Grid-less path keeps every activation in VMEM (~16 KiB/row live incl.
# temporaries + ~2 MiB bf16 weights); stay well under the 56 MiB cap.
MAX_FUSED_BATCH = 2048
VMEM_CAP_BYTES = 56 << 20   # conservative for v7x (64 MiB physical VMEM)


# ---------------------------------------------------------------------------
# Fused kernel: the whole MLP forward. All weights + activations live in VMEM
# (weights ~1.9 MiB bf16), no grid, no HBM traffic between layers.
# ---------------------------------------------------------------------------
def _generator_kernel(z_ref,
                      w1_ref, b1_ref,
                      w2_ref, g2_ref, be2_ref,
                      w3_ref, g3_ref, be3_ref,
                      w4_ref, g4_ref, be4_ref,
                      w5_ref, b5_ref,
                      o_ref):
    def matmul(x_bf16, w_ref):
        # bf16 operands on the MXU, f32 accumulation.
        return jnp.dot(x_bf16, w_ref[...], preferred_element_type=jnp.float32)

    def lrelu(y):
        # NEG_SLOPE < 1  ->  max(y, 0.2*y) == LeakyReLU(0.2)(y)
        return jnp.maximum(y, NEG_SLOPE * y)

    def bn_lrelu(y_f32, g_ref, be_ref):
        # Training-mode BatchNorm1d over the batch axis (biased variance),
        # centered two-pass variance in f32, eps = 0.8. The preceding Linear
        # bias is cancelled exactly by the mean subtraction -> dropped.
        mean = jnp.mean(y_f32, axis=0, keepdims=True)
        c = y_f32 - mean
        var = jnp.mean(c * c, axis=0, keepdims=True)
        z = c * (g_ref[...] * lax.rsqrt(var + BN_EPS)) + be_ref[...]
        return lrelu(z).astype(jnp.bfloat16)     # bf16 activations downstream

    # block 1: Linear(100->128) + LeakyReLU  (no BN -> bias kept)
    h = lrelu(matmul(z_ref[...], w1_ref) + b1_ref[...]).astype(jnp.bfloat16)
    # blocks 2-4: Linear + BN + LeakyReLU
    h = bn_lrelu(matmul(h, w2_ref), g2_ref, be2_ref)        # (B, 256)
    h = bn_lrelu(matmul(h, w3_ref), g3_ref, be3_ref)        # (B, 512)
    h = bn_lrelu(matmul(h, w4_ref), g4_ref, be4_ref)        # (B, 1024)
    # final: Linear(1024->256) + Tanh
    y = matmul(h, w5_ref) + b5_ref[...]                     # (B, 256) f32
    o_ref[...] = jnp.tanh(y).astype(o_ref.dtype)


# ---------------------------------------------------------------------------
# One-time parameter preparation (OUTSIDE the jitted forward): pad w1 to a
# lane-dense (128,128), cast all matmul weights to bf16, reshape per-channel
# vectors to (1, C) f32 rows. After this, each forward call DMAs exactly the
# bf16 weight bytes, never the f32 originals.
# ---------------------------------------------------------------------------
def prepare_generator_params(params):
    def row(v):
        return jnp.asarray(v, jnp.float32).reshape(1, -1)

    prep = {
        'w1': jnp.pad(jnp.asarray(params['w1'], jnp.float32),
                      ((0, Z_PAD - Z_DIM), (0, 0))).astype(jnp.bfloat16),
        'b1': row(params['b1']),
        'w5': jnp.asarray(params['w5']).astype(jnp.bfloat16),
        'b5': row(params['b5']),
    }
    for i in (2, 3, 4):
        prep[f'w{i}'] = jnp.asarray(params[f'w{i}']).astype(jnp.bfloat16)
        prep[f'g{i}'] = row(params[f'g{i}'])
        prep[f'be{i}'] = row(params[f'be{i}'])
    return prep


# ---------------------------------------------------------------------------
# Wrapper: lane-pad the latent to bf16, single pallas_call with explicit VMEM
# specs, a cost estimate, and a batch-sized VMEM limit.
# ---------------------------------------------------------------------------
@jax.jit
def generator_forward(z, prep):
    B = z.shape[0]
    if B > MAX_FUSED_BATCH:
        # TODO(synk): batch-tiled grid + two-pass BatchNorm for large B.
        raise ValueError(f"grid-less Generator kernel supports B<={MAX_FUSED_BATCH}")

    zp = jnp.pad(z, ((0, 0), (0, Z_PAD - Z_DIM))).astype(jnp.bfloat16)

    args = (
        zp,
        prep['w1'], prep['b1'],
        prep['w2'], prep['g2'], prep['be2'],
        prep['w3'], prep['g3'], prep['be3'],
        prep['w4'], prep['g4'], prep['be4'],
        prep['w5'], prep['b5'],
    )

    # Advisory cost estimate for XLA scheduling around the custom call.
    flops = 2 * B * (Z_PAD * 128 + 128 * 256 + 256 * 512 + 512 * 1024
                     + 1024 * 256)
    transcendentals = B * OUT_DIM + (256 + 512 + 1024)      # tanh + BN rsqrt
    bytes_accessed = (sum(int(np.prod(a.shape)) * a.dtype.itemsize
                          for a in args)
                      + B * OUT_DIM * 4)

    # VMEM budget: ~2 MiB weights + ~16 KiB/row activations + margin,
    # capped for v7x's 64 MiB physical VMEM.
    vmem_need = (4 << 20) + B * (16 << 10)
    vmem_limit = int(min(max(vmem_need, 16 << 20), VMEM_CAP_BYTES))

    vmem_spec = pl.BlockSpec(memory_space=pltpu.MemorySpace.VMEM)

    return pl.pallas_call(
        _generator_kernel,
        out_shape=jax.ShapeDtypeStruct((B, OUT_DIM), jnp.float32),
        in_specs=[vmem_spec] * len(args),
        out_specs=vmem_spec,
        compiler_params=pltpu.CompilerParams(vmem_limit_bytes=vmem_limit),
        cost_estimate=pl.CostEstimate(flops=flops,
                                      transcendentals=transcendentals,
                                      bytes_accessed=bytes_accessed),
    )(*args)


# ---------------------------------------------------------------------------
# Params / pure-JAX f32 reference (exact PyTorch training-mode math, biases
# included everywhere)
# ---------------------------------------------------------------------------
def init_generator_params(key):
    params = {}
    for i, (fi, fo) in enumerate(LAYER_DIMS, start=1):
        key, kw, kb, kg, kbe = jax.random.split(key, 5)
        params[f'w{i}'] = (jax.random.normal(kw, (fi, fo), jnp.float32)
                           / np.sqrt(fi))
        params[f'b{i}'] = 0.1 * jax.random.normal(kb, (fo,), jnp.float32)
        if i in (2, 3, 4):
            params[f'g{i}'] = 1.0 + 0.1 * jax.random.normal(kg, (fo,),
                                                            jnp.float32)
            params[f'be{i}'] = 0.1 * jax.random.normal(kbe, (fo,), jnp.float32)
    return params


def _ref_generator(z, p):
    h = z @ p['w1'] + p['b1']
    h = jnp.where(h >= 0, h, NEG_SLOPE * h)
    for i in (2, 3, 4):
        y = h @ p[f'w{i}'] + p[f'b{i}']
        mean = jnp.mean(y, axis=0)
        var = jnp.mean((y - mean) ** 2, axis=0)           # biased variance
        y = (y - mean) / jnp.sqrt(var + BN_EPS) * p[f'g{i}'] + p[f'be{i}']
        h = jnp.where(y >= 0, y, NEG_SLOPE * y)
    y = h @ p['w5'] + p['b5']
    return jnp.tanh(y)


if __name__ == "__main__":
    B = 8
    key = jax.random.PRNGKey(0)
    kz, kp = jax.random.split(key)
    z = jax.random.normal(kz, (B, Z_DIM), jnp.float32)
    params = init_generator_params(kp)
    prep = prepare_generator_params(params)     # one-time pad/cast (not per call)

    img = generator_forward(z, prep)
    img = jax.block_until_ready(img)
    assert img.shape == (B, OUT_DIM), img.shape

    ref = _ref_generator(z, params)
    np.testing.assert_allclose(np.asarray(img), np.asarray(ref),
                               rtol=3e-2, atol=3e-2)
    print("KERNEL_OK")
</pallas_src>

<mosaic_0001>
module attributes {stable_mosaic.version = 11 : i64} {
  func.func @_generator_kernel(%arg0: memref<8x128xbf16, #tpu.memory_space<vmem>>, %arg1: memref<128x128xbf16, #tpu.memory_space<vmem>>, %arg2: memref<1x128xf32, #tpu.memory_space<vmem>>, %arg3: memref<128x256xbf16, #tpu.memory_space<vmem>>, %arg4: memref<1x256xf32, #tpu.memory_space<vmem>>, %arg5: memref<1x256xf32, #tpu.memory_space<vmem>>, %arg6: memref<256x512xbf16, #tpu.memory_space<vmem>>, %arg7: memref<1x512xf32, #tpu.memory_space<vmem>>, %arg8: memref<1x512xf32, #tpu.memory_space<vmem>>, %arg9: memref<512x1024xbf16, #tpu.memory_space<vmem>>, %arg10: memref<1x1024xf32, #tpu.memory_space<vmem>>, %arg11: memref<1x1024xf32, #tpu.memory_space<vmem>>, %arg12: memref<1024x256xbf16, #tpu.memory_space<vmem>>, %arg13: memref<1x256xf32, #tpu.memory_space<vmem>>, %arg14: memref<8x256xf32, #tpu.memory_space<vmem>>) attributes {dimension_semantics = [], scalar_prefetch = 0 : i64, scratch_operands = 0 : i64, tpu.core_type = #tpu.core_type<tc>} {
    %c0 = arith.constant 0 : index
    %c0_0 = arith.constant 0 : index
    %0 = vector.load %arg0[%c0, %c0_0] : memref<8x128xbf16, #tpu.memory_space<vmem>>, vector<8x128xbf16>
    %c0_1 = arith.constant 0 : index
    %c0_2 = arith.constant 0 : index
    %1 = vector.load %arg1[%c0_1, %c0_2] : memref<128x128xbf16, #tpu.memory_space<vmem>>, vector<128x128xbf16>
    %cst = arith.constant dense<0.000000e+00> : vector<8x128xf32>
    %2 = tpu.matmul %0, %1, %cst {dimension_numbers = #tpu.dot_dimension_numbers<[1], [0], [0], [1], [0, 0, 1, 1], [], []>} : vector<8x128xbf16>, vector<128x128xbf16>, vector<8x128xf32> -> vector<8x128xf32>
    %c0_3 = arith.constant 0 : index
    %c0_4 = arith.constant 0 : index
    %3 = vector.load %arg2[%c0_3, %c0_4] : memref<1x128xf32, #tpu.memory_space<vmem>>, vector<1x128xf32>
    %4 = vector.broadcast %3 : vector<1x128xf32> to vector<8x128xf32>
    %5 = arith.addf %2, %4 : vector<8x128xf32>
    %cst_5 = arith.constant 2.000000e-01 : f32
    %6 = vector.broadcast %cst_5 : f32 to vector<8x128xf32>
    %7 = arith.mulf %6, %5 : vector<8x128xf32>
    %8 = arith.maximumf %5, %7 : vector<8x128xf32>
    %9 = arith.truncf %8 : vector<8x128xf32> to vector<8x128xbf16>
    %c0_6 = arith.constant 0 : index
    %c0_7 = arith.constant 0 : index
    %10 = vector.load %arg3[%c0_6, %c0_7] : memref<128x256xbf16, #tpu.memory_space<vmem>>, vector<128x256xbf16>
    %cst_8 = arith.constant dense<0.000000e+00> : vector<8x256xf32>
    %11 = tpu.matmul %9, %10, %cst_8 {dimension_numbers = #tpu.dot_dimension_numbers<[1], [0], [0], [1], [0, 0, 1, 1], [], []>} : vector<8x128xbf16>, vector<128x256xbf16>, vector<8x256xf32> -> vector<8x256xf32>
    %cst_9 = arith.constant dense<0.000000e+00> : vector<256xf32>
    %12 = vector.multi_reduction <add>, %11, %cst_9 [0] : vector<8x256xf32> to vector<256xf32>
    %13 = vector.shape_cast %12 : vector<256xf32> to vector<1x256xf32>
    %cst_10 = arith.constant 8.000000e+00 : f32
    %14 = vector.broadcast %cst_10 : f32 to vector<1x256xf32>
    %15 = arith.divf %13, %14 : vector<1x256xf32>
    %16 = vector.broadcast %15 : vector<1x256xf32> to vector<8x256xf32>
    %17 = arith.subf %11, %16 : vector<8x256xf32>
    %18 = arith.mulf %17, %17 : vector<8x256xf32>
    %cst_11 = arith.constant dense<0.000000e+00> : vector<256xf32>
    %19 = vector.multi_reduction <add>, %18, %cst_11 [0] : vector<8x256xf32> to vector<256xf32>
    %20 = vector.shape_cast %19 : vector<256xf32> to vector<1x256xf32>
    %cst_12 = arith.constant 8.000000e+00 : f32
    %21 = vector.broadcast %cst_12 : f32 to vector<1x256xf32>
    %22 = arith.divf %20, %21 : vector<1x256xf32>
    %c0_13 = arith.constant 0 : index
    %c0_14 = arith.constant 0 : index
    %23 = vector.load %arg4[%c0_13, %c0_14] : memref<1x256xf32, #tpu.memory_space<vmem>>, vector<1x256xf32>
    %cst_15 = arith.constant 8.000000e-01 : f32
    %24 = vector.broadcast %cst_15 : f32 to vector<1x256xf32>
    %25 = arith.addf %22, %24 : vector<1x256xf32>
    %26 = math.rsqrt %25 : vector<1x256xf32>
    %27 = arith.mulf %23, %26 : vector<1x256xf32>
    %28 = vector.broadcast %27 : vector<1x256xf32> to vector<8x256xf32>
    %29 = arith.mulf %17, %28 : vector<8x256xf32>
    %c0_16 = arith.constant 0 : index
    %c0_17 = arith.constant 0 : index
    %30 = vector.load %arg5[%c0_16, %c0_17] : memref<1x256xf32, #tpu.memory_space<vmem>>, vector<1x256xf32>
    %31 = vector.broadcast %30 : vector<1x256xf32> to vector<8x256xf32>
    %32 = arith.addf %29, %31 : vector<8x256xf32>
    %cst_18 = arith.constant 2.000000e-01 : f32
    %33 = vector.broadcast %cst_18 : f32 to vector<8x256xf32>
    %34 = arith.mulf %33, %32 : vector<8x256xf32>
    %35 = arith.maximumf %32, %34 : vector<8x256xf32>
    %36 = arith.truncf %35 : vector<8x256xf32> to vector<8x256xbf16>
    %c0_19 = arith.constant 0 : index
    %c0_20 = arith.constant 0 : index
    %37 = vector.load %arg6[%c0_19, %c0_20] : memref<256x512xbf16, #tpu.memory_space<vmem>>, vector<256x512xbf16>
    %cst_21 = arith.constant dense<0.000000e+00> : vector<8x512xf32>
    %38 = tpu.matmul %36, %37, %cst_21 {dimension_numbers = #tpu.dot_dimension_numbers<[1], [0], [0], [1], [0, 0, 1, 1], [], []>} : vector<8x256xbf16>, vector<256x512xbf16>, vector<8x512xf32> -> vector<8x512xf32>
    %cst_22 = arith.constant dense<0.000000e+00> : vector<512xf32>
    %39 = vector.multi_reduction <add>, %38, %cst_22 [0] : vector<8x512xf32> to vector<512xf32>
    %40 = vector.shape_cast %39 : vector<512xf32> to vector<1x512xf32>
    %cst_23 = arith.constant 8.000000e+00 : f32
    %41 = vector.broadcast %cst_23 : f32 to vector<1x512xf32>
    %42 = arith.divf %40, %41 : vector<1x512xf32>
    %43 = vector.broadcast %42 : vector<1x512xf32> to vector<8x512xf32>
    %44 = arith.subf %38, %43 : vector<8x512xf32>
    %45 = arith.mulf %44, %44 : vector<8x512xf32>
    %cst_24 = arith.constant dense<0.000000e+00> : vector<512xf32>
    %46 = vector.multi_reduction <add>, %45, %cst_24 [0] : vector<8x512xf32> to vector<512xf32>
    %47 = vector.shape_cast %46 : vector<512xf32> to vector<1x512xf32>
    %cst_25 = arith.constant 8.000000e+00 : f32
    %48 = vector.broadcast %cst_25 : f32 to vector<1x512xf32>
    %49 = arith.divf %47, %48 : vector<1x512xf32>
    %c0_26 = arith.constant 0 : index
    %c0_27 = arith.constant 0 : index
    %50 = vector.load %arg7[%c0_26, %c0_27] : memref<1x512xf32, #tpu.memory_space<vmem>>, vector<1x512xf32>
    %cst_28 = arith.constant 8.000000e-01 : f32
    %51 = vector.broadcast %cst_28 : f32 to vector<1x512xf32>
    %52 = arith.addf %49, %51 : vector<1x512xf32>
    %53 = math.rsqrt %52 : vector<1x512xf32>
    %54 = arith.mulf %50, %53 : vector<1x512xf32>
    %55 = vector.broadcast %54 : vector<1x512xf32> to vector<8x512xf32>
    %56 = arith.mulf %44, %55 : vector<8x512xf32>
    %c0_29 = arith.constant 0 : index
    %c0_30 = arith.constant 0 : index
    %57 = vector.load %arg8[%c0_29, %c0_30] : memref<1x512xf32, #tpu.memory_space<vmem>>, vector<1x512xf32>
    %58 = vector.broadcast %57 : vector<1x512xf32> to vector<8x512xf32>
    %59 = arith.addf %56, %58 : vector<8x512xf32>
    %cst_31 = arith.constant 2.000000e-01 : f32
    %60 = vector.broadcast %cst_31 : f32 to vector<8x512xf32>
    %61 = arith.mulf %60, %59 : vector<8x512xf32>
    %62 = arith.maximumf %59, %61 : vector<8x512xf32>
    %63 = arith.truncf %62 : vector<8x512xf32> to vector<8x512xbf16>
    %c0_32 = arith.constant 0 : index
    %c0_33 = arith.constant 0 : index
    %64 = vector.load %arg9[%c0_32, %c0_33] : memref<512x1024xbf16, #tpu.memory_space<vmem>>, vector<512x1024xbf16>
    %cst_34 = arith.constant dense<0.000000e+00> : vector<8x1024xf32>
    %65 = tpu.matmul %63, %64, %cst_34 {dimension_numbers = #tpu.dot_dimension_numbers<[1], [0], [0], [1], [0, 0, 1, 1], [], []>} : vector<8x512xbf16>, vector<512x1024xbf16>, vector<8x1024xf32> -> vector<8x1024xf32>
    %cst_35 = arith.constant dense<0.000000e+00> : vector<1024xf32>
    %66 = vector.multi_reduction <add>, %65, %cst_35 [0] : vector<8x1024xf32> to vector<1024xf32>
    %67 = vector.shape_cast %66 : vector<1024xf32> to vector<1x1024xf32>
    %cst_36 = arith.constant 8.000000e+00 : f32
    %68 = vector.broadcast %cst_36 : f32 to vector<1x1024xf32>
    %69 = arith.divf %67, %68 : vector<1x1024xf32>
    %70 = vector.broadcast %69 : vector<1x1024xf32> to vector<8x1024xf32>
    %71 = arith.subf %65, %70 : vector<8x1024xf32>
    %72 = arith.mulf %71, %71 : vector<8x1024xf32>
    %cst_37 = arith.constant dense<0.000000e+00> : vector<1024xf32>
    %73 = vector.multi_reduction <add>, %72, %cst_37 [0] : vector<8x1024xf32> to vector<1024xf32>
    %74 = vector.shape_cast %73 : vector<1024xf32> to vector<1x1024xf32>
    %cst_38 = arith.constant 8.000000e+00 : f32
    %75 = vector.broadcast %cst_38 : f32 to vector<1x1024xf32>
    %76 = arith.divf %74, %75 : vector<1x1024xf32>
    %c0_39 = arith.constant 0 : index
    %c0_40 = arith.constant 0 : index
    %77 = vector.load %arg10[%c0_39, %c0_40] : memref<1x1024xf32, #tpu.memory_space<vmem>>, vector<1x1024xf32>
    %cst_41 = arith.constant 8.000000e-01 : f32
    %78 = vector.broadcast %cst_41 : f32 to vector<1x1024xf32>
    %79 = arith.addf %76, %78 : vector<1x1024xf32>
    %80 = math.rsqrt %79 : vector<1x1024xf32>
    %81 = arith.mulf %77, %80 : vector<1x1024xf32>
    %82 = vector.broadcast %81 : vector<1x1024xf32> to vector<8x1024xf32>
    %83 = arith.mulf %71, %82 : vector<8x1024xf32>
    %c0_42 = arith.constant 0 : index
    %c0_43 = arith.constant 0 : index
    %84 = vector.load %arg11[%c0_42, %c0_43] : memref<1x1024xf32, #tpu.memory_space<vmem>>, vector<1x1024xf32>
    %85 = vector.broadcast %84 : vector<1x1024xf32> to vector<8x1024xf32>
    %86 = arith.addf %83, %85 : vector<8x1024xf32>
    %cst_44 = arith.constant 2.000000e-01 : f32
    %87 = vector.broadcast %cst_44 : f32 to vector<8x1024xf32>
    %88 = arith.mulf %87, %86 : vector<8x1024xf32>
    %89 = arith.maximumf %86, %88 : vector<8x1024xf32>
    %90 = arith.truncf %89 : vector<8x1024xf32> to vector<8x1024xbf16>
    %c0_45 = arith.constant 0 : index
    %c0_46 = arith.constant 0 : index
    %91 = vector.load %arg12[%c0_45, %c0_46] : memref<1024x256xbf16, #tpu.memory_space<vmem>>, vector<1024x256xbf16>
    %cst_47 = arith.constant dense<0.000000e+00> : vector<8x256xf32>
    %92 = tpu.matmul %90, %91, %cst_47 {dimension_numbers = #tpu.dot_dimension_numbers<[1], [0], [0], [1], [0, 0, 1, 1], [], []>} : vector<8x1024xbf16>, vector<1024x256xbf16>, vector<8x256xf32> -> vector<8x256xf32>
    %c0_48 = arith.constant 0 : index
    %c0_49 = arith.constant 0 : index
    %93 = vector.load %arg13[%c0_48, %c0_49] : memref<1x256xf32, #tpu.memory_space<vmem>>, vector<1x256xf32>
    %94 = vector.broadcast %93 : vector<1x256xf32> to vector<8x256xf32>
    %95 = arith.addf %92, %94 : vector<8x256xf32>
    %96 = math.tanh %95 : vector<8x256xf32>
    %c0_50 = arith.constant 0 : index
    %c0_51 = arith.constant 0 : index
    %97 = vector.load %arg14[%c0_50, %c0_51] : memref<8x256xf32, #tpu.memory_space<vmem>>, vector<8x256xf32>
    tpu.vector_store %arg14[%c0_50, %c0_51], %96 {strides = array<i32>} : memref<8x256xf32, #tpu.memory_space<vmem>>, vector<8x256xf32>,
    return
  }
}

</mosaic_0001>

<llo_original>
// kernel: generator_forward.1
$region0: #{generator_forward.1}
  #allocation0 [shape = 'u32[]', space=smem, size = 0x4, offset = 0x4, fixed_abs, tag = 'smem constant byte address 0x4 - core index']
  #allocation1 [shape = 'u32[144,128]{1,0:T(1,128)}', space=vmem, size = 0x12000, scoped, tag = 'internal scratch']
  %s0 = inlined_call_operand.vmem [shape: bf16[8,128], index: 0, kind: input, shape index: {}]
  %s1 = inlined_call_operand.hbm [shape: bf16[128,128], index: 1, kind: input, shape index: {}]
  %s2 = inlined_call_operand.hbm [shape: f32[1,128], index: 2, kind: input, shape index: {}]
  %s3 = inlined_call_operand.hbm [shape: bf16[128,256], index: 3, kind: input, shape index: {}]
  %s4 = inlined_call_operand.vmem [shape: f32[1,256], index: 4, kind: input, shape index: {}]
  %s5 = inlined_call_operand.hbm [shape: f32[1,256], index: 5, kind: input, shape index: {}]
  %s6 = inlined_call_operand.hbm [shape: bf16[256,512], index: 6, kind: input, shape index: {}]
  %s7 = inlined_call_operand.vmem [shape: f32[1,512], index: 7, kind: input, shape index: {}]
  %s8 = inlined_call_operand.vmem [shape: f32[1,512], index: 8, kind: input, shape index: {}]
  %s9 = inlined_call_operand.hbm [shape: bf16[512,1024], index: 9, kind: input, shape index: {}]
  %s10 = inlined_call_operand.vmem [shape: f32[1,1024], index: 10, kind: input, shape index: {}]
  %s11 = inlined_call_operand.vmem [shape: f32[1,1024], index: 11, kind: input, shape index: {}]
  %s12 = inlined_call_operand.hbm [shape: bf16[1024,256], index: 12, kind: input, shape index: {}]
  %s13 = inlined_call_operand.hbm [shape: f32[1,256], index: 13, kind: input, shape index: {}]
  %s14 = inlined_call_operand.hbm [shape: f32[8,256], index: 14, kind: output, shape index: {}]
  %s15 = sld [smem:[#allocation0]]
  $region98: #{generator_forward.1} parent=0
    _
  %s17 = ssub.s32 1, %s15
  %s18 = scalar_select 0, %s17, %s15
  $region1: #{generator_forward.1} parent=0
    #allocation2 [shape = 'u8[32768]{0}', space=vmem, size = 0x8000, scoped, tag = 'input window, operand 1, single buffered']
    #allocation3 [shape = 's32[1]{0}', space=sflag, size = 0x4, scoped, tag = 'scoped memory for generator_forward.1']
    #allocation4 [shape = 's32[1]{0}', space=sflag, size = 0x4, scoped, tag = 'scoped memory for generator_forward.1']
    #allocation5 [shape = 'u8[512]{0}', space=vmem, size = 0x400, scoped, tag = 'input window, operand 2, single buffered']
    #allocation6 [shape = 's32[1]{0}', space=sflag, size = 0x4, scoped, tag = 'scoped memory for generator_forward.1']
    #allocation7 [shape = 'u8[65536]{0}', space=vmem, size = 0x10000, scoped, tag = 'input window, operand 3, single buffered']
    #allocation8 [shape = 'u8[1024]{0}', space=vmem, size = 0x400, scoped, tag = 'input window, operand 5, single buffered']
    #allocation9 [shape = 's32[1]{0}', space=sflag, size = 0x4, scoped, tag = 'scoped memory for generator_forward.1']
    #allocation10 [shape = 'u8[262144]{0}', space=vmem, size = 0x40000, scoped, tag = 'input window, operand 6, single buffered']
    #allocation11 [shape = 'u8[1048576]{0}', space=vmem, size = 0x100000, scoped, tag = 'input window, operand 9, single buffered']
    #allocation12 [shape = 's32[1]{0}', space=sflag, size = 0x4, scoped, tag = 'scoped memory for generator_forward.1']
    #allocation13 [shape = 'u8[524288]{0}', space=vmem, size = 0x80000, scoped, tag = 'input window, operand 12, single buffered']
    #allocation14 [shape = 'u8[1024]{0}', space=vmem, size = 0x400, scoped, tag = 'input window, operand 13, single buffered']
    #allocation15 [shape = 's32[1]{0}', space=sflag, size = 0x4, scoped, tag = 'scoped memory for generator_forward.1']
    #allocation16 [shape = 'u8[8192]{0}', space=vmem, size = 0x2000, scoped, tag = 'output window, operand 0, single buffered']
    %19 = vsyncpa [#allocation3], 0
    %20 = vsyncpa [#allocation6], 0
    %21 = vsyncpa [#allocation9], 0
    %22 = vsyncpa [#allocation12], 0
    %23 = vsyncpa [#allocation15], 0
    %24 = vsyncpa [#allocation4], 0
    // Predicated region
    $region2: #{generator_forward.1} parent=1 // pred_check
      _
    $region3: #{generator_forward.1} parent=1 // pred_check_branch
      %26 = sbr.rel (0) target = $region5
    $region4: #{generator_forward.1} parent=1 // pred_region
      _
    $region5: #{generator_forward.1} parent=1 // pred_fallthru
      _
    // Predicated region
    $region6: #{generator_forward.1} parent=1 // pred_check
      _
    $region7: #{generator_forward.1} parent=1 // pred_check_branch
      %28 = sbr.rel (0) target = $region9
    $region8: #{generator_forward.1} parent=1 // pred_region
      %s30 = ssub.s32 1024, 1024
      %31 = vsyncadd [#allocation3], %s30
      %s32 = sshll.u32 [#allocation2], 4
      %s33 = int_to_ptr.vmem [resolvable:$true] %s32
      %38 = dma.hbm_to_vmem [thread:$0]  %s1, 1024, %s33, [#allocation3], 64, 64, 4
    $region9: #{generator_forward.1} parent=1 // pred_fallthru
      _
    // Predicated region
    $region10: #{generator_forward.1} parent=1 // pred_check
      _
    $region11: #{generator_forward.1} parent=1 // pred_check_branch
      %40 = sbr.rel (0) target = $region13
    $region12: #{generator_forward.1} parent=1 // pred_region
      %s42 = ssub.s32 16, 16
      %43 = vsyncadd [#allocation6], %s42
      %s45 = sshll.u32 [#allocation5], 4
      %s46 = int_to_ptr.vmem [resolvable:$true] %s45
      %48 = dma.hbm_to_vmem [thread:$0]  %s2, 16, %s46, [#allocation6]
    $region13: #{generator_forward.1} parent=1 // pred_fallthru
      _
    // Predicated region
    $region14: #{generator_forward.1} parent=1 // pred_check
      _
    $region15: #{generator_forward.1} parent=1 // pred_check_branch
      %50 = sbr.rel (0) target = $region17
    $region16: #{generator_forward.1} parent=1 // pred_region
      %s52 = ssub.s32 2048, 2048
      %53 = vsyncadd [#allocation6], %s52
      %s54 = sshll.u32 [#allocation7], 4
      %s55 = int_to_ptr.vmem [resolvable:$true] %s54
      %60 = dma.hbm_to_vmem [thread:$0]  %s3, 2048, %s55, [#allocation6], 128, 128, 8
    $region17: #{generator_forward.1} parent=1 // pred_fallthru
      _
    // Predicated region
    $region18: #{generator_forward.1} parent=1 // pred_check
      _
    $region19: #{generator_forward.1} parent=1 // pred_check_branch
      %62 = sbr.rel (0) target = $region21
    $region20: #{generator_forward.1} parent=1 // pred_region
      _
    $region21: #{generator_forward.1} parent=1 // pred_fallthru
      _
    // Predicated region
    $region22: #{generator_forward.1} parent=1 // pred_check
      _
    $region23: #{generator_forward.1} parent=1 // pred_check_branch
      %64 = sbr.rel (0) target = $region25
    $region24: #{generator_forward.1} parent=1 // pred_region
      %s66 = ssub.s32 32, 32
      %67 = vsyncadd [#allocation9], %s66
      %s69 = sshll.u32 [#allocation8], 4
      %s70 = int_to_ptr.vmem [resolvable:$true] %s69
      %72 = dma.hbm_to_vmem [thread:$0]  %s5, 32, %s70, [#allocation9]
    $region25: #{generator_forward.1} parent=1 // pred_fallthru
      _
    // Predicated region
    $region26: #{generator_forward.1} parent=1 // pred_check
      _
    $region27: #{generator_forward.1} parent=1 // pred_check_branch
      %74 = sbr.rel (0) target = $region29
    $region28: #{generator_forward.1} parent=1 // pred_region
      %s76 = ssub.s32 8192, 8192
      %77 = vsyncadd [#allocation9], %s76
      %s78 = sshll.u32 [#allocation10], 4
      %s79 = int_to_ptr.vmem [resolvable:$true] %s78
      %84 = dma.hbm_to_vmem [thread:$0]  %s6, 8192, %s79, [#allocation9], 256, 256, 16
    $region29: #{generator_forward.1} parent=1 // pred_fallthru
      _
    // Predicated region
    $region30: #{generator_forward.1} parent=1 // pred_check
      _
    $region31: #{generator_forward.1} parent=1 // pred_check_branch
      %86 = sbr.rel (0) target = $region33
    $region32: #{generator_forward.1} parent=1 // pred_region
      _
    $region33: #{generator_forward.1} parent=1 // pred_fallthru
      _
    // Predicated region
    $region34: #{generator_forward.1} parent=1 // pred_check
      _
    $region35: #{generator_forward.1} parent=1 // pred_check_branch
      %88 = sbr.rel (0) target = $region37
    $region36: #{generator_forward.1} parent=1 // pred_region
      _
    $region37: #{generator_forward.1} parent=1 // pred_fallthru
      _
    // Predicated region
    $region38: #{generator_forward.1} parent=1 // pred_check
      _
    $region39: #{generator_forward.1} parent=1 // pred_check_branch
      %90 = sbr.rel (0) target = $region41
    $region40: #{generator_forward.1} parent=1 // pred_region
      %s92 = ssub.s32 32768, 32768
      %93 = vsyncadd [#allocation12], %s92
      %s94 = sshll.u32 [#allocation11], 4
      %s95 = int_to_ptr.vmem [resolvable:$true] %s94
      %100 = dma.hbm_to_vmem [thread:$0]  %s9, 32768, %s95, [#allocation12], 512, 512, 32
    $region41: #{generator_forward.1} parent=1 // pred_fallthru
      _
    // Predicated region
    $region42: #{generator_forward.1} parent=1 // pred_check
      _
    $region43: #{generator_forward.1} parent=1 // pred_check_branch
      %102 = sbr.rel (0) target = $region45
    $region44: #{generator_forward.1} parent=1 // pred_region
      _
    $region45: #{generator_forward.1} parent=1 // pred_fallthru
      _
    // Predicated region
    $region46: #{generator_forward.1} parent=1 // pred_check
      _
    $region47: #{generator_forward.1} parent=1 // pred_check_branch
      %104 = sbr.rel (0) target = $region49
    $region48: #{generator_forward.1} parent=1 // pred_region
      _
    $region49: #{generator_forward.1} parent=1 // pred_fallthru
      _
    // Predicated region
    $region50: #{generator_forward.1} parent=1 // pred_check
      _
    $region51: #{generator_forward.1} parent=1 // pred_check_branch
      %106 = sbr.rel (0) target = $region53
    $region52: #{generator_forward.1} parent=1 // pred_region
      %s108 = ssub.s32 16384, 16384
      %109 = vsyncadd [#allocation12], %s108
      %s110 = sshll.u32 [#allocation13], 4
      %s111 = int_to_ptr.vmem [resolvable:$true] %s110
      %116 = dma.hbm_to_vmem [thread:$0]  %s12, 16384, %s111, [#allocation12], 128, 128, 8
    $region53: #{generator_forward.1} parent=1 // pred_fallthru
      _
    // Predicated region
    $region54: #{generator_forward.1} parent=1 // pred_check
      _
    $region55: #{generator_forward.1} parent=1 // pred_check_branch
      %118 = sbr.rel (0) target = $region57
    $region56: #{generator_forward.1} parent=1 // pred_region
      %s120 = ssub.s32 32, 32
      %121 = vsyncadd [#allocation15], %s120
      %s123 = sshll.u32 [#allocation14], 4
      %s124 = int_to_ptr.vmem [resolvable:$true] %s123
      %126 = dma.hbm_to_vmem [thread:$0]  %s13, 32, %s124, [#allocation15]
    $region57: #{generator_forward.1} parent=1 // pred_fallthru
      _
    // Predicated region
    $region58: #{generator_forward.1} parent=1 // pred_check
      _
    $region59: #{generator_forward.1} parent=1 // pred_check_branch
      %128 = sbr.rel (0) target = $region61
    $region60: #{generator_forward.1} parent=1 // pred_region
      %129 = dma.done [#allocation3], 1024
    $region61: #{generator_forward.1} parent=1 // pred_fallthru
      _
    // Predicated region
    $region62: #{generator_forward.1} parent=1 // pred_check
      _
    $region63: #{generator_forward.1} parent=1 // pred_check_branch
      %131 = sbr.rel (0) target = $region65
    $region64: #{generator_forward.1} parent=1 // pred_region
      %132 = dma.done [#allocation6], 16
    $region65: #{generator_forward.1} parent=1 // pred_fallthru
      _
    // Predicated region
    $region66: #{generator_forward.1} parent=1 // pred_check
      _
    $region67: #{generator_forward.1} parent=1 // pred_check_branch
      %134 = sbr.rel (0) target = $region69
    $region68: #{generator_forward.1} parent=1 // pred_region
      %135 = dma.done [#allocation6], 2048
    $region69: #{generator_forward.1} parent=1 // pred_fallthru
      _
    // Predicated region
    $region70: #{generator_forward.1} parent=1 // pred_check
      _
    $region71: #{generator_forward.1} parent=1 // pred_check_branch
      %137 = sbr.rel (0) target = $region73
    $region72: #{generator_forward.1} parent=1 // pred_region
      %138 = dma.done [#allocation9], 32
    $region73: #{generator_forward.1} parent=1 // pred_fallthru
      _
    // Predicated region
    $region74: #{generator_forward.1} parent=1 // pred_check
      _
    $region75: #{generator_forward.1} parent=1 // pred_check_branch
      %140 = sbr.rel (0) target = $region77
    $region76: #{generator_forward.1} parent=1 // pred_region
      %141 = dma.done [#allocation9], 8192
    $region77: #{generator_forward.1} parent=1 // pred_fallthru
      _
    // Predicated region
    $region78: #{generator_forward.1} parent=1 // pred_check
      _
    $region79: #{generator_forward.1} parent=1 // pred_check_branch
      %143 = sbr.rel (0) target = $region81
    $region80: #{generator_forward.1} parent=1 // pred_region
      %144 = dma.done [#allocation12], 32768
    $region81: #{generator_forward.1} parent=1 // pred_fallthru
      _
    // Predicated region
    $region82: #{generator_forward.1} parent=1 // pred_check
      _
    $region83: #{generator_forward.1} parent=1 // pred_check_branch
      %146 = sbr.rel (0) target = $region85
    $region84: #{generator_forward.1} parent=1 // pred_region
      %147 = dma.done [#allocation12], 16384
    $region85: #{generator_forward.1} parent=1 // pred_fallthru
      _
    // Predicated region
    $region86: #{generator_forward.1} parent=1 // pred_check
      _
    $region87: #{generator_forward.1} parent=1 // pred_check_branch
      %149 = sbr.rel (0) target = $region89
    $region88: #{generator_forward.1} parent=1 // pred_region
      %150 = dma.done [#allocation15], 32
    $region89: #{generator_forward.1} parent=1 // pred_fallthru
      _
    %v152 = vld [vmem:[%s0] sm:$0xf]
    %v153 = vld [vmem:[#allocation2] sm:$0xf]
    %v154 = vld [vmem:[#allocation2 + $0x4] sm:$0xf]
    %v155 = vld [vmem:[#allocation2 + $0x8] sm:$0xf]
    %v156 = vld [vmem:[#allocation2 + $0xc] sm:$0xf]
    %v157 = vld [vmem:[#allocation2 + $0x10] sm:$0xf]
    %v158 = vld [vmem:[#allocation2 + $0x14] sm:$0xf]
    %v159 = vld [vmem:[#allocation2 + $0x18] sm:$0xf]
    %v160 = vld [vmem:[#allocation2 + $0x1c] sm:$0xf]
    %v161 = vld [vmem:[#allocation2 + $0x20] sm:$0xf]
    %v162 = vld [vmem:[#allocation2 + $0x24] sm:$0xf]
    %v163 = vld [vmem:[#allocation2 + $0x28] sm:$0xf]
    %v164 = vld [vmem:[#allocation2 + $0x2c] sm:$0xf]
    %v165 = vld [vmem:[#allocation2 + $0x30] sm:$0xf]
    %v166 = vld [vmem:[#allocation2 + $0x34] sm:$0xf]
    %v167 = vld [vmem:[#allocation2 + $0x38] sm:$0xf]
    %v168 = vld [vmem:[#allocation2 + $0x3c] sm:$0xf]
    %v169 = vld [vmem:[#allocation5] sm:$0x1]
    %v171 = vlaneseq
    %v172 = vshrl.u32 %v171, 7
    %v173 = vsub.s32 0, %v172
    %v174 = vrot.slane %v169, %v173
    %v192 = vunpack.c.l.b16 %v153
    %v193 = vunpack.c.l.b16 %v154
    %v194 = vunpack.c.l.b16 %v155
    %v195 = vunpack.c.l.b16 %v156
    %v196 = vunpack.c.l.b16 %v157
    %v197 = vunpack.c.l.b16 %v158
    %v198 = vunpack.c.l.b16 %v159
    %v199 = vunpack.c.l.b16 %v160
    %v200 = vunpack.c.l.b16 %v161
    %v201 = vunpack.c.l.b16 %v162
    %v202 = vunpack.c.l.b16 %v163
    %v203 = vunpack.c.l.b16 %v164
    %v204 = vunpack.c.l.b16 %v165
    %v205 = vunpack.c.l.b16 %v166
    %v206 = vunpack.c.l.b16 %v167
    %v207 = vunpack.c.l.b16 %v168
    %v208 = vpack.c.b16 %v193, %v192
    %v209 = vpack.c.b16 %v195, %v194
    %v210 = vpack.c.b16 %v197, %v196
    %v211 = vpack.c.b16 %v199, %v198
    %v212 = vpack.c.b16 %v201, %v200
    %v213 = vpack.c.b16 %v203, %v202
    %v214 = vpack.c.b16 %v205, %v204
    %v215 = vpack.c.b16 %v207, %v206
    %224 = vmatprep.subr.bf16.mxu0 0
    %225 = vmatpush1.bf16.msra.mxu0 %v215
    %226 = vmatprep.subr.bf16.mxu0 0
    %227 = vmatpush1.bf16.msra.mxu0 %v214
    %228 = vmatprep.subr.bf16.mxu0 0
    %229 = vmatpush1.bf16.msra.mxu0 %v213
    %230 = vmatprep.subr.bf16.mxu0 0
    %231 = vmatpush1.bf16.msra.mxu0 %v212
    %232 = vmatprep.subr.bf16.mxu0 0
    %233 = vmatpush1.bf16.msra.mxu0 %v211
    %234 = vmatprep.subr.bf16.mxu0 0
    %235 = vmatpush1.bf16.msra.mxu0 %v210
    %236 = vmatprep.subr.bf16.mxu0 0
    %237 = vmatpush1.bf16.msra.mxu0 %v209
    %238 = vmatprep.subr.bf16.mxu0 0
    %239 = vmatpush1.bf16.msra.mxu0 %v208
    %240 = vmatprep.subr.bf16.mxu0 0
    %241 = vmatpush2.bf16.msra.mxu0 0
    %242 = vmatprep.subr.bf16.mxu0 0
    %243 = vmatpush2.bf16.msra.mxu0 0
    %244 = vmatprep.subr.bf16.mxu0 0
    %245 = vmatpush2.bf16.msra.mxu0 0
    %246 = vmatprep.subr.bf16.mxu0 0
    %247 = vmatpush2.bf16.msra.mxu0 0
    %248 = vmatprep.subr.bf16.mxu0 0
    %249 = vmatpush2.bf16.msra.mxu0 0
    %250 = vmatprep.subr.bf16.mxu0 0
    %251 = vmatpush2.bf16.msra.mxu0 0
    %252 = vmatprep.subr.bf16.mxu0 0
    %253 = vmatpush2.bf16.msra.mxu0 0
    %254 = vmatprep.subr.bf16.mxu0 0
    %255 = vmatpush2.bf16.msra.mxu0 0
    %256 = vmatprep.mubr.bf16.mxu0 0
    %257 = vmatmul.mubr.bf16.gmra.mxu0 %v152
    %v258 = vpop.f32.mrf.mxu0
    %v259 = vadd.f32 %v174, %v258
    %v260 = vpop.f32.mrf.mxu0
    %v261 = vpop.f32.mrf.mxu0
    %v262 = vpop.f32.mrf.mxu0
    %263 = vdwg.mxu0
    %v264 = vmul.f32 %v259, 0.2
    %v265 = vmax.f32 %v259, %v264
    %v266 = vpack.c.bf16 %v265, %v265
    %v267 = vld [vmem:[#allocation7] sm:$0xff]
    %v268 = vld [vmem:[#allocation7 + $0x8] sm:$0xff]
    %v269 = vld [vmem:[#allocation7 + $0x10] sm:$0xff]
    %v270 = vld [vmem:[#allocation7 + $0x18] sm:$0xff]
    %v271 = vld [vmem:[#allocation7 + $0x20] sm:$0xff]
    %v272 = vld [vmem:[#allocation7 + $0x28] sm:$0xff]
    %v273 = vld [vmem:[#allocation7 + $0x30] sm:$0xff]
    %v274 = vld [vmem:[#allocation7 + $0x38] sm:$0xff]
    %v275 = vld [vmem:[#allocation7 + $0x40] sm:$0xff]
    %v276 = vld [vmem:[#allocation7 + $0x48] sm:$0xff]
    %v277 = vld [vmem:[#allocation7 + $0x50] sm:$0xff]
    %v278 = vld [vmem:[#allocation7 + $0x58] sm:$0xff]
    %v279 = vld [vmem:[#allocation7 + $0x60] sm:$0xff]
    %v280 = vld [vmem:[#allocation7 + $0x68] sm:$0xff]
    %v281 = vld [vmem:[#allocation7 + $0x70] sm:$0xff]
    %v282 = vld [vmem:[#allocation7 + $0x78] sm:$0xff]
    %v299 = vunpack.c.l.b16 %v267
    %v300 = vunpack.c.h.b16 %v267
    %v301 = vunpack.c.l.b16 %v268
    %v302 = vunpack.c.h.b16 %v268
    %v303 = vunpack.c.l.b16 %v269
    %v304 = vunpack.c.h.b16 %v269
    %v305 = vunpack.c.l.b16 %v270
    %v306 = vunpack.c.h.b16 %v270
    %v307 = vunpack.c.l.b16 %v271
    %v308 = vunpack.c.h.b16 %v271
    %v309 = vunpack.c.l.b16 %v272
    %v310 = vunpack.c.h.b16 %v272
    %v311 = vunpack.c.l.b16 %v273
    %v312 = vunpack.c.h.b16 %v273
    %v313 = vunpack.c.l.b16 %v274
    %v314 = vunpack.c.h.b16 %v274
    %v315 = vunpack.c.l.b16 %v275
    %v316 = vunpack.c.h.b16 %v275
    %v317 = vunpack.c.l.b16 %v276
    %v318 = vunpack.c.h.b16 %v276
    %v319 = vunpack.c.l.b16 %v277
    %v320 = vunpack.c.h.b16 %v277
    %v321 = vunpack.c.l.b16 %v278
    %v322 = vunpack.c.h.b16 %v278
    %v323 = vunpack.c.l.b16 %v279
    %v324 = vunpack.c.h.b16 %v279
    %v325 = vunpack.c.l.b16 %v280
    %v326 = vunpack.c.h.b16 %v280
    %v327 = vunpack.c.l.b16 %v281
    %v328 = vunpack.c.h.b16 %v281
    %v329 = vunpack.c.l.b16 %v282
    %v330 = vunpack.c.h.b16 %v282
    %v331 = vpack.c.b16 %v301, %v299
    %v332 = vpack.c.b16 %v302, %v300
    %v333 = vpack.c.b16 %v305, %v303
    %v334 = vpack.c.b16 %v306, %v304
    %v335 = vpack.c.b16 %v309, %v307
    %v336 = vpack.c.b16 %v310, %v308
    %v337 = vpack.c.b16 %v313, %v311
    %v338 = vpack.c.b16 %v314, %v312
    %v339 = vpack.c.b16 %v317, %v315
    %v340 = vpack.c.b16 %v318, %v316
    %v341 = vpack.c.b16 %v321, %v319
    %v342 = vpack.c.b16 %v322, %v320
    %v343 = vpack.c.b16 %v325, %v323
    %v344 = vpack.c.b16 %v326, %v324
    %v345 = vpack.c.b16 %v329, %v327
    %v346 = vpack.c.b16 %v330, %v328
    %363 = vmatprep.subr.bf16.mxu0 %v346
    %364 = vmatpush1.bf16.msra.mxu0 %v345
    %365 = vmatprep.subr.bf16.mxu0 %v344
    %366 = vmatpush1.bf16.msra.mxu0 %v343
    %367 = vmatprep.subr.bf16.mxu0 %v342
    %368 = vmatpush1.bf16.msra.mxu0 %v341
    %369 = vmatprep.subr.bf16.mxu0 %v340
    %370 = vmatpush1.bf16.msra.mxu0 %v339
    %371 = vmatprep.subr.bf16.mxu0 %v338
    %372 = vmatpush1.bf16.msra.mxu0 %v337
    %373 = vmatprep.subr.bf16.mxu0 %v336
    %374 = vmatpush1.bf16.msra.mxu0 %v335
    %375 = vmatprep.subr.bf16.mxu0 %v334
    %376 = vmatpush1.bf16.msra.mxu0 %v333
    %377 = vmatprep.subr.bf16.mxu0 %v332
    %378 = vmatpush1.bf16.msra.mxu0 %v331
    %379 = vmatprep.subr.bf16.mxu0 0
    %380 = vmatpush2.bf16.msra.mxu0 0
    %381 = vmatprep.subr.bf16.mxu0 0
    %382 = vmatpush2.bf16.msra.mxu0 0
    %383 = vmatprep.subr.bf16.mxu0 0
    %384 = vmatpush2.bf16.msra.mxu0 0
    %385 = vmatprep.subr.bf16.mxu0 0
    %386 = vmatpush2.bf16.msra.mxu0 0
    %387 = vmatprep.subr.bf16.mxu0 0
    %388 = vmatpush2.bf16.msra.mxu0 0
    %389 = vmatprep.subr.bf16.mxu0 0
    %390 = vmatpush2.bf16.msra.mxu0 0
    %391 = vmatprep.subr.bf16.mxu0 0
    %392 = vmatpush2.bf16.msra.mxu0 0
    %393 = vmatprep.subr.bf16.mxu0 0
    %394 = vmatpush2.bf16.msra.mxu0 0
    %395 = vmatprep.mubr.bf16.mxu0 0
    %396 = vmatmul.mubr.bf16.gmra.mxu0 %v266
    %v397 = vpop.f32.mrf.mxu0
    %v398 = vadd.f32 0.0, %v397
    %v399 = vpop.f32.mrf.mxu0
    %v400 = vadd.f32 0.0, %v399
    %v401 = vpop.f32.mrf.mxu0
    %v402 = vpop.f32.mrf.mxu0
    %403 = vdwg.mxu0
    %v404 = vrot.slane %v398, 4
    %v405 = vadd.f32 %v398, %v404
    %v406 = vrot.slane %v405, 2
    %v407 = vadd.f32 %v405, %v406
    %v408 = vrot.slane %v407, 1
    %v409 = vadd.f32 %v407, %v408
    %v410 = vrot.slane %v400, 4
    %v411 = vadd.f32 %v400, %v410
    %v412 = vrot.slane %v411, 2
    %v413 = vadd.f32 %v411, %v412
    %v414 = vrot.slane %v413, 1
    %v415 = vadd.f32 %v413, %v414
    %v416 = vrcp.pop 8.0
    %v417 = vmul.f32 %v409, %v416
    %v418 = vmul.f32 %v415, %v416
    %v419 = vsub.f32 %v398, %v417
    %v420 = vsub.f32 %v400, %v418
    %v421 = vmul.f32 %v419, %v419
    %v422 = vmul.f32 %v420, %v420
    %v423 = vrot.slane %v421, 4
    %v424 = vadd.f32 %v421, %v423
    %v425 = vrot.slane %v424, 2
    %v426 = vadd.f32 %v424, %v425
    %v427 = vrot.slane %v426, 1
    %v428 = vadd.f32 %v426, %v427
    %v429 = vrot.slane %v422, 4
    %v430 = vadd.f32 %v422, %v429
    %v431 = vrot.slane %v430, 2
    %v432 = vadd.f32 %v430, %v431
    %v433 = vrot.slane %v432, 1
    %v434 = vadd.f32 %v432, %v433
    %v435 = vmul.f32 %v428, %v416
    %v436 = vmul.f32 %v434, %v416
    %v437 = vld [vmem:[%s4] sm:$0x3]
    %v438 = vadd.f32 %v435, 0.8
    %v439 = vadd.f32 %v436, 0.8
    %v440 = vrsqrt.pop %v438
    %v441 = vrsqrt.pop %v439
    %v444 = vcombine.low %v440, %v441
    %v446 = vunpack.c.l.s4 1966171168
    %v447 = vunpack.c.0.s8 %v446
    %v448 = vlaneseq
    %v449 = vshrl.u32 %v448, 7
    %v450 = vsub.s32 %v447, %v449
    %v451 = vrot.slane %v444, %v450
    %v453 = vunpack.c.l.s4 1966171168
    %v454 = vunpack.c.0.s8 %v453
    %v455 = vlaneseq
    %v456 = vshrl.u32 %v455, 7
    %v457 = vsub.s32 %v454, %v456
    %v458 = vrot.slane %v451, %v457
    %v460 = vmul.f32 %v437, %v458
    %v462 = vlaneseq
    %v463 = vshrl.u32 %v462, 7
    %v464 = vsub.s32 0, %v463
    %v465 = vrot.slane %v460, %v464
    %v466 = vlaneseq
    %v467 = vshrl.u32 %v466, 7
    %v468 = vsub.s32 1, %v467
    %v469 = vrot.slane %v460, %v468
    %v472 = vmul.f32 %v419, %v465
    %v473 = vmul.f32 %v420, %v469
    %v474 = vld [vmem:[#allocation8] sm:$0x3]
    %v476 = vlaneseq
    %v477 = vshrl.u32 %v476, 7
    %v478 = vsub.s32 0, %v477
    %v479 = vrot.slane %v474, %v478
    %v480 = vlaneseq
    %v481 = vshrl.u32 %v480, 7
    %v482 = vsub.s32 1, %v481
    %v483 = vrot.slane %v474, %v482
    %v486 = vadd.f32 %v472, %v479
    %v487 = vadd.f32 %v473, %v483
    %v488 = vmul.f32 %v486, 0.2
    %v489 = vmul.f32 %v487, 0.2
    %v490 = vmax.f32 %v486, %v488
    %v491 = vmax.f32 %v487, %v489
    %v492 = vpack.c.bf16 %v490, %v490
    %v493 = vpack.c.bf16 %v491, %v491
    %v494 = vld [vmem:[#allocation10] sm:$0xff]
    %v495 = vld [vmem:[#allocation10 + $0x8] sm:$0xff]
    %v496 = vld [vmem:[#allocation10 + $0x10] sm:$0xff]
    %v497 = vld [vmem:[#allocation10 + $0x18] sm:$0xff]
    %v498 = vld [vmem:[#allocation10 + $0x20] sm:$0xff]
    %v499 = vld [vmem:[#allocation10 + $0x28] sm:$0xff]
    %v500 = vld [vmem:[#allocation10 + $0x30] sm:$0xff]
    %v501 = vld [vmem:[#allocation10 + $0x38] sm:$0xff]
    %v502 = vld [vmem:[#allocation10 + $0x40] sm:$0xff]
    %v503 = vld [vmem:[#allocation10 + $0x48] sm:$0xff]
    %v504 = vld [vmem:[#allocation10 + $0x50] sm:$0xff]
    %v505 = vld [vmem:[#allocation10 + $0x58] sm:$0xff]
    %v506 = vld [vmem:[#allocation10 + $0x60] sm:$0xff]
    %v507 = vld [vmem:[#allocation10 + $0x68] sm:$0xff]
    %v508 = vld [vmem:[#allocation10 + $0x70] sm:$0xff]
    %v509 = vld [vmem:[#allocation10 + $0x78] sm:$0xff]
    %v510 = vld [vmem:[#allocation10 + $0x80] sm:$0xff]
    %v511 = vld [vmem:[#allocation10 + $0x88] sm:$0xff]
    %v512 = vld [vmem:[#allocation10 + $0x90] sm:$0xff]
    %v513 = vld [vmem:[#allocation10 + $0x98] sm:$0xff]
    %v514 = vld [vmem:[#allocation10 + $0xa0] sm:$0xff]
    %v515 = vld [vmem:[#allocation10 + $0xa8] sm:$0xff]
    %v516 = vld [vmem:[#allocation10 + $0xb0] sm:$0xff]
    %v517 = vld [vmem:[#allocation10 + $0xb8] sm:$0xff]
    %v518 = vld [vmem:[#allocation10 + $0xc0] sm:$0xff]
    %v519 = vld [vmem:[#allocation10 + $0xc8] sm:$0xff]
    %v520 = vld [vmem:[#allocation10 + $0xd0] sm:$0xff]
    %v521 = vld [vmem:[#allocation10 + $0xd8] sm:$0xff]
    %v522 = vld [vmem:[#allocation10 + $0xe0] sm:$0xff]
    %v523 = vld [vmem:[#allocation10 + $0xe8] sm:$0xff]
    %v524 = vld [vmem:[#allocation10 + $0xf0] sm:$0xff]
    %v525 = vld [vmem:[#allocation10 + $0xf8] sm:$0xff]
    %v526 = vld [vmem:[#allocation10 + $0x100] sm:$0xff]
    %v527 = vld [vmem:[#allocation10 + $0x108] sm:$0xff]
    %v528 = vld [vmem:[#allocation10 + $0x110] sm:$0xff]
    %v529 = vld [vmem:[#allocation10 + $0x118] sm:$0xff]
    %v530 = vld [vmem:[#allocation10 + $0x120] sm:$0xff]
    %v531 = vld [vmem:[#allocation10 + $0x128] sm:$0xff]
    %v532 = vld [vmem:[#allocation10 + $0x130] sm:$0xff]
    %v533 = vld [vmem:[#allocation10 + $0x138] sm:$0xff]
    %v534 = vld [vmem:[#allocation10 + $0x140] sm:$0xff]
    %v535 = vld [vmem:[#allocation10 + $0x148] sm:$0xff]
    %v536 = vld [vmem:[#allocation10 + $0x150] sm:$0xff]
    %v537 = vld [vmem:[#allocation10 + $0x158] sm:$0xff]
    %v538 = vld [vmem:[#allocation10 + $0x160] sm:$0xff]
    %v539 = vld [vmem:[#allocation10 + $0x168] sm:$0xff]
    %v540 = vld [vmem:[#allocation10 + $0x170] sm:$0xff]
    %v541 = vld [vmem:[#allocation10 + $0x178] sm:$0xff]
    %v542 = vld [vmem:[#allocation10 + $0x180] sm:$0xff]
    %v543 = vld [vmem:[#allocation10 + $0x188] sm:$0xff]
    %v544 = vld [vmem:[#allocation10 + $0x190] sm:$0xff]
    %v545 = vld [vmem:[#allocation10 + $0x198] sm:$0xff]
    %v546 = vld [vmem:[#allocation10 + $0x1a0] sm:$0xff]
    %v547 = vld [vmem:[#allocation10 + $0x1a8] sm:$0xff]
    %v548 = vld [vmem:[#allocation10 + $0x1b0] sm:$0xff]
    %v549 = vld [vmem:[#allocation10 + $0x1b8] sm:$0xff]
    %v550 = vld [vmem:[#allocation10 + $0x1c0] sm:$0xff]
    %v551 = vld [vmem:[#allocation10 + $0x1c8] sm:$0xff]
    %v552 = vld [vmem:[#allocation10 + $0x1d0] sm:$0xff]
    %v553 = vld [vmem:[#allocation10 + $0x1d8] sm:$0xff]
    %v554 = vld [vmem:[#allocation10 + $0x1e0] sm:$0xff]
    %v555 = vld [vmem:[#allocation10 + $0x1e8] sm:$0xff]
    %v556 = vld [vmem:[#allocation10 + $0x1f0] sm:$0xff]
    %v557 = vld [vmem:[#allocation10 + $0x1f8] sm:$0xff]
    %v622 = vunpack.c.l.b16 %v494
    %v623 = vunpack.c.h.b16 %v494
    %v624 = vunpack.c.l.b16 %v495
    %v625 = vunpack.c.h.b16 %v495
    %v626 = vunpack.c.l.b16 %v496
    %v627 = vunpack.c.h.b16 %v496
    %v628 = vunpack.c.l.b16 %v497
    %v629 = vunpack.c.h.b16 %v497
    %v630 = vunpack.c.l.b16 %v498
    %v631 = vunpack.c.h.b16 %v498
    %v632 = vunpack.c.l.b16 %v499
    %v633 = vunpack.c.h.b16 %v499
    %v634 = vunpack.c.l.b16 %v500
    %v635 = vunpack.c.h.b16 %v500
    %v636 = vunpack.c.l.b16 %v501
    %v637 = vunpack.c.h.b16 %v501
    %v638 = vunpack.c.l.b16 %v502
    %v639 = vunpack.c.h.b16 %v502
    %v640 = vunpack.c.l.b16 %v503
    %v641 = vunpack.c.h.b16 %v503
    %v642 = vunpack.c.l.b16 %v504
    %v643 = vunpack.c.h.b16 %v504
    %v644 = vunpack.c.l.b16 %v505
    %v645 = vunpack.c.h.b16 %v505
    %v646 = vunpack.c.l.b16 %v506
    %v647 = vunpack.c.h.b16 %v506
    %v648 = vunpack.c.l.b16 %v507
    %v649 = vunpack.c.h.b16 %v507
    %v650 = vunpack.c.l.b16 %v508
    %v651 = vunpack.c.h.b16 %v508
    %v652 = vunpack.c.l.b16 %v509
    %v653 = vunpack.c.h.b16 %v509
    %v654 = vunpack.c.l.b16 %v510
    %v655 = vunpack.c.h.b16 %v510
    %v656 = vunpack.c.l.b16 %v511
    %v657 = vunpack.c.h.b16 %v511
    %v658 = vunpack.c.l.b16 %v512
    %v659 = vunpack.c.h.b16 %v512
    %v660 = vunpack.c.l.b16 %v513
    %v661 = vunpack.c.h.b16 %v513
    %v662 = vunpack.c.l.b16 %v514
    %v663 = vunpack.c.h.b16 %v514
    %v664 = vunpack.c.l.b16 %v515
    %v665 = vunpack.c.h.b16 %v515
    %v666 = vunpack.c.l.b16 %v516
    %v667 = vunpack.c.h.b16 %v516
    %v668 = vunpack.c.l.b16 %v517
    %v669 = vunpack.c.h.b16 %v517
    %v670 = vunpack.c.l.b16 %v518
    %v671 = vunpack.c.h.b16 %v518
    %v672 = vunpack.c.l.b16 %v519
    %v673 = vunpack.c.h.b16 %v519
    %v674 = vunpack.c.l.b16 %v520
    %v675 = vunpack.c.h.b16 %v520
    %v676 = vunpack.c.l.b16 %v521
    %v677 = vunpack.c.h.b16 %v521
    %v678 = vunpack.c.l.b16 %v522
    %v679 = vunpack.c.h.b16 %v522
    %v680 = vunpack.c.l.b16 %v523
    %v681 = vunpack.c.h.b16 %v523
    %v682 = vunpack.c.l.b16 %v524
    %v683 = vunpack.c.h.b16 %v524
    %v684 = vunpack.c.l.b16 %v525
    %v685 = vunpack.c.h.b16 %v525
    %v686 = vunpack.c.l.b16 %v526
    %v687 = vunpack.c.h.b16 %v526
    %v688 = vunpack.c.l.b16 %v527
    %v689 = vunpack.c.h.b16 %v527
    %v690 = vunpack.c.l.b16 %v528
    %v691 = vunpack.c.h.b16 %v528
    %v692 = vunpack.c.l.b16 %v529
    %v693 = vunpack.c.h.b16 %v529
    %v694 = vunpack.c.l.b16 %v530
    %v695 = vunpack.c.h.b16 %v530
    %v696 = vunpack.c.l.b16 %v531
    %v697 = vunpack.c.h.b16 %v531
    %v698 = vunpack.c.l.b16 %v532
    %v699 = vunpack.c.h.b16 %v532
    %v700 = vunpack.c.l.b16 %v533
    %v701 = vunpack.c.h.b16 %v533
    %v702 = vunpack.c.l.b16 %v534
    %v703 = vunpack.c.h.b16 %v534
    %v704 = vunpack.c.l.b16 %v535
    %v705 = vunpack.c.h.b16 %v535
    %v706 = vunpack.c.l.b16 %v536
    %v707 = vunpack.c.h.b16 %v536
    %v708 = vunpack.c.l.b16 %v537
    %v709 = vunpack.c.h.b16 %v537
    %v710 = vunpack.c.l.b16 %v538
    %v711 = vunpack.c.h.b16 %v538
    %v712 = vunpack.c.l.b16 %v539
    %v713 = vunpack.c.h.b16 %v539
    %v714 = vunpack.c.l.b16 %v540
    %v715 = vunpack.c.h.b16 %v540
    %v716 = vunpack.c.l.b16 %v541
    %v717 = vunpack.c.h.b16 %v541
    %v718 = vunpack.c.l.b16 %v542
    %v719 = vunpack.c.h.b16 %v542
    %v720 = vunpack.c.l.b16 %v543
    %v721 = vunpack.c.h.b16 %v543
    %v722 = vunpack.c.l.b16 %v544
    %v723 = vunpack.c.h.b16 %v544
    %v724 = vunpack.c.l.b16 %v545
    %v725 = vunpack.c.h.b16 %v545
    %v726 = vunpack.c.l.b16 %v546
    %v727 = vunpack.c.h.b16 %v546
    %v728 = vunpack.c.l.b16 %v547
    %v729 = vunpack.c.h.b16 %v547
    %v730 = vunpack.c.l.b16 %v548
    %v731 = vunpack.c.h.b16 %v548
    %v732 = vunpack.c.l.b16 %v549
    %v733 = vunpack.c.h.b16 %v549
    %v734 = vunpack.c.l.b16 %v550
    %v735 = vunpack.c.h.b16 %v550
    %v736 = vunpack.c.l.b16 %v551
    %v737 = vunpack.c.h.b16 %v551
    %v738 = vunpack.c.l.b16 %v552
    %v739 = vunpack.c.h.b16 %v552
    %v740 = vunpack.c.l.b16 %v553
    %v741 = vunpack.c.h.b16 %v553
    %v742 = vunpack.c.l.b16 %v554
    %v743 = vunpack.c.h.b16 %v554
    %v744 = vunpack.c.l.b16 %v555
    %v745 = vunpack.c.h.b16 %v555
    %v746 = vunpack.c.l.b16 %v556
    %v747 = vunpack.c.h.b16 %v556
    %v748 = vunpack.c.l.b16 %v557
    %v749 = vunpack.c.h.b16 %v557
    %v750 = vpack.c.b16 %v626, %v622
    %v751 = vpack.c.b16 %v627, %v623
    %v752 = vpack.c.b16 %v628, %v624
    %v753 = vpack.c.b16 %v629, %v625
    %v754 = vpack.c.b16 %v634, %v630
    %v755 = vpack.c.b16 %v635, %v631
    %v756 = vpack.c.b16 %v636, %v632
    %v757 = vpack.c.b16 %v637, %v633
    %v758 = vpack.c.b16 %v642, %v638
    %v759 = vpack.c.b16 %v643, %v639
    %v760 = vpack.c.b16 %v644, %v640
    %v761 = vpack.c.b16 %v645, %v641
    %v762 = vpack.c.b16 %v650, %v646
    %v763 = vpack.c.b16 %v651, %v647
    %v764 = vpack.c.b16 %v652, %v648
    %v765 = vpack.c.b16 %v653, %v649
    %v766 = vpack.c.b16 %v658, %v654
    %v767 = vpack.c.b16 %v659, %v655
    %v768 = vpack.c.b16 %v660, %v656
    %v769 = vpack.c.b16 %v661, %v657
    %v770 = vpack.c.b16 %v666, %v662
    %v771 = vpack.c.b16 %v667, %v663
    %v772 = vpack.c.b16 %v668, %v664
    %v773 = vpack.c.b16 %v669, %v665
    %v774 = vpack.c.b16 %v674, %v670
    %v775 = vpack.c.b16 %v675, %v671
    %v776 = vpack.c.b16 %v676, %v672
    %v777 = vpack.c.b16 %v677, %v673
    %v778 = vpack.c.b16 %v682, %v678
    %v779 = vpack.c.b16 %v683, %v679
    %v780 = vpack.c.b16 %v684, %v680
    %v781 = vpack.c.b16 %v685, %v681
    %v782 = vpack.c.b16 %v690, %v686
    %v783 = vpack.c.b16 %v691, %v687
    %v784 = vpack.c.b16 %v692, %v688
    %v785 = vpack.c.b16 %v693, %v689
    %v786 = vpack.c.b16 %v698, %v694
    %v787 = vpack.c.b16 %v699, %v695
    %v788 = vpack.c.b16 %v700, %v696
    %v789 = vpack.c.b16 %v701, %v697
    %v790 = vpack.c.b16 %v706, %v702
    %v791 = vpack.c.b16 %v707, %v703
    %v792 = vpack.c.b16 %v708, %v704
    %v793 = vpack.c.b16 %v709, %v705
    %v794 = vpack.c.b16 %v714, %v710
    %v795 = vpack.c.b16 %v715, %v711
    %v796 = vpack.c.b16 %v716, %v712
    %v797 = vpack.c.b16 %v717, %v713
    %v798 = vpack.c.b16 %v722, %v718
    %v799 = vpack.c.b16 %v723, %v719
    %v800 = vpack.c.b16 %v724, %v720
    %v801 = vpack.c.b16 %v725, %v721
    %v802 = vpack.c.b16 %v730, %v726
    %v803 = vpack.c.b16 %v731, %v727
    %v804 = vpack.c.b16 %v732, %v728
    %v805 = vpack.c.b16 %v733, %v729
    %v806 = vpack.c.b16 %v738, %v734
    %v807 = vpack.c.b16 %v739, %v735
    %v808 = vpack.c.b16 %v740, %v736
    %v809 = vpack.c.b16 %v741, %v737
    %v810 = vpack.c.b16 %v746, %v742
    %v811 = vpack.c.b16 %v747, %v743
    %v812 = vpack.c.b16 %v748, %v744
    %v813 = vpack.c.b16 %v749, %v745
    %878 = vmatprep.subr.bf16.mxu0 %v779
    %879 = vmatpush1.bf16.msra.mxu0 %v778
    %880 = vmatprep.subr.bf16.mxu0 %v775
    %881 = vmatpush1.bf16.msra.mxu0 %v774
    %882 = vmatprep.subr.bf16.mxu0 %v771
    %883 = vmatpush1.bf16.msra.mxu0 %v770
    %884 = vmatprep.subr.bf16.mxu0 %v767
    %885 = vmatpush1.bf16.msra.mxu0 %v766
    %886 = vmatprep.subr.bf16.mxu0 %v763
    %887 = vmatpush1.bf16.msra.mxu0 %v762
    %888 = vmatprep.subr.bf16.mxu0 %v759
    %889 = vmatpush1.bf16.msra.mxu0 %v758
    %890 = vmatprep.subr.bf16.mxu0 %v755
    %891 = vmatpush1.bf16.msra.mxu0 %v754
    %892 = vmatprep.subr.bf16.mxu0 %v751
    %893 = vmatpush1.bf16.msra.mxu0 %v750
    %894 = vmatprep.subr.bf16.mxu0 %v811
    %895 = vmatpush2.bf16.msra.mxu0 %v810
    %896 = vmatprep.subr.bf16.mxu0 %v807
    %897 = vmatpush2.bf16.msra.mxu0 %v806
    %898 = vmatprep.subr.bf16.mxu0 %v803
    %899 = vmatpush2.bf16.msra.mxu0 %v802
    %900 = vmatprep.subr.bf16.mxu0 %v799
    %901 = vmatpush2.bf16.msra.mxu0 %v798
    %902 = vmatprep.subr.bf16.mxu0 %v795
    %903 = vmatpush2.bf16.msra.mxu0 %v794
    %904 = vmatprep.subr.bf16.mxu0 %v791
    %905 = vmatpush2.bf16.msra.mxu0 %v790
    %906 = vmatprep.subr.bf16.mxu0 %v787
    %907 = vmatpush2.bf16.msra.mxu0 %v786
    %908 = vmatprep.subr.bf16.mxu0 %v783
    %909 = vmatpush2.bf16.msra.mxu0 %v782
    %910 = vmatprep.mubr.bf16.mxu0 %v493
    %911 = vmatmul.mubr.bf16.gmra.mxu0 %v492
    %v912 = vpop.f32.mrf.mxu0
    %v913 = vadd.f32 0.0, %v912
    %v914 = vpop.f32.mrf.mxu0
    %v915 = vadd.f32 0.0, %v914
    %v916 = vpop.f32.mrf.mxu0
    %v917 = vpop.f32.mrf.mxu0
    %918 = vdwg.mxu0
    %919 = vmatprep.subr.bf16.mxu0 %v781
    %920 = vmatpush1.bf16.msra.mxu0 %v780
    %921 = vmatprep.subr.bf16.mxu0 %v777
    %922 = vmatpush1.bf16.msra.mxu0 %v776
    %923 = vmatprep.subr.bf16.mxu0 %v773
    %924 = vmatpush1.bf16.msra.mxu0 %v772
    %925 = vmatprep.subr.bf16.mxu0 %v769
    %926 = vmatpush1.bf16.msra.mxu0 %v768
    %927 = vmatprep.subr.bf16.mxu0 %v765
    %928 = vmatpush1.bf16.msra.mxu0 %v764
    %929 = vmatprep.subr.bf16.mxu0 %v761
    %930 = vmatpush1.bf16.msra.mxu0 %v760
    %931 = vmatprep.subr.bf16.mxu0 %v757
    %932 = vmatpush1.bf16.msra.mxu0 %v756
    %933 = vmatprep.subr.bf16.mxu0 %v753
    %934 = vmatpush1.bf16.msra.mxu0 %v752
    %935 = vmatprep.subr.bf16.mxu0 %v813
    %936 = vmatpush2.bf16.msra.mxu0 %v812
    %937 = vmatprep.subr.bf16.mxu0 %v809
    %938 = vmatpush2.bf16.msra.mxu0 %v808
    %939 = vmatprep.subr.bf16.mxu0 %v805
    %940 = vmatpush2.bf16.msra.mxu0 %v804
    %941 = vmatprep.subr.bf16.mxu0 %v801
    %942 = vmatpush2.bf16.msra.mxu0 %v800
    %943 = vmatprep.subr.bf16.mxu0 %v797
    %944 = vmatpush2.bf16.msra.mxu0 %v796
    %945 = vmatprep.subr.bf16.mxu0 %v793
    %946 = vmatpush2.bf16.msra.mxu0 %v792
    %947 = vmatprep.subr.bf16.mxu0 %v789
    %948 = vmatpush2.bf16.msra.mxu0 %v788
    %949 = vmatprep.subr.bf16.mxu0 %v785
    %950 = vmatpush2.bf16.msra.mxu0 %v784
    %951 = vmatprep.mubr.bf16.mxu0 %v493
    %952 = vmatmul.mubr.bf16.gmra.mxu0 %v492
    %v953 = vpop.f32.mrf.mxu0
    %v954 = vadd.f32 0.0, %v953
    %v955 = vpop.f32.mrf.mxu0
    %v956 = vadd.f32 0.0, %v955
    %v957 = vpop.f32.mrf.mxu0
    %v958 = vpop.f32.mrf.mxu0
    %959 = vdwg.mxu0
    %v960 = vrot.slane %v913, 4
    %v961 = vadd.f32 %v913, %v960
    %v962 = vrot.slane %v961, 2
    %v963 = vadd.f32 %v961, %v962
    %v964 = vrot.slane %v963, 1
    %v965 = vadd.f32 %v963, %v964
    %v966 = vrot.slane %v915, 4
    %v967 = vadd.f32 %v915, %v966
    %v968 = vrot.slane %v967, 2
    %v969 = vadd.f32 %v967, %v968
    %v970 = vrot.slane %v969, 1
    %v971 = vadd.f32 %v969, %v970
    %v972 = vrot.slane %v954, 4
    %v973 = vadd.f32 %v954, %v972
    %v974 = vrot.slane %v973, 2
    %v975 = vadd.f32 %v973, %v974
    %v976 = vrot.slane %v975, 1
    %v977 = vadd.f32 %v975, %v976
    %v978 = vrot.slane %v956, 4
    %v979 = vadd.f32 %v956, %v978
    %v980 = vrot.slane %v979, 2
    %v981 = vadd.f32 %v979, %v980
    %v982 = vrot.slane %v981, 1
    %v983 = vadd.f32 %v981, %v982
    %v984 = vmul.f32 %v965, %v416
    %v985 = vmul.f32 %v971, %v416
    %v986 = vmul.f32 %v977, %v416
    %v987 = vmul.f32 %v983, %v416
    %v988 = vsub.f32 %v913, %v984
    %v989 = vsub.f32 %v915, %v985
    %v990 = vsub.f32 %v954, %v986
    %v991 = vsub.f32 %v956, %v987
    %v992 = vmul.f32 %v988, %v988
    %v993 = vmul.f32 %v989, %v989
    %v994 = vmul.f32 %v990, %v990
    %v995 = vmul.f32 %v991, %v991
    %v996 = vrot.slane %v992, 4
    %v997 = vadd.f32 %v992, %v996
    %v998 = vrot.slane %v997, 2
    %v999 = vadd.f32 %v997, %v998
    %v1000 = vrot.slane %v999, 1
    %v1001 = vadd.f32 %v999, %v1000
    %v1002 = vrot.slane %v993, 4
    %v1003 = vadd.f32 %v993, %v1002
    %v1004 = vrot.slane %v1003, 2
    %v1005 = vadd.f32 %v1003, %v1004
    %v1006 = vrot.slane %v1005, 1
    %v1007 = vadd.f32 %v1005, %v1006
    %v1008 = vrot.slane %v994, 4
    %v1009 = vadd.f32 %v994, %v1008
    %v1010 = vrot.slane %v1009, 2
    %v1011 = vadd.f32 %v1009, %v1010
    %v1012 = vrot.slane %v1011, 1
    %v1013 = vadd.f32 %v1011, %v1012
    %v1014 = vrot.slane %v995, 4
    %v1015 = vadd.f32 %v995, %v1014
    %v1016 = vrot.slane %v1015, 2
    %v1017 = vadd.f32 %v1015, %v1016
    %v1018 = vrot.slane %v1017, 1
    %v1019 = vadd.f32 %v1017, %v1018
    %v1020 = vmul.f32 %v1001, %v416
    %v1021 = vmul.f32 %v1007, %v416
    %v1022 = vmul.f32 %v1013, %v416
    %v1023 = vmul.f32 %v1019, %v416
    %v1024 = vld [vmem:[%s7] sm:$0xf]
    %v1025 = vadd.f32 %v1020, 0.8
    %v1026 = vadd.f32 %v1021, 0.8
    %v1027 = vadd.f32 %v1022, 0.8
    %v1028 = vadd.f32 %v1023, 0.8
    %v1029 = vrsqrt.pop %v1025
    %v1030 = vrsqrt.pop %v1026
    %v1031 = vrsqrt.pop %v1027
    %v1032 = vrsqrt.pop %v1028
    %v1037 = vcombine.low %v1029, %v1030
    %v1038 = vcombine.low %v1031, %v1032
    %v1040 = vunpack.c.l.s4 1966171168
    %v1041 = vunpack.c.0.s8 %v1040
    %v1042 = vlaneseq
    %v1043 = vshrl.u32 %v1042, 7
    %v1044 = vsub.s32 %v1041, %v1043
    %v1045 = vrot.slane %v1037, %v1044
    %v1047 = vunpack.c.l.s4 1966171168
    %v1048 = vunpack.c.0.s8 %v1047
    %v1049 = vlaneseq
    %v1050 = vshrl.u32 %v1049, 7
    %v1051 = vsub.s32 %v1048, %v1050
    %v1052 = vrot.slane %v1038, %v1051
    %v1053 = vcombine.low %v1045, %v1052
    %v1055 = vunpack.c.l.s4 1966171168
    %v1056 = vunpack.c.0.s8 %v1055
    %v1057 = vlaneseq
    %v1058 = vshrl.u32 %v1057, 7
    %v1059 = vsub.s32 %v1056, %v1058
    %v1060 = vrot.slane %v1053, %v1059
    %v1062 = vmul.f32 %v1024, %v1060
    %v1064 = vlaneseq
    %v1065 = vshrl.u32 %v1064, 7
    %v1066 = vsub.s32 0, %v1065
    %v1067 = vrot.slane %v1062, %v1066
    %v1068 = vlaneseq
    %v1069 = vshrl.u32 %v1068, 7
    %v1070 = vsub.s32 1, %v1069
    %v1071 = vrot.slane %v1062, %v1070
    %v1072 = vlaneseq
    %v1073 = vshrl.u32 %v1072, 7
    %v1074 = vsub.s32 2, %v1073
    %v1075 = vrot.slane %v1062, %v1074
    %v1076 = vlaneseq
    %v1077 = vshrl.u32 %v1076, 7
    %v1078 = vsub.s32 3, %v1077
    %v1079 = vrot.slane %v1062, %v1078
    %v1084 = vmul.f32 %v988, %v1067
    %v1085 = vmul.f32 %v989, %v1071
    %v1086 = vmul.f32 %v990, %v1075
    %v1087 = vmul.f32 %v991, %v1079
    %v1088 = vld [vmem:[%s8] sm:$0xf]
    %v1090 = vlaneseq
    %v1091 = vshrl.u32 %v1090, 7
    %v1092 = vsub.s32 0, %v1091
    %v1093 = vrot.slane %v1088, %v1092
    %v1094 = vlaneseq
    %v1095 = vshrl.u32 %v1094, 7
    %v1096 = vsub.s32 1, %v1095
    %v1097 = vrot.slane %v1088, %v1096
    %v1098 = vlaneseq
    %v1099 = vshrl.u32 %v1098, 7
    %v1100 = vsub.s32 2, %v1099
    %v1101 = vrot.slane %v1088, %v1100
    %v1102 = vlaneseq
    %v1103 = vshrl.u32 %v1102, 7
    %v1104 = vsub.s32 3, %v1103
    %v1105 = vrot.slane %v1088, %v1104
    %v1110 = vadd.f32 %v1084, %v1093
    %v1111 = vadd.f32 %v1085, %v1097
    %v1112 = vadd.f32 %v1086, %v1101
    %v1113 = vadd.f32 %v1087, %v1105
    %v1114 = vmul.f32 %v1110, 0.2
    %v1115 = vmul.f32 %v1111, 0.2
    %v1116 = vmul.f32 %v1112, 0.2
    %v1117 = vmul.f32 %v1113, 0.2
    %v1118 = vmax.f32 %v1110, %v1114
    %v1119 = vmax.f32 %v1111, %v1115
    %v1120 = vmax.f32 %v1112, %v1116
    %v1121 = vmax.f32 %v1113, %v1117
    %v1122 = vpack.c.bf16 %v1118, %v1118
    %v1123 = vpack.c.bf16 %v1119, %v1119
    %v1124 = vpack.c.bf16 %v1120, %v1120
    %v1125 = vpack.c.bf16 %v1121, %v1121
    %v1126 = vld [vmem:[#allocation11] sm:$0xff]
    %v1127 = vld [vmem:[#allocation11 + $0x8] sm:$0xff]
    %v1128 = vld [vmem:[#allocation11 + $0x10] sm:$0xff]
    %v1129 = vld [vmem:[#allocation11 + $0x18] sm:$0xff]
    %v1130 = vld [vmem:[#allocation11 + $0x20] sm:$0xff]
    %v1131 = vld [vmem:[#allocation11 + $0x28] sm:$0xff]
    %v1132 = vld [vmem:[#allocation11 + $0x30] sm:$0xff]
    %v1133 = vld [vmem:[#allocation11 + $0x38] sm:$0xff]
    %v1134 = vld [vmem:[#allocation11 + $0x40] sm:$0xff]
    %v1135 = vld [vmem:[#allocation11 + $0x48] sm:$0xff]
    %v1136 = vld [vmem:[#allocation11 + $0x50] sm:$0xff]
    %v1137 = vld [vmem:[#allocation11 + $0x58] sm:$0xff]
    %v1138 = vld [vmem:[#allocation11 + $0x60] sm:$0xff]
    %v1139 = vld [vmem:[#allocation11 + $0x68] sm:$0xff]
    %v1140 = vld [vmem:[#allocation11 + $0x70] sm:$0xff]
    %v1141 = vld [vmem:[#allocation11 + $0x78] sm:$0xff]
    %v1142 = vld [vmem:[#allocation11 + $0x80] sm:$0xff]
    %v1143 = vld [vmem:[#allocation11 + $0x88] sm:$0xff]
    %v1144 = vld [vmem:[#allocation11 + $0x90] sm:$0xff]
    %v1145 = vld [vmem:[#allocation11 + $0x98] sm:$0xff]
    %v1146 = vld [vmem:[#allocation11 + $0xa0] sm:$0xff]
    %v1147 = vld [vmem:[#allocation11 + $0xa8] sm:$0xff]
    %v1148 = vld [vmem:[#allocation11 + $0xb0] sm:$0xff]
    %v1149 = vld [vmem:[#allocation11 + $0xb8] sm:$0xff]
    %v1150 = vld [vmem:[#allocation11 + $0xc0] sm:$0xff]
    %v1151 = vld [vmem:[#allocation11 + $0xc8] sm:$0xff]
    %v1152 = vld [vmem:[#allocation11 + $0xd0] sm:$0xff]
    %v1153 = vld [vmem:[#allocation11 + $0xd8] sm:$0xff]
    %v1154 = vld [vmem:[#allocation11 + $0xe0] sm:$0xff]
    %v1155 = vld [vmem:[#allocation11 + $0xe8] sm:$0xff]
    %v1156 = vld [vmem:[#allocation11 + $0xf0] sm:$0xff]
    %v1157 = vld [vmem:[#allocation11 + $0xf8] sm:$0xff]
    %v1158 = vld [vmem:[#allocation11 + $0x100] sm:$0xff]
    %v1159 = vld [vmem:[#allocation11 + $0x108] sm:$0xff]
    %v1160 = vld [vmem:[#allocation11 + $0x110] sm:$0xff]
    %v1161 = vld [vmem:[#allocation11 + $0x118] sm:$0xff]
    %v1162 = vld [vmem:[#allocation11 + $0x120] sm:$0xff]
    %v1163 = vld [vmem:[#allocation11 + $0x128] sm:$0xff]
    %v1164 = vld [vmem:[#allocation11 + $0x130] sm:$0xff]
    %v1165 = vld [vmem:[#allocation11 + $0x138] sm:$0xff]
    %v1166 = vld [vmem:[#allocation11 + $0x140] sm:$0xff]
    %v1167 = vld [vmem:[#allocation11 + $0x148] sm:$0xff]
    %v1168 = vld [vmem:[#allocation11 + $0x150] sm:$0xff]
    %v1169 = vld [vmem:[#allocation11 + $0x158] sm:$0xff]
    %v1170 = vld [vmem:[#allocation11 + $0x160] sm:$0xff]
    %v1171 = vld [vmem:[#allocation11 + $0x168] sm:$0xff]
    %v1172 = vld [vmem:[#allocation11 + $0x170] sm:$0xff]
    %v1173 = vld [vmem:[#allocation11 + $0x178] sm:$0xff]
    %v1174 = vld [vmem:[#allocation11 + $0x180] sm:$0xff]
    %v1175 = vld [vmem:[#allocation11 + $0x188] sm:$0xff]
    %v1176 = vld [vmem:[#allocation11 + $0x190] sm:$0xff]
    %v1177 = vld [vmem:[#allocation11 + $0x198] sm:$0xff]
    %v1178 = vld [vmem:[#allocation11 + $0x1a0] sm:$0xff]
    %v1179 = vld [vmem:[#allocation11 + $0x1a8] sm:$0xff]
    %v1180 = vld [vmem:[#allocation11 + $0x1b0] sm:$0xff]
    %v1181 = vld [vmem:[#allocation11 + $0x1b8] sm:$0xff]
    %v1182 = vld [vmem:[#allocation11 + $0x1c0] sm:$0xff]
    %v1183 = vld [vmem:[#allocation11 + $0x1c8] sm:$0xff]
    %v1184 = vld [vmem:[#allocation11 + $0x1d0] sm:$0xff]
    %v1185 = vld [vmem:[#allocation11 + $0x1d8] sm:$0xff]
    %v1186 = vld [vmem:[#allocation11 + $0x1e0] sm:$0xff]
    %v1187 = vld [vmem:[#allocation11 + $0x1e8] sm:$0xff]
    %v1188 = vld [vmem:[#allocation11 + $0x1f0] sm:$0xff]
    %v1189 = vld [vmem:[#allocation11 + $0x1f8] sm:$0xff]
    %v1190 = vld [vmem:[#allocation11 + $0x200] sm:$0xff]
    %v1191 = vld [vmem:[#allocation11 + $0x208] sm:$0xff]
    %v1192 = vld [vmem:[#allocation11 + $0x210] sm:$0xff]
    %v1193 = vld [vmem:[#allocation11 + $0x218] sm:$0xff]
    %v1194 = vld [vmem:[#allocation11 + $0x220] sm:$0xff]
    %v1195 = vld [vmem:[#allocation11 + $0x228] sm:$0xff]
    %v1196 = vld [vmem:[#allocation11 + $0x230] sm:$0xff]
    %v1197 = vld [vmem:[#allocation11 + $0x238] sm:$0xff]
    %v1198 = vld [vmem:[#allocation11 + $0x240] sm:$0xff]
    %v1199 = vld [vmem:[#allocation11 + $0x248] sm:$0xff]
    %v1200 = vld [vmem:[#allocation11 + $0x250] sm:$0xff]
    %v1201 = vld [vmem:[#allocation11 + $0x258] sm:$0xff]
    %v1202 = vld [vmem:[#allocation11 + $0x260] sm:$0xff]
    %v1203 = vld [vmem:[#allocation11 + $0x268] sm:$0xff]
    %v1204 = vld [vmem:[#allocation11 + $0x270] sm:$0xff]
    %v1205 = vld [vmem:[#allocation11 + $0x278] sm:$0xff]
    %v1206 = vld [vmem:[#allocation11 + $0x280] sm:$0xff]
    %v1207 = vld [vmem:[#allocation11 + $0x288] sm:$0xff]
    %v1208 = vld [vmem:[#allocation11 + $0x290] sm:$0xff]
    %v1209 = vld [vmem:[#allocation11 + $0x298] sm:$0xff]
    %v1210 = vld [vmem:[#allocation11 + $0x2a0] sm:$0xff]
    %v1211 = vld [vmem:[#allocation11 + $0x2a8] sm:$0xff]
    %v1212 = vld [vmem:[#allocation11 + $0x2b0] sm:$0xff]
    %v1213 = vld [vmem:[#allocation11 + $0x2b8] sm:$0xff]
    %v1214 = vld [vmem:[#allocation11 + $0x2c0] sm:$0xff]
    %v1215 = vld [vmem:[#allocation11 + $0x2c8] sm:$0xff]
    %v1216 = vld [vmem:[#allocation11 + $0x2d0] sm:$0xff]
    %v1217 = vld [vmem:[#allocation11 + $0x2d8] sm:$0xff]
    %v1218 = vld [vmem:[#allocation11 + $0x2e0] sm:$0xff]
    %v1219 = vld [vmem:[#allocation11 + $0x2e8] sm:$0xff]
    %v1220 = vld [vmem:[#allocation11 + $0x2f0] sm:$0xff]
    %v1221 = vld [vmem:[#allocation11 + $0x2f8] sm:$0xff]
    %v1222 = vld [vmem:[#allocation11 + $0x300] sm:$0xff]
    %v1223 = vld [vmem:[#allocation11 + $0x308] sm:$0xff]
    %v1224 = vld [vmem:[#allocation11 + $0x310] sm:$0xff]
    %v1225 = vld [vmem:[#allocation11 + $0x318] sm:$0xff]
    %v1226 = vld [vmem:[#allocation11 + $0x320] sm:$0xff]
    %v1227 = vld [vmem:[#allocation11 + $0x328] sm:$0xff]
    %v1228 = vld [vmem:[#allocation11 + $0x330] sm:$0xff]
    %v1229 = vld [vmem:[#allocation11 + $0x338] sm:$0xff]
    %v1230 = vld [vmem:[#allocation11 + $0x340] sm:$0xff]
    %v1231 = vld [vmem:[#allocation11 + $0x348] sm:$0xff]
    %v1232 = vld [vmem:[#allocation11 + $0x350] sm:$0xff]
    %v1233 = vld [vmem:[#allocation11 + $0x358] sm:$0xff]
    %v1234 = vld [vmem:[#allocation11 + $0x360] sm:$0xff]
    %v1235 = vld [vmem:[#allocation11 + $0x368] sm:$0xff]
    %v1236 = vld [vmem:[#allocation11 + $0x370] sm:$0xff]
    %v1237 = vld [vmem:[#allocation11 + $0x378] sm:$0xff]
    %v1238 = vld [vmem:[#allocation11 + $0x380] sm:$0xff]
    %v1239 = vld [vmem:[#allocation11 + $0x388] sm:$0xff]
    %v1240 = vld [vmem:[#allocation11 + $0x390] sm:$0xff]
    %v1241 = vld [vmem:[#allocation11 + $0x398] sm:$0xff]
    %v1242 = vld [vmem:[#allocation11 + $0x3a0] sm:$0xff]
    %v1243 = vld [vmem:[#allocation11 + $0x3a8] sm:$0xff]
    %v1244 = vld [vmem:[#allocation11 + $0x3b0] sm:$0xff]
    %v1245 = vld [vmem:[#allocation11 + $0x3b8] sm:$0xff]
    %v1246 = vld [vmem:[#allocation11 + $0x3c0] sm:$0xff]
    %v1247 = vld [vmem:[#allocation11 + $0x3c8] sm:$0xff]
    %v1248 = vld [vmem:[#allocation11 + $0x3d0] sm:$0xff]
    %v1249 = vld [vmem:[#allocation11 + $0x3d8] sm:$0xff]
    %v1250 = vld [vmem:[#allocation11 + $0x3e0] sm:$0xff]
    %v1251 = vld [vmem:[#allocation11 + $0x3e8] sm:$0xff]
    %v1252 = vld [vmem:[#allocation11 + $0x3f0] sm:$0xff]
    %v1253 = vld [vmem:[#allocation11 + $0x3f8] sm:$0xff]
    %v1254 = vld [vmem:[#allocation11 + $0x400] sm:$0xff]
    %v1255 = vld [vmem:[#allocation11 + $0x408] sm:$0xff]
    %v1256 = vld [vmem:[#allocation11 + $0x410] sm:$0xff]
    %v1257 = vld [vmem:[#allocation11 + $0x418] sm:$0xff]
    %v1258 = vld [vmem:[#allocation11 + $0x420] sm:$0xff]
    %v1259 = vld [vmem:[#allocation11 + $0x428] sm:$0xff]
    %v1260 = vld [vmem:[#allocation11 + $0x430] sm:$0xff]
    %v1261 = vld [vmem:[#allocation11 + $0x438] sm:$0xff]
    %v1262 = vld [vmem:[#allocation11 + $0x440] sm:$0xff]
    %v1263 = vld [vmem:[#allocation11 + $0x448] sm:$0xff]
    %v1264 = vld [vmem:[#allocation11 + $0x450] sm:$0xff]
    %v1265 = vld [vmem:[#allocation11 + $0x458] sm:$0xff]
    %v1266 = vld [vmem:[#allocation11 + $0x460] sm:$0xff]
    %v1267 = vld [vmem:[#allocation11 + $0x468] sm:$0xff]
    %v1268 = vld [vmem:[#allocation11 + $0x470] sm:$0xff]
    %v1269 = vld [vmem:[#allocation11 + $0x478] sm:$0xff]
    %v1270 = vld [vmem:[#allocation11 + $0x480] sm:$0xff]
    %v1271 = vld [vmem:[#allocation11 + $0x488] sm:$0xff]
    %v1272 = vld [vmem:[#allocation11 + $0x490] sm:$0xff]
    %v1273 = vld [vmem:[#allocation11 + $0x498] sm:$0xff]
    %v1274 = vld [vmem:[#allocation11 + $0x4a0] sm:$0xff]
    %v1275 = vld [vmem:[#allocation11 + $0x4a8] sm:$0xff]
    %v1276 = vld [vmem:[#allocation11 + $0x4b0] sm:$0xff]
    %v1277 = vld [vmem:[#allocation11 + $0x4b8] sm:$0xff]
    %v1278 = vld [vmem:[#allocation11 + $0x4c0] sm:$0xff]
    %v1279 = vld [vmem:[#allocation11 + $0x4c8] sm:$0xff]
    %v1280 = vld [vmem:[#allocation11 + $0x4d0] sm:$0xff]
    %v1281 = vld [vmem:[#allocation11 + $0x4d8] sm:$0xff]
    %v1282 = vld [vmem:[#allocation11 + $0x4e0] sm:$0xff]
    %v1283 = vld [vmem:[#allocation11 + $0x4e8] sm:$0xff]
    %v1284 = vld [vmem:[#allocation11 + $0x4f0] sm:$0xff]
    %v1285 = vld [vmem:[#allocation11 + $0x4f8] sm:$0xff]
    %v1286 = vld [vmem:[#allocation11 + $0x500] sm:$0xff]
    %v1287 = vld [vmem:[#allocation11 + $0x508] sm:$0xff]
    %v1288 = vld [vmem:[#allocation11 + $0x510] sm:$0xff]
    %v1289 = vld [vmem:[#allocation11 + $0x518] sm:$0xff]
    %v1290 = vld [vmem:[#allocation11 + $0x520] sm:$0xff]
    %v1291 = vld [vmem:[#allocation11 + $0x528] sm:$0xff]
    %v1292 = vld [vmem:[#allocation11 + $0x530] sm:$0xff]
    %v1293 = vld [vmem:[#allocation11 + $0x538] sm:$0xff]
    %v1294 = vld [vmem:[#allocation11 + $0x540] sm:$0xff]
    %v1295 = vld [vmem:[#allocation11 + $0x548] sm:$0xff]
    %v1296 = vld [vmem:[#allocation11 + $0x550] sm:$0xff]
    %v1297 = vld [vmem:[#allocation11 + $0x558] sm:$0xff]
    %v1298 = vld [vmem:[#allocation11 + $0x560] sm:$0xff]
    %v1299 = vld [vmem:[#allocation11 + $0x568] sm:$0xff]
    %v1300 = vld [vmem:[#allocation11 + $0x570] sm:$0xff]
    %v1301 = vld [vmem:[#allocation11 + $0x578] sm:$0xff]
    %v1302 = vld [vmem:[#allocation11 + $0x580] sm:$0xff]
    %v1303 = vld [vmem:[#allocation11 + $0x588] sm:$0xff]
    %v1304 = vld [vmem:[#allocation11 + $0x590] sm:$0xff]
    %v1305 = vld [vmem:[#allocation11 + $0x598] sm:$0xff]
    %v1306 = vld [vmem:[#allocation11 + $0x5a0] sm:$0xff]
    %v1307 = vld [vmem:[#allocation11 + $0x5a8] sm:$0xff]
    %v1308 = vld [vmem:[#allocation11 + $0x5b0] sm:$0xff]
    %v1309 = vld [vmem:[#allocation11 + $0x5b8] sm:$0xff]
    %v1310 = vld [vmem:[#allocation11 + $0x5c0] sm:$0xff]
    %v1311 = vld [vmem:[#allocation11 + $0x5c8] sm:$0xff]
    %v1312 = vld [vmem:[#allocation11 + $0x5d0] sm:$0xff]
    %v1313 = vld [vmem:[#allocation11 + $0x5d8] sm:$0xff]
    %v1314 = vld [vmem:[#allocation11 + $0x5e0] sm:$0xff]
    %v1315 = vld [vmem:[#allocation11 + $0x5e8] sm:$0xff]
    %v1316 = vld [vmem:[#allocation11 + $0x5f0] sm:$0xff]
    %v1317 = vld [vmem:[#allocation11 + $0x5f8] sm:$0xff]
    %v1318 = vld [vmem:[#allocation11 + $0x600] sm:$0xff]
    %v1319 = vld [vmem:[#allocation11 + $0x608] sm:$0xff]
    %v1320 = vld [vmem:[#allocation11 + $0x610] sm:$0xff]
    %v1321 = vld [vmem:[#allocation11 + $0x618] sm:$0xff]
    %v1322 = vld [vmem:[#allocation11 + $0x620] sm:$0xff]
    %v1323 = vld [vmem:[#allocation11 + $0x628] sm:$0xff]
    %v1324 = vld [vmem:[#allocation11 + $0x630] sm:$0xff]
    %v1325 = vld [vmem:[#allocation11 + $0x638] sm:$0xff]
    %v1326 = vld [vmem:[#allocation11 + $0x640] sm:$0xff]
    %v1327 = vld [vmem:[#allocation11 + $0x648] sm:$0xff]
    %v1328 = vld [vmem:[#allocation11 + $0x650] sm:$0xff]
    %v1329 = vld [vmem:[#allocation11 + $0x658] sm:$0xff]
    %v1330 = vld [vmem:[#allocation11 + $0x660] sm:$0xff]
    %v1331 = vld [vmem:[#allocation11 + $0x668] sm:$0xff]
    %v1332 = vld [vmem:[#allocation11 + $0x670] sm:$0xff]
    %v1333 = vld [vmem:[#allocation11 + $0x678] sm:$0xff]
    %v1334 = vld [vmem:[#allocation11 + $0x680] sm:$0xff]
    %v1335 = vld [vmem:[#allocation11 + $0x688] sm:$0xff]
    %v1336 = vld [vmem:[#allocation11 + $0x690] sm:$0xff]
    %v1337 = vld [vmem:[#allocation11 + $0x698] sm:$0xff]
    %v1338 = vld [vmem:[#allocation11 + $0x6a0] sm:$0xff]
    %v1339 = vld [vmem:[#allocation11 + $0x6a8] sm:$0xff]
    %v1340 = vld [vmem:[#allocation11 + $0x6b0] sm:$0xff]
    %v1341 = vld [vmem:[#allocation11 + $0x6b8] sm:$0xff]
    %v1342 = vld [vmem:[#allocation11 + $0x6c0] sm:$0xff]
    %v1343 = vld [vmem:[#allocation11 + $0x6c8] sm:$0xff]
    %v1344 = vld [vmem:[#allocation11 + $0x6d0] sm:$0xff]
    %v1345 = vld [vmem:[#allocation11 + $0x6d8] sm:$0xff]
    %v1346 = vld [vmem:[#allocation11 + $0x6e0] sm:$0xff]
    %v1347 = vld [vmem:[#allocation11 + $0x6e8] sm:$0xff]
    %v1348 = vld [vmem:[#allocation11 + $0x6f0] sm:$0xff]
    %v1349 = vld [vmem:[#allocation11 + $0x6f8] sm:$0xff]
    %v1350 = vld [vmem:[#allocation11 + $0x700] sm:$0xff]
    %v1351 = vld [vmem:[#allocation11 + $0x708] sm:$0xff]
    %v1352 = vld [vmem:[#allocation11 + $0x710] sm:$0xff]
    %v1353 = vld [vmem:[#allocation11 + $0x718] sm:$0xff]
    %v1354 = vld [vmem:[#allocation11 + $0x720] sm:$0xff]
    %v1355 = vld [vmem:[#allocation11 + $0x728] sm:$0xff]
    %v1356 = vld [vmem:[#allocation11 + $0x730] sm:$0xff]
    %v1357 = vld [vmem:[#allocation11 + $0x738] sm:$0xff]
    %v1358 = vld [vmem:[#allocation11 + $0x740] sm:$0xff]
    %v1359 = vld [vmem:[#allocation11 + $0x748] sm:$0xff]
    %v1360 = vld [vmem:[#allocation11 + $0x750] sm:$0xff]
    %v1361 = vld [vmem:[#allocation11 + $0x758] sm:$0xff]
    %v1362 = vld [vmem:[#allocation11 + $0x760] sm:$0xff]
    %v1363 = vld [vmem:[#allocation11 + $0x768] sm:$0xff]
    %v1364 = vld [vmem:[#allocation11 + $0x770] sm:$0xff]
    %v1365 = vld [vmem:[#allocation11 + $0x778] sm:$0xff]
    %v1366 = vld [vmem:[#allocation11 + $0x780] sm:$0xff]
    %v1367 = vld [vmem:[#allocation11 + $0x788] sm:$0xff]
    %v1368 = vld [vmem:[#allocation11 + $0x790] sm:$0xff]
    %v1369 = vld [vmem:[#allocation11 + $0x798] sm:$0xff]
    %v1370 = vld [vmem:[#allocation11 + $0x7a0] sm:$0xff]
    %v1371 = vld [vmem:[#allocation11 + $0x7a8] sm:$0xff]
    %v1372 = vld [vmem:[#allocation11 + $0x7b0] sm:$0xff]
    %v1373 = vld [vmem:[#allocation11 + $0x7b8] sm:$0xff]
    %v1374 = vld [vmem:[#allocation11 + $0x7c0] sm:$0xff]
    %v1375 = vld [vmem:[#allocation11 + $0x7c8] sm:$0xff]
    %v1376 = vld [vmem:[#allocation11 + $0x7d0] sm:$0xff]
    %v1377 = vld [vmem:[#allocation11 + $0x7d8] sm:$0xff]
    %v1378 = vld [vmem:[#allocation11 + $0x7e0] sm:$0xff]
    %v1379 = vld [vmem:[#allocation11 + $0x7e8] sm:$0xff]
    %v1380 = vld [vmem:[#allocation11 + $0x7f0] sm:$0xff]
    %v1381 = vld [vmem:[#allocation11 + $0x7f8] sm:$0xff]
    %v1638 = vunpack.c.l.b16 %v1126
    %v1639 = vunpack.c.h.b16 %v1126
    %v1640 = vunpack.c.l.b16 %v1127
    %v1641 = vunpack.c.h.b16 %v1127
    %v1642 = vunpack.c.l.b16 %v1128
    %v1643 = vunpack.c.h.b16 %v1128
    %v1644 = vunpack.c.l.b16 %v1129
    %v1645 = vunpack.c.h.b16 %v1129
    %v1646 = vunpack.c.l.b16 %v1130
    %v1647 = vunpack.c.h.b16 %v1130
    %v1648 = vunpack.c.l.b16 %v1131
    %v1649 = vunpack.c.h.b16 %v1131
    %v1650 = vunpack.c.l.b16 %v1132
    %v1651 = vunpack.c.h.b16 %v1132
    %v1652 = vunpack.c.l.b16 %v1133
    %v1653 = vunpack.c.h.b16 %v1133
    %v1654 = vunpack.c.l.b16 %v1134
    %v1655 = vunpack.c.h.b16 %v1134
    %v1656 = vunpack.c.l.b16 %v1135
    %v1657 = vunpack.c.h.b16 %v1135
    %v1658 = vunpack.c.l.b16 %v1136
    %v1659 = vunpack.c.h.b16 %v1136
    %v1660 = vunpack.c.l.b16 %v1137
    %v1661 = vunpack.c.h.b16 %v1137
    %v1662 = vunpack.c.l.b16 %v1138
    %v1663 = vunpack.c.h.b16 %v1138
    %v1664 = vunpack.c.l.b16 %v1139
    %v1665 = vunpack.c.h.b16 %v1139
    %v1666 = vunpack.c.l.b16 %v1140
    %v1667 = vunpack.c.h.b16 %v1140
    %v1668 = vunpack.c.l.b16 %v1141
    %v1669 = vunpack.c.h.b16 %v1141
    %v1670 = vunpack.c.l.b16 %v1142
    %v1671 = vunpack.c.h.b16 %v1142
    %v1672 = vunpack.c.l.b16 %v1143
    %v1673 = vunpack.c.h.b16 %v1143
    %v1674 = vunpack.c.l.b16 %v1144
    %v1675 = vunpack.c.h.b16 %v1144
    %v1676 = vunpack.c.l.b16 %v1145
    %v1677 = vunpack.c.h.b16 %v1145
    %v1678 = vunpack.c.l.b16 %v1146
    %v1679 = vunpack.c.h.b16 %v1146
    %v1680 = vunpack.c.l.b16 %v1147
    %v1681 = vunpack.c.h.b16 %v1147
    %v1682 = vunpack.c.l.b16 %v1148
    %v1683 = vunpack.c.h.b16 %v1148
    %v1684 = vunpack.c.l.b16 %v1149
    %v1685 = vunpack.c.h.b16 %v1149
    %v1686 = vunpack.c.l.b16 %v1150
    %v1687 = vunpack.c.h.b16 %v1150
    %v1688 = vunpack.c.l.b16 %v1151
    %v1689 = vunpack.c.h.b16 %v1151
    %v1690 = vunpack.c.l.b16 %v1152
    %v1691 = vunpack.c.h.b16 %v1152
    %v1692 = vunpack.c.l.b16 %v1153
    %v1693 = vunpack.c.h.b16 %v1153
    %v1694 = vunpack.c.l.b16 %v1154
    %v1695 = vunpack.c.h.b16 %v1154
    %v1696 = vunpack.c.l.b16 %v1155
    %v1697 = vunpack.c.h.b16 %v1155
    %v1698 = vunpack.c.l.b16 %v1156
    %v1699 = vunpack.c.h.b16 %v1156
    %v1700 = vunpack.c.l.b16 %v1157
    %v1701 = vunpack.c.h.b16 %v1157
    %v1702 = vunpack.c.l.b16 %v1158
    %v1703 = vunpack.c.h.b16 %v1158
    %v1704 = vunpack.c.l.b16 %v1159
    %v1705 = vunpack.c.h.b16 %v1159
    %v1706 = vunpack.c.l.b16 %v1160
    %v1707 = vunpack.c.h.b16 %v1160
    %v1708 = vunpack.c.l.b16 %v1161
    %v1709 = vunpack.c.h.b16 %v1161
    %v1710 = vunpack.c.l.b16 %v1162
    %v1711 = vunpack.c.h.b16 %v1162
    %v1712 = vunpack.c.l.b16 %v1163
    %v1713 = vunpack.c.h.b16 %v1163
    %v1714 = vunpack.c.l.b16 %v1164
    %v1715 = vunpack.c.h.b16 %v1164
    %v1716 = vunpack.c.l.b16 %v1165
    %v1717 = vunpack.c.h.b16 %v1165
    %v1718 = vunpack.c.l.b16 %v1166
    %v1719 = vunpack.c.h.b16 %v1166
    %v1720 = vunpack.c.l.b16 %v1167
    %v1721 = vunpack.c.h.b16 %v1167
    %v1722 = vunpack.c.l.b16 %v1168
    %v1723 = vunpack.c.h.b16 %v1168
    %v1724 = vunpack.c.l.b16 %v1169
    %v1725 = vunpack.c.h.b16 %v1169
    %v1726 = vunpack.c.l.b16 %v1170
    %v1727 = vunpack.c.h.b16 %v1170
    %v1728 = vunpack.c.l.b16 %v1171
    %v1729 = vunpack.c.h.b16 %v1171
    %v1730 = vunpack.c.l.b16 %v1172
    %v1731 = vunpack.c.h.b16 %v1172
    %v1732 = vunpack.c.l.b16 %v1173
    %v1733 = vunpack.c.h.b16 %v1173
    %v1734 = vunpack.c.l.b16 %v1174
    %v1735 = vunpack.c.h.b16 %v1174
    %v1736 = vunpack.c.l.b16 %v1175
    %v1737 = vunpack.c.h.b16 %v1175
    %v1738 = vunpack.c.l.b16 %v1176
    %v1739 = vunpack.c.h.b16 %v1176
    %v1740 = vunpack.c.l.b16 %v1177
    %v1741 = vunpack.c.h.b16 %v1177
    %v1742 = vunpack.c.l.b16 %v1178
    %v1743 = vunpack.c.h.b16 %v1178
    %v1744 = vunpack.c.l.b16 %v1179
    %v1745 = vunpack.c.h.b16 %v1179
    %v1746 = vunpack.c.l.b16 %v1180
    %v1747 = vunpack.c.h.b16 %v1180
    %v1748 = vunpack.c.l.b16 %v1181
    %v1749 = vunpack.c.h.b16 %v1181
    %v1750 = vunpack.c.l.b16 %v1182
    %v1751 = vunpack.c.h.b16 %v1182
    %v1752 = vunpack.c.l.b16 %v1183
    %v1753 = vunpack.c.h.b16 %v1183
    %v1754 = vunpack.c.l.b16 %v1184
    %v1755 = vunpack.c.h.b16 %v1184
    %v1756 = vunpack.c.l.b16 %v1185
    %v1757 = vunpack.c.h.b16 %v1185
    %v1758 = vunpack.c.l.b16 %v1186
    %v1759 = vunpack.c.h.b16 %v1186
    %v1760 = vunpack.c.l.b16 %v1187
    %v1761 = vunpack.c.h.b16 %v1187
    %v1762 = vunpack.c.l.b16 %v1188
    %v1763 = vunpack.c.h.b16 %v1188
    %v1764 = vunpack.c.l.b16 %v1189
    %v1765 = vunpack.c.h.b16 %v1189
    %v1766 = vunpack.c.l.b16 %v1190
    %v1767 = vunpack.c.h.b16 %v1190
    %v1768 = vunpack.c.l.b16 %v1191
    %v1769 = vunpack.c.h.b16 %v1191
    %v1770 = vunpack.c.l.b16 %v1192
    %v1771 = vunpack.c.h.b16 %v1192
    %v1772 = vunpack.c.l.b16 %v1193
    %v1773 = vunpack.c.h.b16 %v1193
    %v1774 = vunpack.c.l.b16 %v1194
    %v1775 = vunpack.c.h.b16 %v1194
    %v1776 = vunpack.c.l.b16 %v1195
    %v1777 = vunpack.c.h.b16 %v1195
    %v1778 = vunpack.c.l.b16 %v1196
    %v1779 = vunpack.c.h.b16 %v1196
    %v1780 = vunpack.c.l.b16 %v1197
    %v1781 = vunpack.c.h.b16 %v1197
    %v1782 = vunpack.c.l.b16 %v1198
    %v1783 = vunpack.c.h.b16 %v1198
    %v1784 = vunpack.c.l.b16 %v1199
    %v1785 = vunpack.c.h.b16 %v1199
    %v1786 = vunpack.c.l.b16 %v1200
    %v1787 = vunpack.c.h.b16 %v1200
    %v1788 = vunpack.c.l.b16 %v1201
    %v1789 = vunpack.c.h.b16 %v1201
    %v1790 = vunpack.c.l.b16 %v1202
    %v1791 = vunpack.c.h.b16 %v1202
    %v1792 = vunpack.c.l.b16 %v1203
    %v1793 = vunpack.c.h.b16 %v1203
    %v1794 = vunpack.c.l.b16 %v1204
    %v1795 = vunpack.c.h.b16 %v1204
    %v1796 = vunpack.c.l.b16 %v1205
    %v1797 = vunpack.c.h.b16 %v1205
    %v1798 = vunpack.c.l.b16 %v1206
    %v1799 = vunpack.c.h.b16 %v1206
    %v1800 = vunpack.c.l.b16 %v1207
    %v1801 = vunpack.c.h.b16 %v1207
    %v1802 = vunpack.c.l.b16 %v1208
    %v1803 = vunpack.c.h.b16 %v1208
    %v1804 = vunpack.c.l.b16 %v1209
    %v1805 = vunpack.c.h.b16 %v1209
    %v1806 = vunpack.c.l.b16 %v1210
    %v1807 = vunpack.c.h.b16 %v1210
    %v1808 = vunpack.c.l.b16 %v1211
    %v1809 = vunpack.c.h.b16 %v1211
    %v1810 = vunpack.c.l.b16 %v1212
    %v1811 = vunpack.c.h.b16 %v1212
    %v1812 = vunpack.c.l.b16 %v1213
    %v1813 = vunpack.c.h.b16 %v1213
    %v1814 = vunpack.c.l.b16 %v1214
    %v1815 = vunpack.c.h.b16 %v1214
    %v1816 = vunpack.c.l.b16 %v1215
    %v1817 = vunpack.c.h.b16 %v1215
    %v1818 = vunpack.c.l.b16 %v1216
    %v1819 = vunpack.c.h.b16 %v1216
    %v1820 = vunpack.c.l.b16 %v1217
    %v1821 = vunpack.c.h.b16 %v1217
    %v1822 = vunpack.c.l.b16 %v1218
    %v1823 = vunpack.c.h.b16 %v1218
    %v1824 = vunpack.c.l.b16 %v1219
    %v1825 = vunpack.c.h.b16 %v1219
    %v1826 = vunpack.c.l.b16 %v1220
    %v1827 = vunpack.c.h.b16 %v1220
    %v1828 = vunpack.c.l.b16 %v1221
    %v1829 = vunpack.c.h.b16 %v1221
    %v1830 = vunpack.c.l.b16 %v1222
    %v1831 = vunpack.c.h.b16 %v1222
    %v1832 = vunpack.c.l.b16 %v1223
    %v1833 = vunpack.c.h.b16 %v1223
    %v1834 = vunpack.c.l.b16 %v1224
    %v1835 = vunpack.c.h.b16 %v1224
    %v1836 = vunpack.c.l.b16 %v1225
    %v1837 = vunpack.c.h.b16 %v1225
    %v1838 = vunpack.c.l.b16 %v1226
    %v1839 = vunpack.c.h.b16 %v1226
    %v1840 = vunpack.c.l.b16 %v1227
    %v1841 = vunpack.c.h.b16 %v1227
    %v1842 = vunpack.c.l.b16 %v1228
    %v1843 = vunpack.c.h.b16 %v1228
    %v1844 = vunpack.c.l.b16 %v1229
    %v1845 = vunpack.c.h.b16 %v1229
    %v1846 = vunpack.c.l.b16 %v1230
    %v1847 = vunpack.c.h.b16 %v1230
    %v1848 = vunpack.c.l.b16 %v1231
    %v1849 = vunpack.c.h.b16 %v1231
    %v1850 = vunpack.c.l.b16 %v1232
    %v1851 = vunpack.c.h.b16 %v1232
    %v1852 = vunpack.c.l.b16 %v1233
    %v1853 = vunpack.c.h.b16 %v1233
    %v1854 = vunpack.c.l.b16 %v1234
    %v1855 = vunpack.c.h.b16 %v1234
    %v1856 = vunpack.c.l.b16 %v1235
    %v1857 = vunpack.c.h.b16 %v1235
    %v1858 = vunpack.c.l.b16 %v1236
    %v1859 = vunpack.c.h.b16 %v1236
    %v1860 = vunpack.c.l.b16 %v1237
    %v1861 = vunpack.c.h.b16 %v1237
    %v1862 = vunpack.c.l.b16 %v1238
    %v1863 = vunpack.c.h.b16 %v1238
    %v1864 = vunpack.c.l.b16 %v1239
    %v1865 = vunpack.c.h.b16 %v1239
    %v1866 = vunpack.c.l.b16 %v1240
    %v1867 = vunpack.c.h.b16 %v1240
    %v1868 = vunpack.c.l.b16 %v1241
    %v1869 = vunpack.c.h.b16 %v1241
    %v1870 = vunpack.c.l.b16 %v1242
    %v1871 = vunpack.c.h.b16 %v1242
    %v1872 = vunpack.c.l.b16 %v1243
    %v1873 = vunpack.c.h.b16 %v1243
    %v1874 = vunpack.c.l.b16 %v1244
    %v1875 = vunpack.c.h.b16 %v1244
    %v1876 = vunpack.c.l.b16 %v1245
    %v1877 = vunpack.c.h.b16 %v1245
    %v1878 = vunpack.c.l.b16 %v1246
    %v1879 = vunpack.c.h.b16 %v1246
    %v1880 = vunpack.c.l.b16 %v1247
    %v1881 = vunpack.c.h.b16 %v1247
    %v1882 = vunpack.c.l.b16 %v1248
    %v1883 = vunpack.c.h.b16 %v1248
    %v1884 = vunpack.c.l.b16 %v1249
    %v1885 = vunpack.c.h.b16 %v1249
    %v1886 = vunpack.c.l.b16 %v1250
    %v1887 = vunpack.c.h.b16 %v1250
    %v1888 = vunpack.c.l.b16 %v1251
    %v1889 = vunpack.c.h.b16 %v1251
    %v1890 = vunpack.c.l.b16 %v1252
    %v1891 = vunpack.c.h.b16 %v1252
    %v1892 = vunpack.c.l.b16 %v1253
    %v1893 = vunpack.c.h.b16 %v1253
    %v1894 = vunpack.c.l.b16 %v1254
    %v1895 = vunpack.c.h.b16 %v1254
    %v1896 = vunpack.c.l.b16 %v1255
    %v1897 = vunpack.c.h.b16 %v1255
    %v1898 = vunpack.c.l.b16 %v1256
    %v1899 = vunpack.c.h.b16 %v1256
    %v1900 = vunpack.c.l.b16 %v1257
    %v1901 = vunpack.c.h.b16 %v1257
    %v1902 = vunpack.c.l.b16 %v1258
    %v1903 = vunpack.c.h.b16 %v1258
    %v1904 = vunpack.c.l.b16 %v1259
    %v1905 = vunpack.c.h.b16 %v1259
    %v1906 = vunpack.c.l.b16 %v1260
    %v1907 = vunpack.c.h.b16 %v1260
    %v1908 = vunpack.c.l.b16 %v1261
    %v1909 = vunpack.c.h.b16 %v1261
    %v1910 = vunpack.c.l.b16 %v1262
    %v1911 = vunpack.c.h.b16 %v1262
    %v1912 = vunpack.c.l.b16 %v1263
    %v1913 = vunpack.c.h.b16 %v1263
    %v1914 = vunpack.c.l.b16 %v1264
    %v1915 = vunpack.c.h.b16 %v1264
    %v1916 = vunpack.c.l.b16 %v1265
    %v1917 = vunpack.c.h.b16 %v1265
    %v1918 = vunpack.c.l.b16 %v1266
    %v1919 = vunpack.c.h.b16 %v1266
    %v1920 = vunpack.c.l.b16 %v1267
    %v1921 = vunpack.c.h.b16 %v1267
    %v1922 = vunpack.c.l.b16 %v1268
    %v1923 = vunpack.c.h.b16 %v1268
    %v1924 = vunpack.c.l.b16 %v1269
    %v1925 = vunpack.c.h.b16 %v1269
    %v1926 = vunpack.c.l.b16 %v1270
    %v1927 = vunpack.c.h.b16 %v1270
    %v1928 = vunpack.c.l.b16 %v1271
    %v1929 = vunpack.c.h.b16 %v1271
    %v1930 = vunpack.c.l.b16 %v1272
    %v1931 = vunpack.c.h.b16 %v1272
    %v1932 = vunpack.c.l.b16 %v1273
    %v1933 = vunpack.c.h.b16 %v1273
    %v1934 = vunpack.c.l.b16 %v1274
    %v1935 = vunpack.c.h.b16 %v1274
    %v1936 = vunpack.c.l.b16 %v1275
    %v1937 = vunpack.c.h.b16 %v1275
    %v1938 = vunpack.c.l.b16 %v1276
    %v1939 = vunpack.c.h.b16 %v1276
    %v1940 = vunpack.c.l.b16 %v1277
    %v1941 = vunpack.c.h.b16 %v1277
    %v1942 = vunpack.c.l.b16 %v1278
    %v1943 = vunpack.c.h.b16 %v1278
    %v1944 = vunpack.c.l.b16 %v1279
    %v1945 = vunpack.c.h.b16 %v1279
    %v1946 = vunpack.c.l.b16 %v1280
    %v1947 = vunpack.c.h.b16 %v1280
    %v1948 = vunpack.c.l.b16 %v1281
    %v1949 = vunpack.c.h.b16 %v1281
    %v1950 = vunpack.c.l.b16 %v1282
    %v1951 = vunpack.c.h.b16 %v1282
    %v1952 = vunpack.c.l.b16 %v1283
    %v1953 = vunpack.c.h.b16 %v1283
    %v1954 = vunpack.c.l.b16 %v1284
    %v1955 = vunpack.c.h.b16 %v1284
    %v1956 = vunpack.c.l.b16 %v1285
    %v1957 = vunpack.c.h.b16 %v1285
    %v1958 = vunpack.c.l.b16 %v1286
    %v1959 = vunpack.c.h.b16 %v1286
    %v1960 = vunpack.c.l.b16 %v1287
    %v1961 = vunpack.c.h.b16 %v1287
    %v1962 = vunpack.c.l.b16 %v1288
    %v1963 = vunpack.c.h.b16 %v1288
    %v1964 = vunpack.c.l.b16 %v1289
    %v1965 = vunpack.c.h.b16 %v1289
    %v1966 = vunpack.c.l.b16 %v1290
    %v1967 = vunpack.c.h.b16 %v1290
    %v1968 = vunpack.c.l.b16 %v1291
    %v1969 = vunpack.c.h.b16 %v1291
    %v1970 = vunpack.c.l.b16 %v1292
    %v1971 = vunpack.c.h.b16 %v1292
    %v1972 = vunpack.c.l.b16 %v1293
    %v1973 = vunpack.c.h.b16 %v1293
    %v1974 = vunpack.c.l.b16 %v1294
    %v1975 = vunpack.c.h.b16 %v1294
    %v1976 = vunpack.c.l.b16 %v1295
    %v1977 = vunpack.c.h.b16 %v1295
    %v1978 = vunpack.c.l.b16 %v1296
    %v1979 = vunpack.c.h.b16 %v1296
    %v1980 = vunpack.c.l.b16 %v1297
    %v1981 = vunpack.c.h.b16 %v1297
    %v1982 = vunpack.c.l.b16 %v1298
    %v1983 = vunpack.c.h.b16 %v1298
    %v1984 = vunpack.c.l.b16 %v1299
    %v1985 = vunpack.c.h.b16 %v1299
    %v1986 = vunpack.c.l.b16 %v1300
    %v1987 = vunpack.c.h.b16 %v1300
    %v1988 = vunpack.c.l.b16 %v1301
    %v1989 = vunpack.c.h.b16 %v1301
    %v1990 = vunpack.c.l.b16 %v1302
    %v1991 = vunpack.c.h.b16 %v1302
    %v1992 = vunpack.c.l.b16 %v1303
    %v1993 = vunpack.c.h.b16 %v1303
    %v1994 = vunpack.c.l.b16 %v1304
    %v1995 = vunpack.c.h.b16 %v1304
    %v1996 = vunpack.c.l.b16 %v1305
    %v1997 = vunpack.c.h.b16 %v1305
    %v1998 = vunpack.c.l.b16 %v1306
    %v1999 = vunpack.c.h.b16 %v1306
    %v2000 = vunpack.c.l.b16 %v1307
    %v2001 = vunpack.c.h.b16 %v1307
    %v2002 = vunpack.c.l.b16 %v1308
    %v2003 = vunpack.c.h.b16 %v1308
    %v2004 = vunpack.c.l.b16 %v1309
    %v2005 = vunpack.c.h.b16 %v1309
    %v2006 = vunpack.c.l.b16 %v1310
    %v2007 = vunpack.c.h.b16 %v1310
    %v2008 = vunpack.c.l.b16 %v1311
    %v2009 = vunpack.c.h.b16 %v1311
    %v2010 = vunpack.c.l.b16 %v1312
    %v2011 = vunpack.c.h.b16 %v1312
    %v2012 = vunpack.c.l.b16 %v1313
    %v2013 = vunpack.c.h.b16 %v1313
    %v2014 = vunpack.c.l.b16 %v1314
    %v2015 = vunpack.c.h.b16 %v1314
    %v2016 = vunpack.c.l.b16 %v1315
    %v2017 = vunpack.c.h.b16 %v1315
    %v2018 = vunpack.c.l.b16 %v1316
    %v2019 = vunpack.c.h.b16 %v1316
    %v2020 = vunpack.c.l.b16 %v1317
    %v2021 = vunpack.c.h.b16 %v1317
    %v2022 = vunpack.c.l.b16 %v1318
    %v2023 = vunpack.c.h.b16 %v1318
    %v2024 = vunpack.c.l.b16 %v1319
    %v2025 = vunpack.c.h.b16 %v1319
    %v2026 = vunpack.c.l.b16 %v1320
    %v2027 = vunpack.c.h.b16 %v1320
    %v2028 = vunpack.c.l.b16 %v1321
    %v2029 = vunpack.c.h.b16 %v1321
    %v2030 = vunpack.c.l.b16 %v1322
    %v2031 = vunpack.c.h.b16 %v1322
    %v2032 = vunpack.c.l.b16 %v1323
    %v2033 = vunpack.c.h.b16 %v1323
    %v2034 = vunpack.c.l.b16 %v1324
    %v2035 = vunpack.c.h.b16 %v1324
    %v2036 = vunpack.c.l.b16 %v1325
    %v2037 = vunpack.c.h.b16 %v1325
    %v2038 = vunpack.c.l.b16 %v1326
    %v2039 = vunpack.c.h.b16 %v1326
    %v2040 = vunpack.c.l.b16 %v1327
    %v2041 = vunpack.c.h.b16 %v1327
    %v2042 = vunpack.c.l.b16 %v1328
    %v2043 = vunpack.c.h.b16 %v1328
    %v2044 = vunpack.c.l.b16 %v1329
    %v2045 = vunpack.c.h.b16 %v1329
    %v2046 = vunpack.c.l.b16 %v1330
    %v2047 = vunpack.c.h.b16 %v1330
    %v2048 = vunpack.c.l.b16 %v1331
    %v2049 = vunpack.c.h.b16 %v1331
    %v2050 = vunpack.c.l.b16 %v1332
    %v2051 = vunpack.c.h.b16 %v1332
    %v2052 = vunpack.c.l.b16 %v1333
    %v2053 = vunpack.c.h.b16 %v1333
    %v2054 = vunpack.c.l.b16 %v1334
    %v2055 = vunpack.c.h.b16 %v1334
    %v2056 = vunpack.c.l.b16 %v1335
    %v2057 = vunpack.c.h.b16 %v1335
    %v2058 = vunpack.c.l.b16 %v1336
    %v2059 = vunpack.c.h.b16 %v1336
    %v2060 = vunpack.c.l.b16 %v1337
    %v2061 = vunpack.c.h.b16 %v1337
    %v2062 = vunpack.c.l.b16 %v1338
    %v2063 = vunpack.c.h.b16 %v1338
    %v2064 = vunpack.c.l.b16 %v1339
    %v2065 = vunpack.c.h.b16 %v1339
    %v2066 = vunpack.c.l.b16 %v1340
    %v2067 = vunpack.c.h.b16 %v1340
    %v2068 = vunpack.c.l.b16 %v1341
    %v2069 = vunpack.c.h.b16 %v1341
    %v2070 = vunpack.c.l.b16 %v1342
    %v2071 = vunpack.c.h.b16 %v1342
    %v2072 = vunpack.c.l.b16 %v1343
    %v2073 = vunpack.c.h.b16 %v1343
    %v2074 = vunpack.c.l.b16 %v1344
    %v2075 = vunpack.c.h.b16 %v1344
    %v2076 = vunpack.c.l.b16 %v1345
    %v2077 = vunpack.c.h.b16 %v1345
    %v2078 = vunpack.c.l.b16 %v1346
    %v2079 = vunpack.c.h.b16 %v1346
    %v2080 = vunpack.c.l.b16 %v1347
    %v2081 = vunpack.c.h.b16 %v1347
    %v2082 = vunpack.c.l.b16 %v1348
    %v2083 = vunpack.c.h.b16 %v1348
    %v2084 = vunpack.c.l.b16 %v1349
    %v2085 = vunpack.c.h.b16 %v1349
    %v2086 = vunpack.c.l.b16 %v1350
    %v2087 = vunpack.c.h.b16 %v1350
    %v2088 = vunpack.c.l.b16 %v1351
    %v2089 = vunpack.c.h.b16 %v1351
    %v2090 = vunpack.c.l.b16 %v1352
    %v2091 = vunpack.c.h.b16 %v1352
    %v2092 = vunpack.c.l.b16 %v1353
    %v2093 = vunpack.c.h.b16 %v1353
    %v2094 = vunpack.c.l.b16 %v1354
    %v2095 = vunpack.c.h.b16 %v1354
    %v2096 = vunpack.c.l.b16 %v1355
    %v2097 = vunpack.c.h.b16 %v1355
    %v2098 = vunpack.c.l.b16 %v1356
    %v2099 = vunpack.c.h.b16 %v1356
    %v2100 = vunpack.c.l.b16 %v1357
    %v2101 = vunpack.c.h.b16 %v1357
    %v2102 = vunpack.c.l.b16 %v1358
    %v2103 = vunpack.c.h.b16 %v1358
    %v2104 = vunpack.c.l.b16 %v1359
    %v2105 = vunpack.c.h.b16 %v1359
    %v2106 = vunpack.c.l.b16 %v1360
    %v2107 = vunpack.c.h.b16 %v1360
    %v2108 = vunpack.c.l.b16 %v1361
    %v2109 = vunpack.c.h.b16 %v1361
    %v2110 = vunpack.c.l.b16 %v1362
    %v2111 = vunpack.c.h.b16 %v1362
    %v2112 = vunpack.c.l.b16 %v1363
    %v2113 = vunpack.c.h.b16 %v1363
    %v2114 = vunpack.c.l.b16 %v1364
    %v2115 = vunpack.c.h.b16 %v1364
    %v2116 = vunpack.c.l.b16 %v1365
    %v2117 = vunpack.c.h.b16 %v1365
    %v2118 = vunpack.c.l.b16 %v1366
    %v2119 = vunpack.c.h.b16 %v1366
    %v2120 = vunpack.c.l.b16 %v1367
    %v2121 = vunpack.c.h.b16 %v1367
    %v2122 = vunpack.c.l.b16 %v1368
    %v2123 = vunpack.c.h.b16 %v1368
    %v2124 = vunpack.c.l.b16 %v1369
    %v2125 = vunpack.c.h.b16 %v1369
    %v2126 = vunpack.c.l.b16 %v1370
    %v2127 = vunpack.c.h.b16 %v1370
    %v2128 = vunpack.c.l.b16 %v1371
    %v2129 = vunpack.c.h.b16 %v1371
    %v2130 = vunpack.c.l.b16 %v1372
    %v2131 = vunpack.c.h.b16 %v1372
    %v2132 = vunpack.c.l.b16 %v1373
    %v2133 = vunpack.c.h.b16 %v1373
    %v2134 = vunpack.c.l.b16 %v1374
    %v2135 = vunpack.c.h.b16 %v1374
    %v2136 = vunpack.c.l.b16 %v1375
    %v2137 = vunpack.c.h.b16 %v1375
    %v2138 = vunpack.c.l.b16 %v1376
    %v2139 = vunpack.c.h.b16 %v1376
    %v2140 = vunpack.c.l.b16 %v1377
    %v2141 = vunpack.c.h.b16 %v1377
    %v2142 = vunpack.c.l.b16 %v1378
    %v2143 = vunpack.c.h.b16 %v1378
    %v2144 = vunpack.c.l.b16 %v1379
    %v2145 = vunpack.c.h.b16 %v1379
    %v2146 = vunpack.c.l.b16 %v1380
    %v2147 = vunpack.c.h.b16 %v1380
    %v2148 = vunpack.c.l.b16 %v1381
    %v2149 = vunpack.c.h.b16 %v1381
    %v2150 = vpack.c.b16 %v1646, %v1638
    %v2151 = vpack.c.b16 %v1647, %v1639
    %v2152 = vpack.c.b16 %v1648, %v1640
    %v2153 = vpack.c.b16 %v1649, %v1641
    %v2154 = vpack.c.b16 %v1650, %v1642
    %v2155 = vpack.c.b16 %v1651, %v1643
    %v2156 = vpack.c.b16 %v1652, %v1644
    %v2157 = vpack.c.b16 %v1653, %v1645
    %v2158 = vpack.c.b16 %v1662, %v1654
    %v2159 = vpack.c.b16 %v1663, %v1655
    %v2160 = vpack.c.b16 %v1664, %v1656
    %v2161 = vpack.c.b16 %v1665, %v1657
    %v2162 = vpack.c.b16 %v1666, %v1658
    %v2163 = vpack.c.b16 %v1667, %v1659
    %v2164 = vpack.c.b16 %v1668, %v1660
    %v2165 = vpack.c.b16 %v1669, %v1661
    %v2166 = vpack.c.b16 %v1678, %v1670
    %v2167 = vpack.c.b16 %v1679, %v1671
    %v2168 = vpack.c.b16 %v1680, %v1672
    %v2169 = vpack.c.b16 %v1681, %v1673
    %v2170 = vpack.c.b16 %v1682, %v1674
    %v2171 = vpack.c.b16 %v1683, %v1675
    %v2172 = vpack.c.b16 %v1684, %v1676
    %v2173 = vpack.c.b16 %v1685, %v1677
    %v2174 = vpack.c.b16 %v1694, %v1686
    %v2175 = vpack.c.b16 %v1695, %v1687
    %v2176 = vpack.c.b16 %v1696, %v1688
    %v2177 = vpack.c.b16 %v1697, %v1689
    %v2178 = vpack.c.b16 %v1698, %v1690
    %v2179 = vpack.c.b16 %v1699, %v1691
    %v2180 = vpack.c.b16 %v1700, %v1692
    %v2181 = vpack.c.b16 %v1701, %v1693
    %v2182 = vpack.c.b16 %v1710, %v1702
    %v2183 = vpack.c.b16 %v1711, %v1703
    %v2184 = vpack.c.b16 %v1712, %v1704
    %v2185 = vpack.c.b16 %v1713, %v1705
    %v2186 = vpack.c.b16 %v1714, %v1706
    %v2187 = vpack.c.b16 %v1715, %v1707
    %v2188 = vpack.c.b16 %v1716, %v1708
    %v2189 = vpack.c.b16 %v1717, %v1709
    %v2190 = vpack.c.b16 %v1726, %v1718
    %v2191 = vpack.c.b16 %v1727, %v1719
    %v2192 = vpack.c.b16 %v1728, %v1720
    %v2193 = vpack.c.b16 %v1729, %v1721
    %v2194 = vpack.c.b16 %v1730, %v1722
    %v2195 = vpack.c.b16 %v1731, %v1723
    %v2196 = vpack.c.b16 %v1732, %v1724
    %v2197 = vpack.c.b16 %v1733, %v1725
    %v2198 = vpack.c.b16 %v1742, %v1734
    %v2199 = vpack.c.b16 %v1743, %v1735
    %v2200 = vpack.c.b16 %v1744, %v1736
    %v2201 = vpack.c.b16 %v1745, %v1737
    %v2202 = vpack.c.b16 %v1746, %v1738
    %v2203 = vpack.c.b16 %v1747, %v1739
    %v2204 = vpack.c.b16 %v1748, %v1740
    %v2205 = vpack.c.b16 %v1749, %v1741
    %v2206 = vpack.c.b16 %v1758, %v1750
    %v2207 = vpack.c.b16 %v1759, %v1751
    %v2208 = vpack.c.b16 %v1760, %v1752
    %v2209 = vpack.c.b16 %v1761, %v1753
    %v2210 = vpack.c.b16 %v1762, %v1754
    %v2211 = vpack.c.b16 %v1763, %v1755
    %v2212 = vpack.c.b16 %v1764, %v1756
    %v2213 = vpack.c.b16 %v1765, %v1757
    %v2214 = vpack.c.b16 %v1774, %v1766
    %v2215 = vpack.c.b16 %v1775, %v1767
    %v2216 = vpack.c.b16 %v1776, %v1768
    %v2217 = vpack.c.b16 %v1777, %v1769
    %v2218 = vpack.c.b16 %v1778, %v1770
    %v2219 = vpack.c.b16 %v1779, %v1771
    %v2220 = vpack.c.b16 %v1780, %v1772
    %v2221 = vpack.c.b16 %v1781, %v1773
    %v2222 = vpack.c.b16 %v1790, %v1782
    %v2223 = vpack.c.b16 %v1791, %v1783
    %v2224 = vpack.c.b16 %v1792, %v1784
    %v2225 = vpack.c.b16 %v1793, %v1785
    %v2226 = vpack.c.b16 %v1794, %v1786
    %v2227 = vpack.c.b16 %v1795, %v1787
    %v2228 = vpack.c.b16 %v1796, %v1788
    %v2229 = vpack.c.b16 %v1797, %v1789
    %v2230 = vpack.c.b16 %v1806, %v1798
    %v2231 = vpack.c.b16 %v1807, %v1799
    %v2232 = vpack.c.b16 %v1808, %v1800
    %v2233 = vpack.c.b16 %v1809, %v1801
    %v2234 = vpack.c.b16 %v1810, %v1802
    %v2235 = vpack.c.b16 %v1811, %v1803
    %v2236 = vpack.c.b16 %v1812, %v1804
    %v2237 = vpack.c.b16 %v1813, %v1805
    %v2238 = vpack.c.b16 %v1822, %v1814
    %v2239 = vpack.c.b16 %v1823, %v1815
    %v2240 = vpack.c.b16 %v1824, %v1816
    %v2241 = vpack.c.b16 %v1825, %v1817
    %v2242 = vpack.c.b16 %v1826, %v1818
    %v2243 = vpack.c.b16 %v1827, %v1819
    %v2244 = vpack.c.b16 %v1828, %v1820
    %v2245 = vpack.c.b16 %v1829, %v1821
    %v2246 = vpack.c.b16 %v1838, %v1830
    %v2247 = vpack.c.b16 %v1839, %v1831
    %v2248 = vpack.c.b16 %v1840, %v1832
    %v2249 = vpack.c.b16 %v1841, %v1833
    %v2250 = vpack.c.b16 %v1842, %v1834
    %v2251 = vpack.c.b16 %v1843, %v1835
    %v2252 = vpack.c.b16 %v1844, %v1836
    %v2253 = vpack.c.b16 %v1845, %v1837
    %v2254 = vpack.c.b16 %v1854, %v1846
    %v2255 = vpack.c.b16 %v1855, %v1847
    %v2256 = vpack.c.b16 %v1856, %v1848
    %v2257 = vpack.c.b16 %v1857, %v1849
    %v2258 = vpack.c.b16 %v1858, %v1850
    %v2259 = vpack.c.b16 %v1859, %v1851
    %v2260 = vpack.c.b16 %v1860, %v1852
    %v2261 = vpack.c.b16 %v1861, %v1853
    %v2262 = vpack.c.b16 %v1870, %v1862
    %v2263 = vpack.c.b16 %v1871, %v1863
    %v2264 = vpack.c.b16 %v1872, %v1864
    %v2265 = vpack.c.b16 %v1873, %v1865
    %v2266 = vpack.c.b16 %v1874, %v1866
    %v2267 = vpack.c.b16 %v1875, %v1867
    %v2268 = vpack.c.b16 %v1876, %v1868
    %v2269 = vpack.c.b16 %v1877, %v1869
    %v2270 = vpack.c.b16 %v1886, %v1878
    %v2271 = vpack.c.b16 %v1887, %v1879
    %v2272 = vpack.c.b16 %v1888, %v1880
    %v2273 = vpack.c.b16 %v1889, %v1881
    %v2274 = vpack.c.b16 %v1890, %v1882
    %v2275 = vpack.c.b16 %v1891, %v1883
    %v2276 = vpack.c.b16 %v1892, %v1884
    %v2277 = vpack.c.b16 %v1893, %v1885
    %v2278 = vpack.c.b16 %v1902, %v1894
    %v2279 = vpack.c.b16 %v1903, %v1895
    %v2280 = vpack.c.b16 %v1904, %v1896
    %v2281 = vpack.c.b16 %v1905, %v1897
    %v2282 = vpack.c.b16 %v1906, %v1898
    %v2283 = vpack.c.b16 %v1907, %v1899
    %v2284 = vpack.c.b16 %v1908, %v1900
    %v2285 = vpack.c.b16 %v1909, %v1901
    %v2286 = vpack.c.b16 %v1918, %v1910
    %v2287 = vpack.c.b16 %v1919, %v1911
    %v2288 = vpack.c.b16 %v1920, %v1912
    %v2289 = vpack.c.b16 %v1921, %v1913
    %v2290 = vpack.c.b16 %v1922, %v1914
    %v2291 = vpack.c.b16 %v1923, %v1915
    %v2292 = vpack.c.b16 %v1924, %v1916
    %v2293 = vpack.c.b16 %v1925, %v1917
    %v2294 = vpack.c.b16 %v1934, %v1926
    %v2295 = vpack.c.b16 %v1935, %v1927
    %v2296 = vpack.c.b16 %v1936, %v1928
    %v2297 = vpack.c.b16 %v1937, %v1929
    %v2298 = vpack.c.b16 %v1938, %v1930
    %v2299 = vpack.c.b16 %v1939, %v1931
    %v2300 = vpack.c.b16 %v1940, %v1932
    %v2301 = vpack.c.b16 %v1941, %v1933
    %v2302 = vpack.c.b16 %v1950, %v1942
    %v2303 = vpack.c.b16 %v1951, %v1943
    %v2304 = vpack.c.b16 %v1952, %v1944
    %v2305 = vpack.c.b16 %v1953, %v1945
    %v2306 = vpack.c.b16 %v1954, %v1946
    %v2307 = vpack.c.b16 %v1955, %v1947
    %v2308 = vpack.c.b16 %v1956, %v1948
    %v2309 = vpack.c.b16 %v1957, %v1949
    %v2310 = vpack.c.b16 %v1966, %v1958
    %v2311 = vpack.c.b16 %v1967, %v1959
    %v2312 = vpack.c.b16 %v1968, %v1960
    %v2313 = vpack.c.b16 %v1969, %v1961
    %v2314 = vpack.c.b16 %v1970, %v1962
    %v2315 = vpack.c.b16 %v1971, %v1963
    %v2316 = vpack.c.b16 %v1972, %v1964
    %v2317 = vpack.c.b16 %v1973, %v1965
    %v2318 = vpack.c.b16 %v1982, %v1974
    %v2319 = vpack.c.b16 %v1983, %v1975
    %v2320 = vpack.c.b16 %v1984, %v1976
    %v2321 = vpack.c.b16 %v1985, %v1977
    %v2322 = vpack.c.b16 %v1986, %v1978
    %v2323 = vpack.c.b16 %v1987, %v1979
    %v2324 = vpack.c.b16 %v1988, %v1980
    %v2325 = vpack.c.b16 %v1989, %v1981
    %v2326 = vpack.c.b16 %v1998, %v1990
    %v2327 = vpack.c.b16 %v1999, %v1991
    %v2328 = vpack.c.b16 %v2000, %v1992
    %v2329 = vpack.c.b16 %v2001, %v1993
    %v2330 = vpack.c.b16 %v2002, %v1994
    %v2331 = vpack.c.b16 %v2003, %v1995
    %v2332 = vpack.c.b16 %v2004, %v1996
    %v2333 = vpack.c.b16 %v2005, %v1997
    %v2334 = vpack.c.b16 %v2014, %v2006
    %v2335 = vpack.c.b16 %v2015, %v2007
    %v2336 = vpack.c.b16 %v2016, %v2008
    %v2337 = vpack.c.b16 %v2017, %v2009
    %v2338 = vpack.c.b16 %v2018, %v2010
    %v2339 = vpack.c.b16 %v2019, %v2011
    %v2340 = vpack.c.b16 %v2020, %v2012
    %v2341 = vpack.c.b16 %v2021, %v2013
    %v2342 = vpack.c.b16 %v2030, %v2022
    %v2343 = vpack.c.b16 %v2031, %v2023
    %v2344 = vpack.c.b16 %v2032, %v2024
    %v2345 = vpack.c.b16 %v2033, %v2025
    %v2346 = vpack.c.b16 %v2034, %v2026
    %v2347 = vpack.c.b16 %v2035, %v2027
    %v2348 = vpack.c.b16 %v2036, %v2028
    %v2349 = vpack.c.b16 %v2037, %v2029
    %v2350 = vpack.c.b16 %v2046, %v2038
    %v2351 = vpack.c.b16 %v2047, %v2039
    %v2352 = vpack.c.b16 %v2048, %v2040
    %v2353 = vpack.c.b16 %v2049, %v2041
    %v2354 = vpack.c.b16 %v2050, %v2042
    %v2355 = vpack.c.b16 %v2051, %v2043
    %v2356 = vpack.c.b16 %v2052, %v2044
    %v2357 = vpack.c.b16 %v2053, %v2045
    %v2358 = vpack.c.b16 %v2062, %v2054
    %v2359 = vpack.c.b16 %v2063, %v2055
    %v2360 = vpack.c.b16 %v2064, %v2056
    %v2361 = vpack.c.b16 %v2065, %v2057
    %v2362 = vpack.c.b16 %v2066, %v2058
    %v2363 = vpack.c.b16 %v2067, %v2059
    %v2364 = vpack.c.b16 %v2068, %v2060
    %v2365 = vpack.c.b16 %v2069, %v2061
    %v2366 = vpack.c.b16 %v2078, %v2070
    %v2367 = vpack.c.b16 %v2079, %v2071
    %v2368 = vpack.c.b16 %v2080, %v2072
    %v2369 = vpack.c.b16 %v2081, %v2073
    %v2370 = vpack.c.b16 %v2082, %v2074
    %v2371 = vpack.c.b16 %v2083, %v2075
    %v2372 = vpack.c.b16 %v2084, %v2076
    %v2373 = vpack.c.b16 %v2085, %v2077
    %v2374 = vpack.c.b16 %v2094, %v2086
    %v2375 = vpack.c.b16 %v2095, %v2087
    %v2376 = vpack.c.b16 %v2096, %v2088
    %v2377 = vpack.c.b16 %v2097, %v2089
    %v2378 = vpack.c.b16 %v2098, %v2090
    %v2379 = vpack.c.b16 %v2099, %v2091
    %v2380 = vpack.c.b16 %v2100, %v2092
    %v2381 = vpack.c.b16 %v2101, %v2093
    %v2382 = vpack.c.b16 %v2110, %v2102
    %v2383 = vpack.c.b16 %v2111, %v2103
    %v2384 = vpack.c.b16 %v2112, %v2104
    %v2385 = vpack.c.b16 %v2113, %v2105
    %v2386 = vpack.c.b16 %v2114, %v2106
    %v2387 = vpack.c.b16 %v2115, %v2107
    %v2388 = vpack.c.b16 %v2116, %v2108
    %v2389 = vpack.c.b16 %v2117, %v2109
    %v2390 = vpack.c.b16 %v2126, %v2118
    %v2391 = vpack.c.b16 %v2127, %v2119
    %v2392 = vpack.c.b16 %v2128, %v2120
    %v2393 = vpack.c.b16 %v2129, %v2121
    %v2394 = vpack.c.b16 %v2130, %v2122
    %v2395 = vpack.c.b16 %v2131, %v2123
    %v2396 = vpack.c.b16 %v2132, %v2124
    %v2397 = vpack.c.b16 %v2133, %v2125
    %v2398 = vpack.c.b16 %v2142, %v2134
    %v2399 = vpack.c.b16 %v2143, %v2135
    %v2400 = vpack.c.b16 %v2144, %v2136
    %v2401 = vpack.c.b16 %v2145, %v2137
    %v2402 = vpack.c.b16 %v2146, %v2138
    %v2403 = vpack.c.b16 %v2147, %v2139
    %v2404 = vpack.c.b16 %v2148, %v2140
    %v2405 = vpack.c.b16 %v2149, %v2141
    %2662 = vmatprep.subr.bf16.mxu0 %v2207
    %2663 = vmatpush1.bf16.msra.mxu0 %v2206
    %2664 = vmatprep.subr.bf16.mxu0 %v2199
    %2665 = vmatpush1.bf16.msra.mxu0 %v2198
    %2666 = vmatprep.subr.bf16.mxu0 %v2191
    %2667 = vmatpush1.bf16.msra.mxu0 %v2190
    %2668 = vmatprep.subr.bf16.mxu0 %v2183
    %2669 = vmatpush1.bf16.msra.mxu0 %v2182
    %2670 = vmatprep.subr.bf16.mxu0 %v2175
    %2671 = vmatpush1.bf16.msra.mxu0 %v2174
    %2672 = vmatprep.subr.bf16.mxu0 %v2167
    %2673 = vmatpush1.bf16.msra.mxu0 %v2166
    %2674 = vmatprep.subr.bf16.mxu0 %v2159
    %2675 = vmatpush1.bf16.msra.mxu0 %v2158
    %2676 = vmatprep.subr.bf16.mxu0 %v2151
    %2677 = vmatpush1.bf16.msra.mxu0 %v2150
    %2678 = vmatprep.subr.bf16.mxu0 %v2271
    %2679 = vmatpush2.bf16.msra.mxu0 %v2270
    %2680 = vmatprep.subr.bf16.mxu0 %v2263
    %2681 = vmatpush2.bf16.msra.mxu0 %v2262
    %2682 = vmatprep.subr.bf16.mxu0 %v2255
    %2683 = vmatpush2.bf16.msra.mxu0 %v2254
    %2684 = vmatprep.subr.bf16.mxu0 %v2247
    %2685 = vmatpush2.bf16.msra.mxu0 %v2246
    %2686 = vmatprep.subr.bf16.mxu0 %v2239
    %2687 = vmatpush2.bf16.msra.mxu0 %v2238
    %2688 = vmatprep.subr.bf16.mxu0 %v2231
    %2689 = vmatpush2.bf16.msra.mxu0 %v2230
    %2690 = vmatprep.subr.bf16.mxu0 %v2223
    %2691 = vmatpush2.bf16.msra.mxu0 %v2222
    %2692 = vmatprep.subr.bf16.mxu0 %v2215
    %2693 = vmatpush2.bf16.msra.mxu0 %v2214
    %2694 = vmatprep.mubr.bf16.mxu0 %v1123
    %2695 = vmatmul.mubr.bf16.gmra.mxu0 %v1122
    %v2696 = vpop.f32.mrf.mxu0
    %v2697 = vadd.f32 0.0, %v2696
    %v2698 = vpop.f32.mrf.mxu0
    %v2699 = vadd.f32 0.0, %v2698
    %v2700 = vpop.f32.mrf.mxu0
    %v2701 = vpop.f32.mrf.mxu0
    %2702 = vdwg.mxu0
    %2703 = vmatprep.subr.bf16.mxu0 %v2335
    %2704 = vmatpush1.bf16.msra.mxu0 %v2334
    %2705 = vmatprep.subr.bf16.mxu0 %v2327
    %2706 = vmatpush1.bf16.msra.mxu0 %v2326
    %2707 = vmatprep.subr.bf16.mxu0 %v2319
    %2708 = vmatpush1.bf16.msra.mxu0 %v2318
    %2709 = vmatprep.subr.bf16.mxu0 %v2311
    %2710 = vmatpush1.bf16.msra.mxu0 %v2310
    %2711 = vmatprep.subr.bf16.mxu0 %v2303
    %2712 = vmatpush1.bf16.msra.mxu0 %v2302
    %2713 = vmatprep.subr.bf16.mxu0 %v2295
    %2714 = vmatpush1.bf16.msra.mxu0 %v2294
    %2715 = vmatprep.subr.bf16.mxu0 %v2287
    %2716 = vmatpush1.bf16.msra.mxu0 %v2286
    %2717 = vmatprep.subr.bf16.mxu0 %v2279
    %2718 = vmatpush1.bf16.msra.mxu0 %v2278
    %2719 = vmatprep.subr.bf16.mxu0 %v2399
    %2720 = vmatpush2.bf16.msra.mxu0 %v2398
    %2721 = vmatprep.subr.bf16.mxu0 %v2391
    %2722 = vmatpush2.bf16.msra.mxu0 %v2390
    %2723 = vmatprep.subr.bf16.mxu0 %v2383
    %2724 = vmatpush2.bf16.msra.mxu0 %v2382
    %2725 = vmatprep.subr.bf16.mxu0 %v2375
    %2726 = vmatpush2.bf16.msra.mxu0 %v2374
    %2727 = vmatprep.subr.bf16.mxu0 %v2367
    %2728 = vmatpush2.bf16.msra.mxu0 %v2366
    %2729 = vmatprep.subr.bf16.mxu0 %v2359
    %2730 = vmatpush2.bf16.msra.mxu0 %v2358
    %2731 = vmatprep.subr.bf16.mxu0 %v2351
    %2732 = vmatpush2.bf16.msra.mxu0 %v2350
    %2733 = vmatprep.subr.bf16.mxu0 %v2343
    %2734 = vmatpush2.bf16.msra.mxu0 %v2342
    %2735 = vmatprep.mubr.bf16.mxu0 %v1125
    %2736 = vmatmul.mubr.bf16.gmra.mxu0 %v1124
    %v2737 = vpop.f32.mrf.mxu0
    %v2738 = vadd.f32 %v2697, %v2737
    %v2739 = vpop.f32.mrf.mxu0
    %v2740 = vadd.f32 %v2699, %v2739
    %v2741 = vpop.f32.mrf.mxu0
    %v2742 = vpop.f32.mrf.mxu0
    %2743 = vdwg.mxu0
    %2744 = vmatprep.subr.bf16.mxu0 %v2209
    %2745 = vmatpush1.bf16.msra.mxu0 %v2208
    %2746 = vmatprep.subr.bf16.mxu0 %v2201
    %2747 = vmatpush1.bf16.msra.mxu0 %v2200
    %2748 = vmatprep.subr.bf16.mxu0 %v2193
    %2749 = vmatpush1.bf16.msra.mxu0 %v2192
    %2750 = vmatprep.subr.bf16.mxu0 %v2185
    %2751 = vmatpush1.bf16.msra.mxu0 %v2184
    %2752 = vmatprep.subr.bf16.mxu0 %v2177
    %2753 = vmatpush1.bf16.msra.mxu0 %v2176
    %2754 = vmatprep.subr.bf16.mxu0 %v2169
    %2755 = vmatpush1.bf16.msra.mxu0 %v2168
    %2756 = vmatprep.subr.bf16.mxu0 %v2161
    %2757 = vmatpush1.bf16.msra.mxu0 %v2160
    %2758 = vmatprep.subr.bf16.mxu0 %v2153
    %2759 = vmatpush1.bf16.msra.mxu0 %v2152
    %2760 = vmatprep.subr.bf16.mxu0 %v2273
    %2761 = vmatpush2.bf16.msra.mxu0 %v2272
    %2762 = vmatprep.subr.bf16.mxu0 %v2265
    %2763 = vmatpush2.bf16.msra.mxu0 %v2264
    %2764 = vmatprep.subr.bf16.mxu0 %v2257
    %2765 = vmatpush2.bf16.msra.mxu0 %v2256
    %2766 = vmatprep.subr.bf16.mxu0 %v2249
    %2767 = vmatpush2.bf16.msra.mxu0 %v2248
    %2768 = vmatprep.subr.bf16.mxu0 %v2241
    %2769 = vmatpush2.bf16.msra.mxu0 %v2240
    %2770 = vmatprep.subr.bf16.mxu0 %v2233
    %2771 = vmatpush2.bf16.msra.mxu0 %v2232
    %2772 = vmatprep.subr.bf16.mxu0 %v2225
    %2773 = vmatpush2.bf16.msra.mxu0 %v2224
    %2774 = vmatprep.subr.bf16.mxu0 %v2217
    %2775 = vmatpush2.bf16.msra.mxu0 %v2216
    %2776 = vmatprep.mubr.bf16.mxu0 %v1123
    %2777 = vmatmul.mubr.bf16.gmra.mxu0 %v1122
    %v2778 = vpop.f32.mrf.mxu0
    %v2779 = vadd.f32 0.0, %v2778
    %v2780 = vpop.f32.mrf.mxu0
    %v2781 = vadd.f32 0.0, %v2780
    %v2782 = vpop.f32.mrf.mxu0
    %v2783 = vpop.f32.mrf.mxu0
    %2784 = vdwg.mxu0
    %2785 = vmatprep.subr.bf16.mxu0 %v2337
    %2786 = vmatpush1.bf16.msra.mxu0 %v2336
    %2787 = vmatprep.subr.bf16.mxu0 %v2329
    %2788 = vmatpush1.bf16.msra.mxu0 %v2328
    %2789 = vmatprep.subr.bf16.mxu0 %v2321
    %2790 = vmatpush1.bf16.msra.mxu0 %v2320
    %2791 = vmatprep.subr.bf16.mxu0 %v2313
    %2792 = vmatpush1.bf16.msra.mxu0 %v2312
    %2793 = vmatprep.subr.bf16.mxu0 %v2305
    %2794 = vmatpush1.bf16.msra.mxu0 %v2304
    %2795 = vmatprep.subr.bf16.mxu0 %v2297
    %2796 = vmatpush1.bf16.msra.mxu0 %v2296
    %2797 = vmatprep.subr.bf16.mxu0 %v2289
    %2798 = vmatpush1.bf16.msra.mxu0 %v2288
    %2799 = vmatprep.subr.bf16.mxu0 %v2281
    %2800 = vmatpush1.bf16.msra.mxu0 %v2280
    %2801 = vmatprep.subr.bf16.mxu0 %v2401
    %2802 = vmatpush2.bf16.msra.mxu0 %v2400
    %2803 = vmatprep.subr.bf16.mxu0 %v2393
    %2804 = vmatpush2.bf16.msra.mxu0 %v2392
    %2805 = vmatprep.subr.bf16.mxu0 %v2385
    %2806 = vmatpush2.bf16.msra.mxu0 %v2384
    %2807 = vmatprep.subr.bf16.mxu0 %v2377
    %2808 = vmatpush2.bf16.msra.mxu0 %v2376
    %2809 = vmatprep.subr.bf16.mxu0 %v2369
    %2810 = vmatpush2.bf16.msra.mxu0 %v2368
    %2811 = vmatprep.subr.bf16.mxu0 %v2361
    %2812 = vmatpush2.bf16.msra.mxu0 %v2360
    %2813 = vmatprep.subr.bf16.mxu0 %v2353
    %2814 = vmatpush2.bf16.msra.mxu0 %v2352
    %2815 = vmatprep.subr.bf16.mxu0 %v2345
    %2816 = vmatpush2.bf16.msra.mxu0 %v2344
    %2817 = vmatprep.mubr.bf16.mxu0 %v1125
    %2818 = vmatmul.mubr.bf16.gmra.mxu0 %v1124
    %v2819 = vpop.f32.mrf.mxu0
    %v2820 = vadd.f32 %v2779, %v2819
    %v2821 = vpop.f32.mrf.mxu0
    %v2822 = vadd.f32 %v2781, %v2821
    %v2823 = vpop.f32.mrf.mxu0
    %v2824 = vpop.f32.mrf.mxu0
    %2825 = vdwg.mxu0
    %2826 = vmatprep.subr.bf16.mxu0 %v2211
    %2827 = vmatpush1.bf16.msra.mxu0 %v2210
    %2828 = vmatprep.subr.bf16.mxu0 %v2203
    %2829 = vmatpush1.bf16.msra.mxu0 %v2202
    %2830 = vmatprep.subr.bf16.mxu0 %v2195
    %2831 = vmatpush1.bf16.msra.mxu0 %v2194
    %2832 = vmatprep.subr.bf16.mxu0 %v2187
    %2833 = vmatpush1.bf16.msra.mxu0 %v2186
    %2834 = vmatprep.subr.bf16.mxu0 %v2179
    %2835 = vmatpush1.bf16.msra.mxu0 %v2178
    %2836 = vmatprep.subr.bf16.mxu0 %v2171
    %2837 = vmatpush1.bf16.msra.mxu0 %v2170
    %2838 = vmatprep.subr.bf16.mxu0 %v2163
    %2839 = vmatpush1.bf16.msra.mxu0 %v2162
    %2840 = vmatprep.subr.bf16.mxu0 %v2155
    %2841 = vmatpush1.bf16.msra.mxu0 %v2154
    %2842 = vmatprep.subr.bf16.mxu0 %v2275
    %2843 = vmatpush2.bf16.msra.mxu0 %v2274
    %2844 = vmatprep.subr.bf16.mxu0 %v2267
    %2845 = vmatpush2.bf16.msra.mxu0 %v2266
    %2846 = vmatprep.subr.bf16.mxu0 %v2259
    %2847 = vmatpush2.bf16.msra.mxu0 %v2258
    %2848 = vmatprep.subr.bf16.mxu0 %v2251
    %2849 = vmatpush2.bf16.msra.mxu0 %v2250
    %2850 = vmatprep.subr.bf16.mxu0 %v2243
    %2851 = vmatpush2.bf16.msra.mxu0 %v2242
    %2852 = vmatprep.subr.bf16.mxu0 %v2235
    %2853 = vmatpush2.bf16.msra.mxu0 %v2234
    %2854 = vmatprep.subr.bf16.mxu0 %v2227
    %2855 = vmatpush2.bf16.msra.mxu0 %v2226
    %2856 = vmatprep.subr.bf16.mxu0 %v2219
    %2857 = vmatpush2.bf16.msra.mxu0 %v2218
    %2858 = vmatprep.mubr.bf16.mxu0 %v1123
    %2859 = vmatmul.mubr.bf16.gmra.mxu0 %v1122
    %v2860 = vpop.f32.mrf.mxu0
    %v2861 = vadd.f32 0.0, %v2860
    %v2862 = vpop.f32.mrf.mxu0
    %v2863 = vadd.f32 0.0, %v2862
    %v2864 = vpop.f32.mrf.mxu0
    %v2865 = vpop.f32.mrf.mxu0
    %2866 = vdwg.mxu0
    %2867 = vmatprep.subr.bf16.mxu0 %v2339
    %2868 = vmatpush1.bf16.msra.mxu0 %v2338
    %2869 = vmatprep.subr.bf16.mxu0 %v2331
    %2870 = vmatpush1.bf16.msra.mxu0 %v2330
    %2871 = vmatprep.subr.bf16.mxu0 %v2323
    %2872 = vmatpush1.bf16.msra.mxu0 %v2322
    %2873 = vmatprep.subr.bf16.mxu0 %v2315
    %2874 = vmatpush1.bf16.msra.mxu0 %v2314
    %2875 = vmatprep.subr.bf16.mxu0 %v2307
    %2876 = vmatpush1.bf16.msra.mxu0 %v2306
    %2877 = vmatprep.subr.bf16.mxu0 %v2299
    %2878 = vmatpush1.bf16.msra.mxu0 %v2298
    %2879 = vmatprep.subr.bf16.mxu0 %v2291
    %2880 = vmatpush1.bf16.msra.mxu0 %v2290
    %2881 = vmatprep.subr.bf16.mxu0 %v2283
    %2882 = vmatpush1.bf16.msra.mxu0 %v2282
    %2883 = vmatprep.subr.bf16.mxu0 %v2403
    %2884 = vmatpush2.bf16.msra.mxu0 %v2402
    %2885 = vmatprep.subr.bf16.mxu0 %v2395
    %2886 = vmatpush2.bf16.msra.mxu0 %v2394
    %2887 = vmatprep.subr.bf16.mxu0 %v2387
    %2888 = vmatpush2.bf16.msra.mxu0 %v2386
    %2889 = vmatprep.subr.bf16.mxu0 %v2379
    %2890 = vmatpush2.bf16.msra.mxu0 %v2378
    %2891 = vmatprep.subr.bf16.mxu0 %v2371
    %2892 = vmatpush2.bf16.msra.mxu0 %v2370
    %2893 = vmatprep.subr.bf16.mxu0 %v2363
    %2894 = vmatpush2.bf16.msra.mxu0 %v2362
    %2895 = vmatprep.subr.bf16.mxu0 %v2355
    %2896 = vmatpush2.bf16.msra.mxu0 %v2354
    %2897 = vmatprep.subr.bf16.mxu0 %v2347
    %2898 = vmatpush2.bf16.msra.mxu0 %v2346
    %2899 = vmatprep.mubr.bf16.mxu0 %v1125
    %2900 = vmatmul.mubr.bf16.gmra.mxu0 %v1124
    %v2901 = vpop.f32.mrf.mxu0
    %v2902 = vadd.f32 %v2861, %v2901
    %v2903 = vpop.f32.mrf.mxu0
    %v2904 = vadd.f32 %v2863, %v2903
    %v2905 = vpop.f32.mrf.mxu0
    %v2906 = vpop.f32.mrf.mxu0
    %2907 = vdwg.mxu0
    %2908 = vmatprep.subr.bf16.mxu0 %v2213
    %2909 = vmatpush1.bf16.msra.mxu0 %v2212
    %2910 = vmatprep.subr.bf16.mxu0 %v2205
    %2911 = vmatpush1.bf16.msra.mxu0 %v2204
    %2912 = vmatprep.subr.bf16.mxu0 %v2197
    %2913 = vmatpush1.bf16.msra.mxu0 %v2196
    %2914 = vmatprep.subr.bf16.mxu0 %v2189
    %2915 = vmatpush1.bf16.msra.mxu0 %v2188
    %2916 = vmatprep.subr.bf16.mxu0 %v2181
    %2917 = vmatpush1.bf16.msra.mxu0 %v2180
    %2918 = vmatprep.subr.bf16.mxu0 %v2173
    %2919 = vmatpush1.bf16.msra.mxu0 %v2172
    %2920 = vmatprep.subr.bf16.mxu0 %v2165
    %2921 = vmatpush1.bf16.msra.mxu0 %v2164
    %2922 = vmatprep.subr.bf16.mxu0 %v2157
    %2923 = vmatpush1.bf16.msra.mxu0 %v2156
    %2924 = vmatprep.subr.bf16.mxu0 %v2277
    %2925 = vmatpush2.bf16.msra.mxu0 %v2276
    %2926 = vmatprep.subr.bf16.mxu0 %v2269
    %2927 = vmatpush2.bf16.msra.mxu0 %v2268
    %2928 = vmatprep.subr.bf16.mxu0 %v2261
    %2929 = vmatpush2.bf16.msra.mxu0 %v2260
    %2930 = vmatprep.subr.bf16.mxu0 %v2253
    %2931 = vmatpush2.bf16.msra.mxu0 %v2252
    %2932 = vmatprep.subr.bf16.mxu0 %v2245
    %2933 = vmatpush2.bf16.msra.mxu0 %v2244
    %2934 = vmatprep.subr.bf16.mxu0 %v2237
    %2935 = vmatpush2.bf16.msra.mxu0 %v2236
    %2936 = vmatprep.subr.bf16.mxu0 %v2229
    %2937 = vmatpush2.bf16.msra.mxu0 %v2228
    %2938 = vmatprep.subr.bf16.mxu0 %v2221
    %2939 = vmatpush2.bf16.msra.mxu0 %v2220
    %2940 = vmatprep.mubr.bf16.mxu0 %v1123
    %2941 = vmatmul.mubr.bf16.gmra.mxu0 %v1122
    %v2942 = vpop.f32.mrf.mxu0
    %v2943 = vadd.f32 0.0, %v2942
    %v2944 = vpop.f32.mrf.mxu0
    %v2945 = vadd.f32 0.0, %v2944
    %v2946 = vpop.f32.mrf.mxu0
    %v2947 = vpop.f32.mrf.mxu0
    %2948 = vdwg.mxu0
    %2949 = vmatprep.subr.bf16.mxu0 %v2341
    %2950 = vmatpush1.bf16.msra.mxu0 %v2340
    %2951 = vmatprep.subr.bf16.mxu0 %v2333
    %2952 = vmatpush1.bf16.msra.mxu0 %v2332
    %2953 = vmatprep.subr.bf16.mxu0 %v2325
    %2954 = vmatpush1.bf16.msra.mxu0 %v2324
    %2955 = vmatprep.subr.bf16.mxu0 %v2317
    %2956 = vmatpush1.bf16.msra.mxu0 %v2316
    %2957 = vmatprep.subr.bf16.mxu0 %v2309
    %2958 = vmatpush1.bf16.msra.mxu0 %v2308
    %2959 = vmatprep.subr.bf16.mxu0 %v2301
    %2960 = vmatpush1.bf16.msra.mxu0 %v2300
    %2961 = vmatprep.subr.bf16.mxu0 %v2293
    %2962 = vmatpush1.bf16.msra.mxu0 %v2292
    %2963 = vmatprep.subr.bf16.mxu0 %v2285
    %2964 = vmatpush1.bf16.msra.mxu0 %v2284
    %2965 = vmatprep.subr.bf16.mxu0 %v2405
    %2966 = vmatpush2.bf16.msra.mxu0 %v2404
    %2967 = vmatprep.subr.bf16.mxu0 %v2397
    %2968 = vmatpush2.bf16.msra.mxu0 %v2396
    %2969 = vmatprep.subr.bf16.mxu0 %v2389
    %2970 = vmatpush2.bf16.msra.mxu0 %v2388
    %2971 = vmatprep.subr.bf16.mxu0 %v2381
    %2972 = vmatpush2.bf16.msra.mxu0 %v2380
    %2973 = vmatprep.subr.bf16.mxu0 %v2373
    %2974 = vmatpush2.bf16.msra.mxu0 %v2372
    %2975 = vmatprep.subr.bf16.mxu0 %v2365
    %2976 = vmatpush2.bf16.msra.mxu0 %v2364
    %2977 = vmatprep.subr.bf16.mxu0 %v2357
    %2978 = vmatpush2.bf16.msra.mxu0 %v2356
    %2979 = vmatprep.subr.bf16.mxu0 %v2349
    %2980 = vmatpush2.bf16.msra.mxu0 %v2348
    %2981 = vmatprep.mubr.bf16.mxu0 %v1125
    %2982 = vmatmul.mubr.bf16.gmra.mxu0 %v1124
    %v2983 = vpop.f32.mrf.mxu0
    %v2984 = vadd.f32 %v2943, %v2983
    %v2985 = vpop.f32.mrf.mxu0
    %v2986 = vadd.f32 %v2945, %v2985
    %v2987 = vpop.f32.mrf.mxu0
    %v2988 = vpop.f32.mrf.mxu0
    %2989 = vdwg.mxu0
    %v2990 = vrot.slane %v2738, 4
    %v2991 = vadd.f32 %v2738, %v2990
    %v2992 = vrot.slane %v2991, 2
    %v2993 = vadd.f32 %v2991, %v2992
    %v2994 = vrot.slane %v2993, 1
    %v2995 = vadd.f32 %v2993, %v2994
    %v2996 = vrot.slane %v2740, 4
    %v2997 = vadd.f32 %v2740, %v2996
    %v2998 = vrot.slane %v2997, 2
    %v2999 = vadd.f32 %v2997, %v2998
    %v3000 = vrot.slane %v2999, 1
    %v3001 = vadd.f32 %v2999, %v3000
    %v3002 = vrot.slane %v2820, 4
    %v3003 = vadd.f32 %v2820, %v3002
    %v3004 = vrot.slane %v3003, 2
    %v3005 = vadd.f32 %v3003, %v3004
    %v3006 = vrot.slane %v3005, 1
    %v3007 = vadd.f32 %v3005, %v3006
    %v3008 = vrot.slane %v2822, 4
    %v3009 = vadd.f32 %v2822, %v3008
    %v3010 = vrot.slane %v3009, 2
    %v3011 = vadd.f32 %v3009, %v3010
    %v3012 = vrot.slane %v3011, 1
    %v3013 = vadd.f32 %v3011, %v3012
    %v3014 = vrot.slane %v2902, 4
    %v3015 = vadd.f32 %v2902, %v3014
    %v3016 = vrot.slane %v3015, 2
    %v3017 = vadd.f32 %v3015, %v3016
    %v3018 = vrot.slane %v3017, 1
    %v3019 = vadd.f32 %v3017, %v3018
    %v3020 = vrot.slane %v2904, 4
    %v3021 = vadd.f32 %v2904, %v3020
    %v3022 = vrot.slane %v3021, 2
    %v3023 = vadd.f32 %v3021, %v3022
    %v3024 = vrot.slane %v3023, 1
    %v3025 = vadd.f32 %v3023, %v3024
    %v3026 = vrot.slane %v2984, 4
    %v3027 = vadd.f32 %v2984, %v3026
    %v3028 = vrot.slane %v3027, 2
    %v3029 = vadd.f32 %v3027, %v3028
    %v3030 = vrot.slane %v3029, 1
    %v3031 = vadd.f32 %v3029, %v3030
    %v3032 = vrot.slane %v2986, 4
    %v3033 = vadd.f32 %v2986, %v3032
    %v3034 = vrot.slane %v3033, 2
    %v3035 = vadd.f32 %v3033, %v3034
    %v3036 = vrot.slane %v3035, 1
    %v3037 = vadd.f32 %v3035, %v3036
    %v3038 = vmul.f32 %v2995, %v416
    %v3039 = vmul.f32 %v3001, %v416
    %v3040 = vmul.f32 %v3007, %v416
    %v3041 = vmul.f32 %v3013, %v416
    %v3042 = vmul.f32 %v3019, %v416
    %v3043 = vmul.f32 %v3025, %v416
    %v3044 = vmul.f32 %v3031, %v416
    %v3045 = vmul.f32 %v3037, %v416
    %v3046 = vsub.f32 %v2738, %v3038
    %v3047 = vsub.f32 %v2740, %v3039
    %v3048 = vsub.f32 %v2820, %v3040
    %v3049 = vsub.f32 %v2822, %v3041
    %v3050 = vsub.f32 %v2902, %v3042
    %v3051 = vsub.f32 %v2904, %v3043
    %v3052 = vsub.f32 %v2984, %v3044
    %v3053 = vsub.f32 %v2986, %v3045
    %v3054 = vmul.f32 %v3046, %v3046
    %v3055 = vmul.f32 %v3047, %v3047
    %v3056 = vmul.f32 %v3048, %v3048
    %v3057 = vmul.f32 %v3049, %v3049
    %v3058 = vmul.f32 %v3050, %v3050
    %v3059 = vmul.f32 %v3051, %v3051
    %v3060 = vmul.f32 %v3052, %v3052
    %v3061 = vmul.f32 %v3053, %v3053
    %v3062 = vrot.slane %v3054, 4
    %v3063 = vadd.f32 %v3054, %v3062
    %v3064 = vrot.slane %v3063, 2
    %v3065 = vadd.f32 %v3063, %v3064
    %v3066 = vrot.slane %v3065, 1
    %v3067 = vadd.f32 %v3065, %v3066
    %v3068 = vrot.slane %v3055, 4
    %v3069 = vadd.f32 %v3055, %v3068
    %v3070 = vrot.slane %v3069, 2
    %v3071 = vadd.f32 %v3069, %v3070
    %v3072 = vrot.slane %v3071, 1
    %v3073 = vadd.f32 %v3071, %v3072
    %v3074 = vrot.slane %v3056, 4
    %v3075 = vadd.f32 %v3056, %v3074
    %v3076 = vrot.slane %v3075, 2
    %v3077 = vadd.f32 %v3075, %v3076
    %v3078 = vrot.slane %v3077, 1
    %v3079 = vadd.f32 %v3077, %v3078
    %v3080 = vrot.slane %v3057, 4
    %v3081 = vadd.f32 %v3057, %v3080
    %v3082 = vrot.slane %v3081, 2
    %v3083 = vadd.f32 %v3081, %v3082
    %v3084 = vrot.slane %v3083, 1
    %v3085 = vadd.f32 %v3083, %v3084
    %v3086 = vrot.slane %v3058, 4
    %v3087 = vadd.f32 %v3058, %v3086
    %v3088 = vrot.slane %v3087, 2
    %v3089 = vadd.f32 %v3087, %v3088
    %v3090 = vrot.slane %v3089, 1
    %v3091 = vadd.f32 %v3089, %v3090
    %v3092 = vrot.slane %v3059, 4
    %v3093 = vadd.f32 %v3059, %v3092
    %v3094 = vrot.slane %v3093, 2
    %v3095 = vadd.f32 %v3093, %v3094
    %v3096 = vrot.slane %v3095, 1
    %v3097 = vadd.f32 %v3095, %v3096
    %v3098 = vrot.slane %v3060, 4
    %v3099 = vadd.f32 %v3060, %v3098
    %v3100 = vrot.slane %v3099, 2
    %v3101 = vadd.f32 %v3099, %v3100
    %v3102 = vrot.slane %v3101, 1
    %v3103 = vadd.f32 %v3101, %v3102
    %v3104 = vrot.slane %v3061, 4
    %v3105 = vadd.f32 %v3061, %v3104
    %v3106 = vrot.slane %v3105, 2
    %v3107 = vadd.f32 %v3105, %v3106
    %v3108 = vrot.slane %v3107, 1
    %v3109 = vadd.f32 %v3107, %v3108
    %v3110 = vmul.f32 %v3067, %v416
    %v3111 = vmul.f32 %v3073, %v416
    %v3112 = vmul.f32 %v3079, %v416
    %v3113 = vmul.f32 %v3085, %v416
    %v3114 = vmul.f32 %v3091, %v416
    %v3115 = vmul.f32 %v3097, %v416
    %v3116 = vmul.f32 %v3103, %v416
    %v3117 = vmul.f32 %v3109, %v416
    %v3118 = vld [vmem:[%s10] sm:$0xff]
    %v3119 = vadd.f32 %v3110, 0.8
    %v3120 = vadd.f32 %v3111, 0.8
    %v3121 = vadd.f32 %v3112, 0.8
    %v3122 = vadd.f32 %v3113, 0.8
    %v3123 = vadd.f32 %v3114, 0.8
    %v3124 = vadd.f32 %v3115, 0.8
    %v3125 = vadd.f32 %v3116, 0.8
    %v3126 = vadd.f32 %v3117, 0.8
    %v3127 = vrsqrt.pop %v3119
    %v3128 = vrsqrt.pop %v3120
    %v3129 = vrsqrt.pop %v3121
    %v3130 = vrsqrt.pop %v3122
    %v3131 = vrsqrt.pop %v3123
    %v3132 = vrsqrt.pop %v3124
    %v3133 = vrsqrt.pop %v3125
    %v3134 = vrsqrt.pop %v3126
    %v3143 = vcombine.low %v3127, %v3128
    %v3144 = vcombine.low %v3129, %v3130
    %v3145 = vcombine.low %v3131, %v3132
    %v3146 = vcombine.low %v3133, %v3134
    %v3148 = vunpack.c.l.s4 1966171168
    %v3149 = vunpack.c.0.s8 %v3148
    %v3150 = vlaneseq
    %v3151 = vshrl.u32 %v3150, 7
    %v3152 = vsub.s32 %v3149, %v3151
    %v3153 = vrot.slane %v3143, %v3152
    %v3155 = vunpack.c.l.s4 1966171168
    %v3156 = vunpack.c.0.s8 %v3155
    %v3157 = vlaneseq
    %v3158 = vshrl.u32 %v3157, 7
    %v3159 = vsub.s32 %v3156, %v3158
    %v3160 = vrot.slane %v3144, %v3159
    %v3162 = vunpack.c.l.s4 1966171168
    %v3163 = vunpack.c.0.s8 %v3162
    %v3164 = vlaneseq
    %v3165 = vshrl.u32 %v3164, 7
    %v3166 = vsub.s32 %v3163, %v3165
    %v3167 = vrot.slane %v3145, %v3166
    %v3169 = vunpack.c.l.s4 1966171168
    %v3170 = vunpack.c.0.s8 %v3169
    %v3171 = vlaneseq
    %v3172 = vshrl.u32 %v3171, 7
    %v3173 = vsub.s32 %v3170, %v3172
    %v3174 = vrot.slane %v3146, %v3173
    %v3175 = vcombine.low %v3153, %v3160
    %v3176 = vcombine.low %v3167, %v3174
    %v3178 = vunpack.c.l.s4 1966171168
    %v3179 = vunpack.c.0.s8 %v3178
    %v3180 = vlaneseq
    %v3181 = vshrl.u32 %v3180, 7
    %v3182 = vsub.s32 %v3179, %v3181
    %v3183 = vrot.slane %v3175, %v3182
    %v3185 = vunpack.c.l.s4 1966171168
    %v3186 = vunpack.c.0.s8 %v3185
    %v3187 = vlaneseq
    %v3188 = vshrl.u32 %v3187, 7
    %v3189 = vsub.s32 %v3186, %v3188
    %v3190 = vrot.slane %v3176, %v3189
    %v3191 = vcombine.low %v3183, %v3190
    %v3193 = vmul.f32 %v3118, %v3191
    %v3195 = vlaneseq
    %v3196 = vshrl.u32 %v3195, 7
    %v3197 = vsub.s32 0, %v3196
    %v3198 = vrot.slane %v3193, %v3197
    %v3199 = vlaneseq
    %v3200 = vshrl.u32 %v3199, 7
    %v3201 = vsub.s32 1, %v3200
    %v3202 = vrot.slane %v3193, %v3201
    %v3203 = vlaneseq
    %v3204 = vshrl.u32 %v3203, 7
    %v3205 = vsub.s32 2, %v3204
    %v3206 = vrot.slane %v3193, %v3205
    %v3207 = vlaneseq
    %v3208 = vshrl.u32 %v3207, 7
    %v3209 = vsub.s32 3, %v3208
    %v3210 = vrot.slane %v3193, %v3209
    %v3211 = vlaneseq
    %v3212 = vshrl.u32 %v3211, 7
    %v3213 = vsub.s32 4, %v3212
    %v3214 = vrot.slane %v3193, %v3213
    %v3215 = vlaneseq
    %v3216 = vshrl.u32 %v3215, 7
    %v3217 = vsub.s32 5, %v3216
    %v3218 = vrot.slane %v3193, %v3217
    %v3219 = vlaneseq
    %v3220 = vshrl.u32 %v3219, 7
    %v3221 = vsub.s32 6, %v3220
    %v3222 = vrot.slane %v3193, %v3221
    %v3223 = vlaneseq
    %v3224 = vshrl.u32 %v3223, 7
    %v3225 = vsub.s32 7, %v3224
    %v3226 = vrot.slane %v3193, %v3225
    %v3235 = vmul.f32 %v3046, %v3198
    %v3236 = vmul.f32 %v3047, %v3202
    %v3237 = vmul.f32 %v3048, %v3206
    %v3238 = vmul.f32 %v3049, %v3210
    %v3239 = vmul.f32 %v3050, %v3214
    %v3240 = vmul.f32 %v3051, %v3218
    %v3241 = vmul.f32 %v3052, %v3222
    %v3242 = vmul.f32 %v3053, %v3226
    %v3243 = vld [vmem:[%s11] sm:$0xff]
    %v3245 = vlaneseq
    %v3246 = vshrl.u32 %v3245, 7
    %v3247 = vsub.s32 0, %v3246
    %v3248 = vrot.slane %v3243, %v3247
    %v3249 = vlaneseq
    %v3250 = vshrl.u32 %v3249, 7
    %v3251 = vsub.s32 1, %v3250
    %v3252 = vrot.slane %v3243, %v3251
    %v3253 = vlaneseq
    %v3254 = vshrl.u32 %v3253, 7
    %v3255 = vsub.s32 2, %v3254
    %v3256 = vrot.slane %v3243, %v3255
    %v3257 = vlaneseq
    %v3258 = vshrl.u32 %v3257, 7
    %v3259 = vsub.s32 3, %v3258
    %v3260 = vrot.slane %v3243, %v3259
    %v3261 = vlaneseq
    %v3262 = vshrl.u32 %v3261, 7
    %v3263 = vsub.s32 4, %v3262
    %v3264 = vrot.slane %v3243, %v3263
    %v3265 = vlaneseq
    %v3266 = vshrl.u32 %v3265, 7
    %v3267 = vsub.s32 5, %v3266
    %v3268 = vrot.slane %v3243, %v3267
    %v3269 = vlaneseq
    %v3270 = vshrl.u32 %v3269, 7
    %v3271 = vsub.s32 6, %v3270
    %v3272 = vrot.slane %v3243, %v3271
    %v3273 = vlaneseq
    %v3274 = vshrl.u32 %v3273, 7
    %v3275 = vsub.s32 7, %v3274
    %v3276 = vrot.slane %v3243, %v3275
    %v3285 = vadd.f32 %v3235, %v3248
    %v3286 = vadd.f32 %v3236, %v3252
    %v3287 = vadd.f32 %v3237, %v3256
    %v3288 = vadd.f32 %v3238, %v3260
    %v3289 = vadd.f32 %v3239, %v3264
    %v3290 = vadd.f32 %v3240, %v3268
    %v3291 = vadd.f32 %v3241, %v3272
    %v3292 = vadd.f32 %v3242, %v3276
    %v3293 = vmul.f32 %v3285, 0.2
    %v3294 = vmul.f32 %v3286, 0.2
    %v3295 = vmul.f32 %v3287, 0.2
    %v3296 = vmul.f32 %v3288, 0.2
    %v3297 = vmul.f32 %v3289, 0.2
    %v3298 = vmul.f32 %v3290, 0.2
    %v3299 = vmul.f32 %v3291, 0.2
    %v3300 = vmul.f32 %v3292, 0.2
    %v3301 = vmax.f32 %v3285, %v3293
    %v3302 = vmax.f32 %v3286, %v3294
    %v3303 = vmax.f32 %v3287, %v3295
    %v3304 = vmax.f32 %v3288, %v3296
    %v3305 = vmax.f32 %v3289, %v3297
    %v3306 = vmax.f32 %v3290, %v3298
    %v3307 = vmax.f32 %v3291, %v3299
    %v3308 = vmax.f32 %v3292, %v3300
    %v3309 = vpack.c.bf16 %v3301, %v3301
    %v3310 = vpack.c.bf16 %v3302, %v3302
    %v3311 = vpack.c.bf16 %v3303, %v3303
    %v3312 = vpack.c.bf16 %v3304, %v3304
    %v3313 = vpack.c.bf16 %v3305, %v3305
    %v3314 = vpack.c.bf16 %v3306, %v3306
    %v3315 = vpack.c.bf16 %v3307, %v3307
    %v3316 = vpack.c.bf16 %v3308, %v3308
    %v3317 = vld [vmem:[#allocation13] sm:$0xff]
    %v3318 = vld [vmem:[#allocation13 + $0x8] sm:$0xff]
    %v3319 = vld [vmem:[#allocation13 + $0x10] sm:$0xff]
    %v3320 = vld [vmem:[#allocation13 + $0x18] sm:$0xff]
    %v3321 = vld [vmem:[#allocation13 + $0x20] sm:$0xff]
    %v3322 = vld [vmem:[#allocation13 + $0x28] sm:$0xff]
    %v3323 = vld [vmem:[#allocation13 + $0x30] sm:$0xff]
    %v3324 = vld [vmem:[#allocation13 + $0x38] sm:$0xff]
    %v3325 = vld [vmem:[#allocation13 + $0x40] sm:$0xff]
    %v3326 = vld [vmem:[#allocation13 + $0x48] sm:$0xff]
    %v3327 = vld [vmem:[#allocation13 + $0x50] sm:$0xff]
    %v3328 = vld [vmem:[#allocation13 + $0x58] sm:$0xff]
    %v3329 = vld [vmem:[#allocation13 + $0x60] sm:$0xff]
    %v3330 = vld [vmem:[#allocation13 + $0x68] sm:$0xff]
    %v3331 = vld [vmem:[#allocation13 + $0x70] sm:$0xff]
    %v3332 = vld [vmem:[#allocation13 + $0x78] sm:$0xff]
    %v3333 = vld [vmem:[#allocation13 + $0x80] sm:$0xff]
    %v3334 = vld [vmem:[#allocation13 + $0x88] sm:$0xff]
    %v3335 = vld [vmem:[#allocation13 + $0x90] sm:$0xff]
    %v3336 = vld [vmem:[#allocation13 + $0x98] sm:$0xff]
    %v3337 = vld [vmem:[#allocation13 + $0xa0] sm:$0xff]
    %v3338 = vld [vmem:[#allocation13 + $0xa8] sm:$0xff]
    %v3339 = vld [vmem:[#allocation13 + $0xb0] sm:$0xff]
    %v3340 = vld [vmem:[#allocation13 + $0xb8] sm:$0xff]
    %v3341 = vld [vmem:[#allocation13 + $0xc0] sm:$0xff]
    %v3342 = vld [vmem:[#allocation13 + $0xc8] sm:$0xff]
    %v3343 = vld [vmem:[#allocation13 + $0xd0] sm:$0xff]
    %v3344 = vld [vmem:[#allocation13 + $0xd8] sm:$0xff]
    %v3345 = vld [vmem:[#allocation13 + $0xe0] sm:$0xff]
    %v3346 = vld [vmem:[#allocation13 + $0xe8] sm:$0xff]
    %v3347 = vld [vmem:[#allocation13 + $0xf0] sm:$0xff]
    %v3348 = vld [vmem:[#allocation13 + $0xf8] sm:$0xff]
    %v3349 = vld [vmem:[#allocation13 + $0x100] sm:$0xff]
    %v3350 = vld [vmem:[#allocation13 + $0x108] sm:$0xff]
    %v3351 = vld [vmem:[#allocation13 + $0x110] sm:$0xff]
    %v3352 = vld [vmem:[#allocation13 + $0x118] sm:$0xff]
    %v3353 = vld [vmem:[#allocation13 + $0x120] sm:$0xff]
    %v3354 = vld [vmem:[#allocation13 + $0x128] sm:$0xff]
    %v3355 = vld [vmem:[#allocation13 + $0x130] sm:$0xff]
    %v3356 = vld [vmem:[#allocation13 + $0x138] sm:$0xff]
    %v3357 = vld [vmem:[#allocation13 + $0x140] sm:$0xff]
    %v3358 = vld [vmem:[#allocation13 + $0x148] sm:$0xff]
    %v3359 = vld [vmem:[#allocation13 + $0x150] sm:$0xff]
    %v3360 = vld [vmem:[#allocation13 + $0x158] sm:$0xff]
    %v3361 = vld [vmem:[#allocation13 + $0x160] sm:$0xff]
    %v3362 = vld [vmem:[#allocation13 + $0x168] sm:$0xff]
    %v3363 = vld [vmem:[#allocation13 + $0x170] sm:$0xff]
    %v3364 = vld [vmem:[#allocation13 + $0x178] sm:$0xff]
    %v3365 = vld [vmem:[#allocation13 + $0x180] sm:$0xff]
    %v3366 = vld [vmem:[#allocation13 + $0x188] sm:$0xff]
    %v3367 = vld [vmem:[#allocation13 + $0x190] sm:$0xff]
    %v3368 = vld [vmem:[#allocation13 + $0x198] sm:$0xff]
    %v3369 = vld [vmem:[#allocation13 + $0x1a0] sm:$0xff]
    %v3370 = vld [vmem:[#allocation13 + $0x1a8] sm:$0xff]
    %v3371 = vld [vmem:[#allocation13 + $0x1b0] sm:$0xff]
    %v3372 = vld [vmem:[#allocation13 + $0x1b8] sm:$0xff]
    %v3373 = vld [vmem:[#allocation13 + $0x1c0] sm:$0xff]
    %v3374 = vld [vmem:[#allocation13 + $0x1c8] sm:$0xff]
    %v3375 = vld [vmem:[#allocation13 + $0x1d0] sm:$0xff]
    %v3376 = vld [vmem:[#allocation13 + $0x1d8] sm:$0xff]
    %v3377 = vld [vmem:[#allocation13 + $0x1e0] sm:$0xff]
    %v3378 = vld [vmem:[#allocation13 + $0x1e8] sm:$0xff]
    %v3379 = vld [vmem:[#allocation13 + $0x1f0] sm:$0xff]
    %v3380 = vld [vmem:[#allocation13 + $0x1f8] sm:$0xff]
    %v3381 = vld [vmem:[#allocation13 + $0x200] sm:$0xff]
    %v3382 = vld [vmem:[#allocation13 + $0x208] sm:$0xff]
    %v3383 = vld [vmem:[#allocation13 + $0x210] sm:$0xff]
    %v3384 = vld [vmem:[#allocation13 + $0x218] sm:$0xff]
    %v3385 = vld [vmem:[#allocation13 + $0x220] sm:$0xff]
    %v3386 = vld [vmem:[#allocation13 + $0x228] sm:$0xff]
    %v3387 = vld [vmem:[#allocation13 + $0x230] sm:$0xff]
    %v3388 = vld [vmem:[#allocation13 + $0x238] sm:$0xff]
    %v3389 = vld [vmem:[#allocation13 + $0x240] sm:$0xff]
    %v3390 = vld [vmem:[#allocation13 + $0x248] sm:$0xff]
    %v3391 = vld [vmem:[#allocation13 + $0x250] sm:$0xff]
    %v3392 = vld [vmem:[#allocation13 + $0x258] sm:$0xff]
    %v3393 = vld [vmem:[#allocation13 + $0x260] sm:$0xff]
    %v3394 = vld [vmem:[#allocation13 + $0x268] sm:$0xff]
    %v3395 = vld [vmem:[#allocation13 + $0x270] sm:$0xff]
    %v3396 = vld [vmem:[#allocation13 + $0x278] sm:$0xff]
    %v3397 = vld [vmem:[#allocation13 + $0x280] sm:$0xff]
    %v3398 = vld [vmem:[#allocation13 + $0x288] sm:$0xff]
    %v3399 = vld [vmem:[#allocation13 + $0x290] sm:$0xff]
    %v3400 = vld [vmem:[#allocation13 + $0x298] sm:$0xff]
    %v3401 = vld [vmem:[#allocation13 + $0x2a0] sm:$0xff]
    %v3402 = vld [vmem:[#allocation13 + $0x2a8] sm:$0xff]
    %v3403 = vld [vmem:[#allocation13 + $0x2b0] sm:$0xff]
    %v3404 = vld [vmem:[#allocation13 + $0x2b8] sm:$0xff]
    %v3405 = vld [vmem:[#allocation13 + $0x2c0] sm:$0xff]
    %v3406 = vld [vmem:[#allocation13 + $0x2c8] sm:$0xff]
    %v3407 = vld [vmem:[#allocation13 + $0x2d0] sm:$0xff]
    %v3408 = vld [vmem:[#allocation13 + $0x2d8] sm:$0xff]
    %v3409 = vld [vmem:[#allocation13 + $0x2e0] sm:$0xff]
    %v3410 = vld [vmem:[#allocation13 + $0x2e8] sm:$0xff]
    %v3411 = vld [vmem:[#allocation13 + $0x2f0] sm:$0xff]
    %v3412 = vld [vmem:[#allocation13 + $0x2f8] sm:$0xff]
    %v3413 = vld [vmem:[#allocation13 + $0x300] sm:$0xff]
    %v3414 = vld [vmem:[#allocation13 + $0x308] sm:$0xff]
    %v3415 = vld [vmem:[#allocation13 + $0x310] sm:$0xff]
    %v3416 = vld [vmem:[#allocation13 + $0x318] sm:$0xff]
    %v3417 = vld [vmem:[#allocation13 + $0x320] sm:$0xff]
    %v3418 = vld [vmem:[#allocation13 + $0x328] sm:$0xff]
    %v3419 = vld [vmem:[#allocation13 + $0x330] sm:$0xff]
    %v3420 = vld [vmem:[#allocation13 + $0x338] sm:$0xff]
    %v3421 = vld [vmem:[#allocation13 + $0x340] sm:$0xff]
    %v3422 = vld [vmem:[#allocation13 + $0x348] sm:$0xff]
    %v3423 = vld [vmem:[#allocation13 + $0x350] sm:$0xff]
    %v3424 = vld [vmem:[#allocation13 + $0x358] sm:$0xff]
    %v3425 = vld [vmem:[#allocation13 + $0x360] sm:$0xff]
    %v3426 = vld [vmem:[#allocation13 + $0x368] sm:$0xff]
    %v3427 = vld [vmem:[#allocation13 + $0x370] sm:$0xff]
    %v3428 = vld [vmem:[#allocation13 + $0x378] sm:$0xff]
    %v3429 = vld [vmem:[#allocation13 + $0x380] sm:$0xff]
    %v3430 = vld [vmem:[#allocation13 + $0x388] sm:$0xff]
    %v3431 = vld [vmem:[#allocation13 + $0x390] sm:$0xff]
    %v3432 = vld [vmem:[#allocation13 + $0x398] sm:$0xff]
    %v3433 = vld [vmem:[#allocation13 + $0x3a0] sm:$0xff]
    %v3434 = vld [vmem:[#allocation13 + $0x3a8] sm:$0xff]
    %v3435 = vld [vmem:[#allocation13 + $0x3b0] sm:$0xff]
    %v3436 = vld [vmem:[#allocation13 + $0x3b8] sm:$0xff]
    %v3437 = vld [vmem:[#allocation13 + $0x3c0] sm:$0xff]
    %v3438 = vld [vmem:[#allocation13 + $0x3c8] sm:$0xff]
    %v3439 = vld [vmem:[#allocation13 + $0x3d0] sm:$0xff]
    %v3440 = vld [vmem:[#allocation13 + $0x3d8] sm:$0xff]
    %v3441 = vld [vmem:[#allocation13 + $0x3e0] sm:$0xff]
    %v3442 = vld [vmem:[#allocation13 + $0x3e8] sm:$0xff]
    %v3443 = vld [vmem:[#allocation13 + $0x3f0] sm:$0xff]
    %v3444 = vld [vmem:[#allocation13 + $0x3f8] sm:$0xff]
    %v3445 = vld [vmem:[#allocation14] sm:$0x3]
    %v3447 = vlaneseq
    %v3448 = vshrl.u32 %v3447, 7
    %v3449 = vsub.s32 0, %v3448
    %v3450 = vrot.slane %v3445, %v3449
    %v3451 = vlaneseq
    %v3452 = vshrl.u32 %v3451, 7
    %v3453 = vsub.s32 1, %v3452
    %v3454 = vrot.slane %v3445, %v3453
    %v3585 = vunpack.c.l.b16 %v3317
    %v3586 = vunpack.c.h.b16 %v3317
    %v3587 = vunpack.c.l.b16 %v3318
    %v3588 = vunpack.c.h.b16 %v3318
    %v3589 = vunpack.c.l.b16 %v3319
    %v3590 = vunpack.c.h.b16 %v3319
    %v3591 = vunpack.c.l.b16 %v3320
    %v3592 = vunpack.c.h.b16 %v3320
    %v3593 = vunpack.c.l.b16 %v3321
    %v3594 = vunpack.c.h.b16 %v3321
    %v3595 = vunpack.c.l.b16 %v3322
    %v3596 = vunpack.c.h.b16 %v3322
    %v3597 = vunpack.c.l.b16 %v3323
    %v3598 = vunpack.c.h.b16 %v3323
    %v3599 = vunpack.c.l.b16 %v3324
    %v3600 = vunpack.c.h.b16 %v3324
    %v3601 = vunpack.c.l.b16 %v3325
    %v3602 = vunpack.c.h.b16 %v3325
    %v3603 = vunpack.c.l.b16 %v3326
    %v3604 = vunpack.c.h.b16 %v3326
    %v3605 = vunpack.c.l.b16 %v3327
    %v3606 = vunpack.c.h.b16 %v3327
    %v3607 = vunpack.c.l.b16 %v3328
    %v3608 = vunpack.c.h.b16 %v3328
    %v3609 = vunpack.c.l.b16 %v3329
    %v3610 = vunpack.c.h.b16 %v3329
    %v3611 = vunpack.c.l.b16 %v3330
    %v3612 = vunpack.c.h.b16 %v3330
    %v3613 = vunpack.c.l.b16 %v3331
    %v3614 = vunpack.c.h.b16 %v3331
    %v3615 = vunpack.c.l.b16 %v3332
    %v3616 = vunpack.c.h.b16 %v3332
    %v3617 = vunpack.c.l.b16 %v3333
    %v3618 = vunpack.c.h.b16 %v3333
    %v3619 = vunpack.c.l.b16 %v3334
    %v3620 = vunpack.c.h.b16 %v3334
    %v3621 = vunpack.c.l.b16 %v3335
    %v3622 = vunpack.c.h.b16 %v3335
    %v3623 = vunpack.c.l.b16 %v3336
    %v3624 = vunpack.c.h.b16 %v3336
    %v3625 = vunpack.c.l.b16 %v3337
    %v3626 = vunpack.c.h.b16 %v3337
    %v3627 = vunpack.c.l.b16 %v3338
    %v3628 = vunpack.c.h.b16 %v3338
    %v3629 = vunpack.c.l.b16 %v3339
    %v3630 = vunpack.c.h.b16 %v3339
    %v3631 = vunpack.c.l.b16 %v3340
    %v3632 = vunpack.c.h.b16 %v3340
    %v3633 = vunpack.c.l.b16 %v3341
    %v3634 = vunpack.c.h.b16 %v3341
    %v3635 = vunpack.c.l.b16 %v3342
    %v3636 = vunpack.c.h.b16 %v3342
    %v3637 = vunpack.c.l.b16 %v3343
    %v3638 = vunpack.c.h.b16 %v3343
    %v3639 = vunpack.c.l.b16 %v3344
    %v3640 = vunpack.c.h.b16 %v3344
    %v3641 = vunpack.c.l.b16 %v3345
    %v3642 = vunpack.c.h.b16 %v3345
    %v3643 = vunpack.c.l.b16 %v3346
    %v3644 = vunpack.c.h.b16 %v3346
    %v3645 = vunpack.c.l.b16 %v3347
    %v3646 = vunpack.c.h.b16 %v3347
    %v3647 = vunpack.c.l.b16 %v3348
    %v3648 = vunpack.c.h.b16 %v3348
    %v3649 = vunpack.c.l.b16 %v3349
    %v3650 = vunpack.c.h.b16 %v3349
    %v3651 = vunpack.c.l.b16 %v3350
    %v3652 = vunpack.c.h.b16 %v3350
    %v3653 = vunpack.c.l.b16 %v3351
    %v3654 = vunpack.c.h.b16 %v3351
    %v3655 = vunpack.c.l.b16 %v3352
    %v3656 = vunpack.c.h.b16 %v3352
    %v3657 = vunpack.c.l.b16 %v3353
    %v3658 = vunpack.c.h.b16 %v3353
    %v3659 = vunpack.c.l.b16 %v3354
    %v3660 = vunpack.c.h.b16 %v3354
    %v3661 = vunpack.c.l.b16 %v3355
    %v3662 = vunpack.c.h.b16 %v3355
    %v3663 = vunpack.c.l.b16 %v3356
    %v3664 = vunpack.c.h.b16 %v3356
    %v3665 = vunpack.c.l.b16 %v3357
    %v3666 = vunpack.c.h.b16 %v3357
    %v3667 = vunpack.c.l.b16 %v3358
    %v3668 = vunpack.c.h.b16 %v3358
    %v3669 = vunpack.c.l.b16 %v3359
    %v3670 = vunpack.c.h.b16 %v3359
    %v3671 = vunpack.c.l.b16 %v3360
    %v3672 = vunpack.c.h.b16 %v3360
    %v3673 = vunpack.c.l.b16 %v3361
    %v3674 = vunpack.c.h.b16 %v3361
    %v3675 = vunpack.c.l.b16 %v3362
    %v3676 = vunpack.c.h.b16 %v3362
    %v3677 = vunpack.c.l.b16 %v3363
    %v3678 = vunpack.c.h.b16 %v3363
    %v3679 = vunpack.c.l.b16 %v3364
    %v3680 = vunpack.c.h.b16 %v3364
    %v3681 = vunpack.c.l.b16 %v3365
    %v3682 = vunpack.c.h.b16 %v3365
    %v3683 = vunpack.c.l.b16 %v3366
    %v3684 = vunpack.c.h.b16 %v3366
    %v3685 = vunpack.c.l.b16 %v3367
    %v3686 = vunpack.c.h.b16 %v3367
    %v3687 = vunpack.c.l.b16 %v3368
    %v3688 = vunpack.c.h.b16 %v3368
    %v3689 = vunpack.c.l.b16 %v3369
    %v3690 = vunpack.c.h.b16 %v3369
    %v3691 = vunpack.c.l.b16 %v3370
    %v3692 = vunpack.c.h.b16 %v3370
    %v3693 = vunpack.c.l.b16 %v3371
    %v3694 = vunpack.c.h.b16 %v3371
    %v3695 = vunpack.c.l.b16 %v3372
    %v3696 = vunpack.c.h.b16 %v3372
    %v3697 = vunpack.c.l.b16 %v3373
    %v3698 = vunpack.c.h.b16 %v3373
    %v3699 = vunpack.c.l.b16 %v3374
    %v3700 = vunpack.c.h.b16 %v3374
    %v3701 = vunpack.c.l.b16 %v3375
    %v3702 = vunpack.c.h.b16 %v3375
    %v3703 = vunpack.c.l.b16 %v3376
    %v3704 = vunpack.c.h.b16 %v3376
    %v3705 = vunpack.c.l.b16 %v3377
    %v3706 = vunpack.c.h.b16 %v3377
    %v3707 = vunpack.c.l.b16 %v3378
    %v3708 = vunpack.c.h.b16 %v3378
    %v3709 = vunpack.c.l.b16 %v3379
    %v3710 = vunpack.c.h.b16 %v3379
    %v3711 = vunpack.c.l.b16 %v3380
    %v3712 = vunpack.c.h.b16 %v3380
    %v3713 = vunpack.c.l.b16 %v3381
    %v3714 = vunpack.c.h.b16 %v3381
    %v3715 = vunpack.c.l.b16 %v3382
    %v3716 = vunpack.c.h.b16 %v3382
    %v3717 = vunpack.c.l.b16 %v3383
    %v3718 = vunpack.c.h.b16 %v3383
    %v3719 = vunpack.c.l.b16 %v3384
    %v3720 = vunpack.c.h.b16 %v3384
    %v3721 = vunpack.c.l.b16 %v3385
    %v3722 = vunpack.c.h.b16 %v3385
    %v3723 = vunpack.c.l.b16 %v3386
    %v3724 = vunpack.c.h.b16 %v3386
    %v3725 = vunpack.c.l.b16 %v3387
    %v3726 = vunpack.c.h.b16 %v3387
    %v3727 = vunpack.c.l.b16 %v3388
    %v3728 = vunpack.c.h.b16 %v3388
    %v3729 = vunpack.c.l.b16 %v3389
    %v3730 = vunpack.c.h.b16 %v3389
    %v3731 = vunpack.c.l.b16 %v3390
    %v3732 = vunpack.c.h.b16 %v3390
    %v3733 = vunpack.c.l.b16 %v3391
    %v3734 = vunpack.c.h.b16 %v3391
    %v3735 = vunpack.c.l.b16 %v3392
    %v3736 = vunpack.c.h.b16 %v3392
    %v3737 = vunpack.c.l.b16 %v3393
    %v3738 = vunpack.c.h.b16 %v3393
    %v3739 = vunpack.c.l.b16 %v3394
    %v3740 = vunpack.c.h.b16 %v3394
    %v3741 = vunpack.c.l.b16 %v3395
    %v3742 = vunpack.c.h.b16 %v3395
    %v3743 = vunpack.c.l.b16 %v3396
    %v3744 = vunpack.c.h.b16 %v3396
    %v3745 = vunpack.c.l.b16 %v3397
    %v3746 = vunpack.c.h.b16 %v3397
    %v3747 = vunpack.c.l.b16 %v3398
    %v3748 = vunpack.c.h.b16 %v3398
    %v3749 = vunpack.c.l.b16 %v3399
    %v3750 = vunpack.c.h.b16 %v3399
    %v3751 = vunpack.c.l.b16 %v3400
    %v3752 = vunpack.c.h.b16 %v3400
    %v3753 = vunpack.c.l.b16 %v3401
    %v3754 = vunpack.c.h.b16 %v3401
    %v3755 = vunpack.c.l.b16 %v3402
    %v3756 = vunpack.c.h.b16 %v3402
    %v3757 = vunpack.c.l.b16 %v3403
    %v3758 = vunpack.c.h.b16 %v3403
    %v3759 = vunpack.c.l.b16 %v3404
    %v3760 = vunpack.c.h.b16 %v3404
    %v3761 = vunpack.c.l.b16 %v3405
    %v3762 = vunpack.c.h.b16 %v3405
    %v3763 = vunpack.c.l.b16 %v3406
    %v3764 = vunpack.c.h.b16 %v3406
    %v3765 = vunpack.c.l.b16 %v3407
    %v3766 = vunpack.c.h.b16 %v3407
    %v3767 = vunpack.c.l.b16 %v3408
    %v3768 = vunpack.c.h.b16 %v3408
    %v3769 = vunpack.c.l.b16 %v3409
    %v3770 = vunpack.c.h.b16 %v3409
    %v3771 = vunpack.c.l.b16 %v3410
    %v3772 = vunpack.c.h.b16 %v3410
    %v3773 = vunpack.c.l.b16 %v3411
    %v3774 = vunpack.c.h.b16 %v3411
    %v3775 = vunpack.c.l.b16 %v3412
    %v3776 = vunpack.c.h.b16 %v3412
    %v3777 = vunpack.c.l.b16 %v3413
    %v3778 = vunpack.c.h.b16 %v3413
    %v3779 = vunpack.c.l.b16 %v3414
    %v3780 = vunpack.c.h.b16 %v3414
    %v3781 = vunpack.c.l.b16 %v3415
    %v3782 = vunpack.c.h.b16 %v3415
    %v3783 = vunpack.c.l.b16 %v3416
    %v3784 = vunpack.c.h.b16 %v3416
    %v3785 = vunpack.c.l.b16 %v3417
    %v3786 = vunpack.c.h.b16 %v3417
    %v3787 = vunpack.c.l.b16 %v3418
    %v3788 = vunpack.c.h.b16 %v3418
    %v3789 = vunpack.c.l.b16 %v3419
    %v3790 = vunpack.c.h.b16 %v3419
    %v3791 = vunpack.c.l.b16 %v3420
    %v3792 = vunpack.c.h.b16 %v3420
    %v3793 = vunpack.c.l.b16 %v3421
    %v3794 = vunpack.c.h.b16 %v3421
    %v3795 = vunpack.c.l.b16 %v3422
    %v3796 = vunpack.c.h.b16 %v3422
    %v3797 = vunpack.c.l.b16 %v3423
    %v3798 = vunpack.c.h.b16 %v3423
    %v3799 = vunpack.c.l.b16 %v3424
    %v3800 = vunpack.c.h.b16 %v3424
    %v3801 = vunpack.c.l.b16 %v3425
    %v3802 = vunpack.c.h.b16 %v3425
    %v3803 = vunpack.c.l.b16 %v3426
    %v3804 = vunpack.c.h.b16 %v3426
    %v3805 = vunpack.c.l.b16 %v3427
    %v3806 = vunpack.c.h.b16 %v3427
    %v3807 = vunpack.c.l.b16 %v3428
    %v3808 = vunpack.c.h.b16 %v3428
    %v3809 = vunpack.c.l.b16 %v3429
    %v3810 = vunpack.c.h.b16 %v3429
    %v3811 = vunpack.c.l.b16 %v3430
    %v3812 = vunpack.c.h.b16 %v3430
    %v3813 = vunpack.c.l.b16 %v3431
    %v3814 = vunpack.c.h.b16 %v3431
    %v3815 = vunpack.c.l.b16 %v3432
    %v3816 = vunpack.c.h.b16 %v3432
    %v3817 = vunpack.c.l.b16 %v3433
    %v3818 = vunpack.c.h.b16 %v3433
    %v3819 = vunpack.c.l.b16 %v3434
    %v3820 = vunpack.c.h.b16 %v3434
    %v3821 = vunpack.c.l.b16 %v3435
    %v3822 = vunpack.c.h.b16 %v3435
    %v3823 = vunpack.c.l.b16 %v3436
    %v3824 = vunpack.c.h.b16 %v3436
    %v3825 = vunpack.c.l.b16 %v3437
    %v3826 = vunpack.c.h.b16 %v3437
    %v3827 = vunpack.c.l.b16 %v3438
    %v3828 = vunpack.c.h.b16 %v3438
    %v3829 = vunpack.c.l.b16 %v3439
    %v3830 = vunpack.c.h.b16 %v3439
    %v3831 = vunpack.c.l.b16 %v3440
    %v3832 = vunpack.c.h.b16 %v3440
    %v3833 = vunpack.c.l.b16 %v3441
    %v3834 = vunpack.c.h.b16 %v3441
    %v3835 = vunpack.c.l.b16 %v3442
    %v3836 = vunpack.c.h.b16 %v3442
    %v3837 = vunpack.c.l.b16 %v3443
    %v3838 = vunpack.c.h.b16 %v3443
    %v3839 = vunpack.c.l.b16 %v3444
    %v3840 = vunpack.c.h.b16 %v3444
    %v3841 = vpack.c.b16 %v3587, %v3585
    %v3842 = vpack.c.b16 %v3588, %v3586
    %v3843 = vpack.c.b16 %v3591, %v3589
    %v3844 = vpack.c.b16 %v3592, %v3590
    %v3845 = vpack.c.b16 %v3595, %v3593
    %v3846 = vpack.c.b16 %v3596, %v3594
    %v3847 = vpack.c.b16 %v3599, %v3597
    %v3848 = vpack.c.b16 %v3600, %v3598
    %v3849 = vpack.c.b16 %v3603, %v3601
    %v3850 = vpack.c.b16 %v3604, %v3602
    %v3851 = vpack.c.b16 %v3607, %v3605
    %v3852 = vpack.c.b16 %v3608, %v3606
    %v3853 = vpack.c.b16 %v3611, %v3609
    %v3854 = vpack.c.b16 %v3612, %v3610
    %v3855 = vpack.c.b16 %v3615, %v3613
    %v3856 = vpack.c.b16 %v3616, %v3614
    %v3857 = vpack.c.b16 %v3619, %v3617
    %v3858 = vpack.c.b16 %v3620, %v3618
    %v3859 = vpack.c.b16 %v3623, %v3621
    %v3860 = vpack.c.b16 %v3624, %v3622
    %v3861 = vpack.c.b16 %v3627, %v3625
    %v3862 = vpack.c.b16 %v3628, %v3626
    %v3863 = vpack.c.b16 %v3631, %v3629
    %v3864 = vpack.c.b16 %v3632, %v3630
    %v3865 = vpack.c.b16 %v3635, %v3633
    %v3866 = vpack.c.b16 %v3636, %v3634
    %v3867 = vpack.c.b16 %v3639, %v3637
    %v3868 = vpack.c.b16 %v3640, %v3638
    %v3869 = vpack.c.b16 %v3643, %v3641
    %v3870 = vpack.c.b16 %v3644, %v3642
    %v3871 = vpack.c.b16 %v3647, %v3645
    %v3872 = vpack.c.b16 %v3648, %v3646
    %v3873 = vpack.c.b16 %v3651, %v3649
    %v3874 = vpack.c.b16 %v3652, %v3650
    %v3875 = vpack.c.b16 %v3655, %v3653
    %v3876 = vpack.c.b16 %v3656, %v3654
    %v3877 = vpack.c.b16 %v3659, %v3657
    %v3878 = vpack.c.b16 %v3660, %v3658
    %v3879 = vpack.c.b16 %v3663, %v3661
    %v3880 = vpack.c.b16 %v3664, %v3662
    %v3881 = vpack.c.b16 %v3667, %v3665
    %v3882 = vpack.c.b16 %v3668, %v3666
    %v3883 = vpack.c.b16 %v3671, %v3669
    %v3884 = vpack.c.b16 %v3672, %v3670
    %v3885 = vpack.c.b16 %v3675, %v3673
    %v3886 = vpack.c.b16 %v3676, %v3674
    %v3887 = vpack.c.b16 %v3679, %v3677
    %v3888 = vpack.c.b16 %v3680, %v3678
    %v3889 = vpack.c.b16 %v3683, %v3681
    %v3890 = vpack.c.b16 %v3684, %v3682
    %v3891 = vpack.c.b16 %v3687, %v3685
    %v3892 = vpack.c.b16 %v3688, %v3686
    %v3893 = vpack.c.b16 %v3691, %v3689
    %v3894 = vpack.c.b16 %v3692, %v3690
    %v3895 = vpack.c.b16 %v3695, %v3693
    %v3896 = vpack.c.b16 %v3696, %v3694
    %v3897 = vpack.c.b16 %v3699, %v3697
    %v3898 = vpack.c.b16 %v3700, %v3698
    %v3899 = vpack.c.b16 %v3703, %v3701
    %v3900 = vpack.c.b16 %v3704, %v3702
    %v3901 = vpack.c.b16 %v3707, %v3705
    %v3902 = vpack.c.b16 %v3708, %v3706
    %v3903 = vpack.c.b16 %v3711, %v3709
    %v3904 = vpack.c.b16 %v3712, %v3710
    %v3905 = vpack.c.b16 %v3715, %v3713
    %v3906 = vpack.c.b16 %v3716, %v3714
    %v3907 = vpack.c.b16 %v3719, %v3717
    %v3908 = vpack.c.b16 %v3720, %v3718
    %v3909 = vpack.c.b16 %v3723, %v3721
    %v3910 = vpack.c.b16 %v3724, %v3722
    %v3911 = vpack.c.b16 %v3727, %v3725
    %v3912 = vpack.c.b16 %v3728, %v3726
    %v3913 = vpack.c.b16 %v3731, %v3729
    %v3914 = vpack.c.b16 %v3732, %v3730
    %v3915 = vpack.c.b16 %v3735, %v3733
    %v3916 = vpack.c.b16 %v3736, %v3734
    %v3917 = vpack.c.b16 %v3739, %v3737
    %v3918 = vpack.c.b16 %v3740, %v3738
    %v3919 = vpack.c.b16 %v3743, %v3741
    %v3920 = vpack.c.b16 %v3744, %v3742
    %v3921 = vpack.c.b16 %v3747, %v3745
    %v3922 = vpack.c.b16 %v3748, %v3746
    %v3923 = vpack.c.b16 %v3751, %v3749
    %v3924 = vpack.c.b16 %v3752, %v3750
    %v3925 = vpack.c.b16 %v3755, %v3753
    %v3926 = vpack.c.b16 %v3756, %v3754
    %v3927 = vpack.c.b16 %v3759, %v3757
    %v3928 = vpack.c.b16 %v3760, %v3758
    %v3929 = vpack.c.b16 %v3763, %v3761
    %v3930 = vpack.c.b16 %v3764, %v3762
    %v3931 = vpack.c.b16 %v3767, %v3765
    %v3932 = vpack.c.b16 %v3768, %v3766
    %v3933 = vpack.c.b16 %v3771, %v3769
    %v3934 = vpack.c.b16 %v3772, %v3770
    %v3935 = vpack.c.b16 %v3775, %v3773
    %v3936 = vpack.c.b16 %v3776, %v3774
    %v3937 = vpack.c.b16 %v3779, %v3777
    %v3938 = vpack.c.b16 %v3780, %v3778
    %v3939 = vpack.c.b16 %v3783, %v3781
    %v3940 = vpack.c.b16 %v3784, %v3782
    %v3941 = vpack.c.b16 %v3787, %v3785
    %v3942 = vpack.c.b16 %v3788, %v3786
    %v3943 = vpack.c.b16 %v3791, %v3789
    %v3944 = vpack.c.b16 %v3792, %v3790
    %v3945 = vpack.c.b16 %v3795, %v3793
    %v3946 = vpack.c.b16 %v3796, %v3794
    %v3947 = vpack.c.b16 %v3799, %v3797
    %v3948 = vpack.c.b16 %v3800, %v3798
    %v3949 = vpack.c.b16 %v3803, %v3801
    %v3950 = vpack.c.b16 %v3804, %v3802
    %v3951 = vpack.c.b16 %v3807, %v3805
    %v3952 = vpack.c.b16 %v3808, %v3806
    %v3953 = vpack.c.b16 %v3811, %v3809
    %v3954 = vpack.c.b16 %v3812, %v3810
    %v3955 = vpack.c.b16 %v3815, %v3813
    %v3956 = vpack.c.b16 %v3816, %v3814
    %v3957 = vpack.c.b16 %v3819, %v3817
    %v3958 = vpack.c.b16 %v3820, %v3818
    %v3959 = vpack.c.b16 %v3823, %v3821
    %v3960 = vpack.c.b16 %v3824, %v3822
    %v3961 = vpack.c.b16 %v3827, %v3825
    %v3962 = vpack.c.b16 %v3828, %v3826
    %v3963 = vpack.c.b16 %v3831, %v3829
    %v3964 = vpack.c.b16 %v3832, %v3830
    %v3965 = vpack.c.b16 %v3835, %v3833
    %v3966 = vpack.c.b16 %v3836, %v3834
    %v3967 = vpack.c.b16 %v3839, %v3837
    %v3968 = vpack.c.b16 %v3840, %v3838
    %4097 = vmatprep.subr.bf16.mxu0 %v3856
    %4098 = vmatpush1.bf16.msra.mxu0 %v3855
    %4099 = vmatprep.subr.bf16.mxu0 %v3854
    %4100 = vmatpush1.bf16.msra.mxu0 %v3853
    %4101 = vmatprep.subr.bf16.mxu0 %v3852
    %4102 = vmatpush1.bf16.msra.mxu0 %v3851
    %4103 = vmatprep.subr.bf16.mxu0 %v3850
    %4104 = vmatpush1.bf16.msra.mxu0 %v3849
    %4105 = vmatprep.subr.bf16.mxu0 %v3848
    %4106 = vmatpush1.bf16.msra.mxu0 %v3847
    %4107 = vmatprep.subr.bf16.mxu0 %v3846
    %4108 = vmatpush1.bf16.msra.mxu0 %v3845
    %4109 = vmatprep.subr.bf16.mxu0 %v3844
    %4110 = vmatpush1.bf16.msra.mxu0 %v3843
    %4111 = vmatprep.subr.bf16.mxu0 %v3842
    %4112 = vmatpush1.bf16.msra.mxu0 %v3841
    %4113 = vmatprep.subr.bf16.mxu0 %v3872
    %4114 = vmatpush2.bf16.msra.mxu0 %v3871
    %4115 = vmatprep.subr.bf16.mxu0 %v3870
    %4116 = vmatpush2.bf16.msra.mxu0 %v3869
    %4117 = vmatprep.subr.bf16.mxu0 %v3868
    %4118 = vmatpush2.bf16.msra.mxu0 %v3867
    %4119 = vmatprep.subr.bf16.mxu0 %v3866
    %4120 = vmatpush2.bf16.msra.mxu0 %v3865
    %4121 = vmatprep.subr.bf16.mxu0 %v3864
    %4122 = vmatpush2.bf16.msra.mxu0 %v3863
    %4123 = vmatprep.subr.bf16.mxu0 %v3862
    %4124 = vmatpush2.bf16.msra.mxu0 %v3861
    %4125 = vmatprep.subr.bf16.mxu0 %v3860
    %4126 = vmatpush2.bf16.msra.mxu0 %v3859
    %4127 = vmatprep.subr.bf16.mxu0 %v3858
    %4128 = vmatpush2.bf16.msra.mxu0 %v3857
    %4129 = vmatprep.mubr.bf16.mxu0 %v3310
    %4130 = vmatmul.mubr.bf16.gmra.mxu0 %v3309
    %v4131 = vpop.f32.mrf.mxu0
    %v4132 = vadd.f32 %v3450, %v4131
    %v4133 = vpop.f32.mrf.mxu0
    %v4134 = vadd.f32 %v3454, %v4133
    %v4135 = vpop.f32.mrf.mxu0
    %v4136 = vpop.f32.mrf.mxu0
    %4137 = vdwg.mxu0
    %4138 = vmatprep.subr.bf16.mxu0 %v3888
    %4139 = vmatpush1.bf16.msra.mxu0 %v3887
    %4140 = vmatprep.subr.bf16.mxu0 %v3886
    %4141 = vmatpush1.bf16.msra.mxu0 %v3885
    %4142 = vmatprep.subr.bf16.mxu0 %v3884
    %4143 = vmatpush1.bf16.msra.mxu0 %v3883
    %4144 = vmatprep.subr.bf16.mxu0 %v3882
    %4145 = vmatpush1.bf16.msra.mxu0 %v3881
    %4146 = vmatprep.subr.bf16.mxu0 %v3880
    %4147 = vmatpush1.bf16.msra.mxu0 %v3879
    %4148 = vmatprep.subr.bf16.mxu0 %v3878
    %4149 = vmatpush1.bf16.msra.mxu0 %v3877
    %4150 = vmatprep.subr.bf16.mxu0 %v3876
    %4151 = vmatpush1.bf16.msra.mxu0 %v3875
    %4152 = vmatprep.subr.bf16.mxu0 %v3874
    %4153 = vmatpush1.bf16.msra.mxu0 %v3873
    %4154 = vmatprep.subr.bf16.mxu0 %v3904
    %4155 = vmatpush2.bf16.msra.mxu0 %v3903
    %4156 = vmatprep.subr.bf16.mxu0 %v3902
    %4157 = vmatpush2.bf16.msra.mxu0 %v3901
    %4158 = vmatprep.subr.bf16.mxu0 %v3900
    %4159 = vmatpush2.bf16.msra.mxu0 %v3899
    %4160 = vmatprep.subr.bf16.mxu0 %v3898
    %4161 = vmatpush2.bf16.msra.mxu0 %v3897
    %4162 = vmatprep.subr.bf16.mxu0 %v3896
    %4163 = vmatpush2.bf16.msra.mxu0 %v3895
    %4164 = vmatprep.subr.bf16.mxu0 %v3894
    %4165 = vmatpush2.bf16.msra.mxu0 %v3893
    %4166 = vmatprep.subr.bf16.mxu0 %v3892
    %4167 = vmatpush2.bf16.msra.mxu0 %v3891
    %4168 = vmatprep.subr.bf16.mxu0 %v3890
    %4169 = vmatpush2.bf16.msra.mxu0 %v3889
    %4170 = vmatprep.mubr.bf16.mxu0 %v3312
    %4171 = vmatmul.mubr.bf16.gmra.mxu0 %v3311
    %v4172 = vpop.f32.mrf.mxu0
    %v4173 = vadd.f32 %v4132, %v4172
    %v4174 = vpop.f32.mrf.mxu0
    %v4175 = vadd.f32 %v4134, %v4174
    %v4176 = vpop.f32.mrf.mxu0
    %v4177 = vpop.f32.mrf.mxu0
    %4178 = vdwg.mxu0
    %4179 = vmatprep.subr.bf16.mxu0 %v3920
    %4180 = vmatpush1.bf16.msra.mxu0 %v3919
    %4181 = vmatprep.subr.bf16.mxu0 %v3918
    %4182 = vmatpush1.bf16.msra.mxu0 %v3917
    %4183 = vmatprep.subr.bf16.mxu0 %v3916
    %4184 = vmatpush1.bf16.msra.mxu0 %v3915
    %4185 = vmatprep.subr.bf16.mxu0 %v3914
    %4186 = vmatpush1.bf16.msra.mxu0 %v3913
    %4187 = vmatprep.subr.bf16.mxu0 %v3912
    %4188 = vmatpush1.bf16.msra.mxu0 %v3911
    %4189 = vmatprep.subr.bf16.mxu0 %v3910
    %4190 = vmatpush1.bf16.msra.mxu0 %v3909
    %4191 = vmatprep.subr.bf16.mxu0 %v3908
    %4192 = vmatpush1.bf16.msra.mxu0 %v3907
    %4193 = vmatprep.subr.bf16.mxu0 %v3906
    %4194 = vmatpush1.bf16.msra.mxu0 %v3905
    %4195 = vmatprep.subr.bf16.mxu0 %v3936
    %4196 = vmatpush2.bf16.msra.mxu0 %v3935
    %4197 = vmatprep.subr.bf16.mxu0 %v3934
    %4198 = vmatpush2.bf16.msra.mxu0 %v3933
    %4199 = vmatprep.subr.bf16.mxu0 %v3932
    %4200 = vmatpush2.bf16.msra.mxu0 %v3931
    %4201 = vmatprep.subr.bf16.mxu0 %v3930
    %4202 = vmatpush2.bf16.msra.mxu0 %v3929
    %4203 = vmatprep.subr.bf16.mxu0 %v3928
    %4204 = vmatpush2.bf16.msra.mxu0 %v3927
    %4205 = vmatprep.subr.bf16.mxu0 %v3926
    %4206 = vmatpush2.bf16.msra.mxu0 %v3925
    %4207 = vmatprep.subr.bf16.mxu0 %v3924
    %4208 = vmatpush2.bf16.msra.mxu0 %v3923
    %4209 = vmatprep.subr.bf16.mxu0 %v3922
    %4210 = vmatpush2.bf16.msra.mxu0 %v3921
    %4211 = vmatprep.mubr.bf16.mxu0 %v3314
    %4212 = vmatmul.mubr.bf16.gmra.mxu0 %v3313
    %v4213 = vpop.f32.mrf.mxu0
    %v4214 = vadd.f32 %v4173, %v4213
    %v4215 = vpop.f32.mrf.mxu0
    %v4216 = vadd.f32 %v4175, %v4215
    %v4217 = vpop.f32.mrf.mxu0
    %v4218 = vpop.f32.mrf.mxu0
    %4219 = vdwg.mxu0
    %4220 = vmatprep.subr.bf16.mxu0 %v3952
    %4221 = vmatpush1.bf16.msra.mxu0 %v3951
    %4222 = vmatprep.subr.bf16.mxu0 %v3950
    %4223 = vmatpush1.bf16.msra.mxu0 %v3949
    %4224 = vmatprep.subr.bf16.mxu0 %v3948
    %4225 = vmatpush1.bf16.msra.mxu0 %v3947
    %4226 = vmatprep.subr.bf16.mxu0 %v3946
    %4227 = vmatpush1.bf16.msra.mxu0 %v3945
    %4228 = vmatprep.subr.bf16.mxu0 %v3944
    %4229 = vmatpush1.bf16.msra.mxu0 %v3943
    %4230 = vmatprep.subr.bf16.mxu0 %v3942
    %4231 = vmatpush1.bf16.msra.mxu0 %v3941
    %4232 = vmatprep.subr.bf16.mxu0 %v3940
    %4233 = vmatpush1.bf16.msra.mxu0 %v3939
    %4234 = vmatprep.subr.bf16.mxu0 %v3938
    %4235 = vmatpush1.bf16.msra.mxu0 %v3937
    %4236 = vmatprep.subr.bf16.mxu0 %v3968
    %4237 = vmatpush2.bf16.msra.mxu0 %v3967
    %4238 = vmatprep.subr.bf16.mxu0 %v3966
    %4239 = vmatpush2.bf16.msra.mxu0 %v3965
    %4240 = vmatprep.subr.bf16.mxu0 %v3964
    %4241 = vmatpush2.bf16.msra.mxu0 %v3963
    %4242 = vmatprep.subr.bf16.mxu0 %v3962
    %4243 = vmatpush2.bf16.msra.mxu0 %v3961
    %4244 = vmatprep.subr.bf16.mxu0 %v3960
    %4245 = vmatpush2.bf16.msra.mxu0 %v3959
    %4246 = vmatprep.subr.bf16.mxu0 %v3958
    %4247 = vmatpush2.bf16.msra.mxu0 %v3957
    %4248 = vmatprep.subr.bf16.mxu0 %v3956
    %4249 = vmatpush2.bf16.msra.mxu0 %v3955
    %4250 = vmatprep.subr.bf16.mxu0 %v3954
    %4251 = vmatpush2.bf16.msra.mxu0 %v3953
    %4252 = vmatprep.mubr.bf16.mxu0 %v3316
    %4253 = vmatmul.mubr.bf16.gmra.mxu0 %v3315
    %v4254 = vpop.f32.mrf.mxu0
    %v4255 = vadd.f32 %v4214, %v4254
    %v4256 = vpop.f32.mrf.mxu0
    %v4257 = vadd.f32 %v4216, %v4256
    %v4258 = vpop.f32.mrf.mxu0
    %v4259 = vpop.f32.mrf.mxu0
    %4260 = vdwg.mxu0
    %v4261 = vtanh.pop %v4255
    %v4262 = vtanh.pop %v4257
    %4263 = vst [vmem:[#allocation16] sm:$0xff] %v4261
    %4264 = vst [vmem:[#allocation16 + $0x8] sm:$0xff] %v4262
    // Predicated region
    $region90: #{generator_forward.1} parent=1 // pred_check
      _
    $region91: #{generator_forward.1} parent=1 // pred_check_branch
      %4266 = sbr.rel (0) target = $region93
    $region92: #{generator_forward.1} parent=1 // pred_region
      %s4268 = ssub.s32 256, 256
      %4269 = vsyncadd [#allocation4], %s4268
      %s4271 = sshll.u32 [#allocation16], 4
      %s4272 = int_to_ptr.vmem [resolvable:$true] %s4271
      %4274 = dma.vmem_to_hbm [thread:$0]  %s4272, 256, %s14, [#allocation4]
    $region93: #{generator_forward.1} parent=1 // pred_fallthru
      _
    // Predicated region
    $region94: #{generator_forward.1} parent=1 // pred_check
      _
    $region95: #{generator_forward.1} parent=1 // pred_check_branch
      %4276 = sbr.rel (0) target = $region97
    $region96: #{generator_forward.1} parent=1 // pred_region
      %4277 = dma.done [#allocation4], 256
    $region97: #{generator_forward.1} parent=1 // pred_fallthru
      _
    %4278 = vsyncpa [#allocation3], 1
    %4279 = vsyncpa [#allocation6], 1
    %4280 = vsyncpa [#allocation9], 1
    %4281 = vsyncpa [#allocation12], 1
    %4282 = vsyncpa [#allocation15], 1
    %4283 = vsyncpa [#allocation4], 1

</llo_original>
